<compile_context>
chip_gen: v5e
topology: v5e:2x2
jax: 0.10.0
libtpu: 0.0.40
codegen_flags: <defaults>
</compile_context>

<pallas_src>
import jax
import jax.numpy as jnp
from jax import lax
from jax.experimental import pallas as pl
from jax.experimental.pallas import tpu as pltpu


def cbow_kernel(idx_ref, emb_ref, w1_ref, b1_ref, w2_ref, b2_ref,
                out_ref, hid_ref):
    """One (batch_tile, vocab_tile) grid step of the fused CBOW forward."""
    j = pl.program_id(1)   # vocab-tile index (sequential / "arbitrary" axis)

    # ---- phase 1 (once per batch tile): embedding gather + linear1 + ReLU ---
    @pl.when(j == 0)
    def _():
        tm, C = idx_ref.shape
        V, E = emb_ref.shape
        H = w1_ref.shape[1]

        idx = idx_ref[...]                                   # (tm, C) int32
        emb = emb_ref[...]                                   # (V, E)  bf16
        # Hoisted: JAX does not CSE broadcast/iota inside the unrolled loop.
        vocab_iota = lax.broadcasted_iota(jnp.int32, (tm, V), 1)

        acc = jnp.zeros((tm, H), jnp.float32)
        # One-hot MXU "gather" per context position, fused with the matching
        # (E, H) slice of linear1:  sum_c  onehot_c @ emb @ w1[c*E:(c+1)*E, :]
        # == concat(embeddings) @ w1  (no reshape/concat needed).
        for c in range(C):                                   # tiny static unroll
            onehot = (vocab_iota == idx[:, c:c + 1]).astype(jnp.bfloat16)
            x_c = jnp.dot(onehot, emb,                       # (tm, E) f32 (exact
                          preferred_element_type=jnp.float32)  # bf16 emb rows)
            w1_c = w1_ref[pl.ds(c * E, E), :]                # (E, H) bf16, static
            acc = acc + jnp.dot(x_c.astype(jnp.bfloat16), w1_c,
                                preferred_element_type=jnp.float32)
        # Bias + ReLU in f32 on the VPU, store bf16 for the second MXU pass.
        hid_ref[...] = jnp.maximum(acc + b1_ref[...], 0.0).astype(jnp.bfloat16)

    # ---- phase 2 (every vocab tile): linear2 on this lane-dense V slice -----
    out_ref[...] = (
        jnp.dot(hid_ref[...], w2_ref[...], preferred_element_type=jnp.float32)
        + b2_ref[...]
    )


def cbow_forward(idx, emb, w1_t, b1, w2_t, b2, *, tm=128, tn=128):
    B, C = idx.shape
    V, E = emb.shape
    H = w1_t.shape[1]
    assert w1_t.shape == (C * E, H)
    assert w2_t.shape == (H, V)
    assert b1.shape == (1, H) and b2.shape == (1, V)
    assert B % tm == 0 and V % tn == 0

    grid = (B // tm, V // tn)
    return pl.pallas_call(
        cbow_kernel,
        out_shape=jax.ShapeDtypeStruct((B, V), jnp.float32),
        grid=grid,
        in_specs=[
            pl.BlockSpec((tm, C), lambda i, j: (i, 0)),      # token ids (int32)
            pl.BlockSpec((V, E), lambda i, j: (0, 0)),       # embedding (bf16)
            pl.BlockSpec((C * E, H), lambda i, j: (0, 0)),   # w1^T      (bf16)
            pl.BlockSpec((1, H), lambda i, j: (0, 0)),       # b1        (f32)
            pl.BlockSpec((H, tn), lambda i, j: (0, j)),      # w2^T V-tile (bf16)
            pl.BlockSpec((1, tn), lambda i, j: (0, j)),      # b2 V-tile (f32)
        ],
        out_specs=pl.BlockSpec((tm, tn), lambda i, j: (i, j)),
        scratch_shapes=[pltpu.VMEM((tm, H), jnp.bfloat16)],  # hid, per batch tile
        compiler_params=pltpu.CompilerParams(
            dimension_semantics=("parallel", "arbitrary")),
    )(idx, emb, w1_t, b1, w2_t, b2)


if __name__ == "__main__":
    # Small, lane-aligned synthetic config (matches the module's __init__ shapes).
    VOCAB_SIZE = 512
    EMBD_SIZE = 128
    CONTEXT_SIZE = 4
    HIDDEN_SIZE = 128
    BATCH = 256          # >=2 batch tiles of 128 rows -> MXU sees full tiles

    key = jax.random.PRNGKey(0)
    k_idx, k_emb, k_w1, k_b1, k_w2, k_b2 = jax.random.split(key, 6)

    # Inputs: context token ids.
    idx = jax.random.randint(k_idx, (BATCH, CONTEXT_SIZE), 0, VOCAB_SIZE,
                             dtype=jnp.int32)

    # Parameters (deterministic, synthetic).  PyTorch shapes:
    #   embeddings.weight : (V, E)
    #   linear1.weight    : (H, C*E)   -> passed transposed (C*E, H), bf16
    #   linear1.bias      : (H,)       -> passed as (1, H), f32
    #   linear2.weight    : (V, H)     -> passed transposed (H, V), bf16
    #   linear2.bias      : (V,)       -> passed as (1, V), f32
    emb = jax.random.normal(k_emb, (VOCAB_SIZE, EMBD_SIZE), jnp.float32) * 0.1
    w1 = jax.random.normal(k_w1, (HIDDEN_SIZE, CONTEXT_SIZE * EMBD_SIZE),
                           jnp.float32) * 0.05
    b1 = jax.random.normal(k_b1, (HIDDEN_SIZE,), jnp.float32) * 0.05
    w2 = jax.random.normal(k_w2, (VOCAB_SIZE, HIDDEN_SIZE), jnp.float32) * 0.05
    b2 = jax.random.normal(k_b2, (VOCAB_SIZE,), jnp.float32) * 0.05

    out = cbow_forward(
        idx,
        emb.astype(jnp.bfloat16),
        w1.T.astype(jnp.bfloat16),
        b1.reshape(1, -1),
        w2.T.astype(jnp.bfloat16),
        b2.reshape(1, -1),
    )
    out = jax.block_until_ready(out)

    # Pure-JAX f32 reference (same semantics as the PyTorch forward).
    embedded = emb[idx].reshape(BATCH, -1)                     # (B, C*E)
    hid_fp32 = jnp.maximum(embedded @ w1.T + b1, 0.0)          # (B, H)
    ref = hid_fp32 @ w2.T + b2                                 # (B, V)

    assert out.shape == (BATCH, VOCAB_SIZE)
    max_err = jnp.max(jnp.abs(out - ref))
    # Kernel runs matmuls in bf16 with f32 accumulation -> small tolerance.
    assert max_err < 2e-2, f"max abs err {max_err}"
    print("KERNEL_OK")
</pallas_src>

<mosaic_0001>
module attributes {stable_mosaic.version = 11 : i64} {
  func.func @cbow_kernel(%arg0: i32, %arg1: i32, %arg2: memref<128x4xi32, #tpu.memory_space<vmem>>, %arg3: memref<512x128xbf16, #tpu.memory_space<vmem>>, %arg4: memref<512x128xbf16, #tpu.memory_space<vmem>>, %arg5: memref<1x128xf32, #tpu.memory_space<vmem>>, %arg6: memref<128x128xbf16, #tpu.memory_space<vmem>>, %arg7: memref<1x128xf32, #tpu.memory_space<vmem>>, %arg8: memref<128x128xf32, #tpu.memory_space<vmem>>, %arg9: memref<128x128xbf16, #tpu.memory_space<vmem>>) attributes {dimension_semantics = [#tpu.dimension_semantics<parallel>, #tpu.dimension_semantics<arbitrary>], iteration_bounds = array<i64: 2, 4>, scalar_prefetch = 0 : i64, scratch_operands = 1 : i64, tpu.core_type = #tpu.core_type<tc>, window_params = [{transform_indices = @transform_0, window_bounds = array<i64: 128, 4>}, {pipeline_mode = #tpu.pipeline_mode<synchronous>, transform_indices = @transform_1, window_bounds = array<i64: 512, 128>}, {pipeline_mode = #tpu.pipeline_mode<synchronous>, transform_indices = @transform_2, window_bounds = array<i64: 512, 128>}, {pipeline_mode = #tpu.pipeline_mode<synchronous>, transform_indices = @transform_3, window_bounds = array<i64: 1, 128>}, {transform_indices = @transform_4, window_bounds = array<i64: 128, 128>}, {transform_indices = @transform_5, window_bounds = array<i64: 1, 128>}, {transform_indices = @transform_6, window_bounds = array<i64: 128, 128>}]} {
    %c0_i32 = arith.constant 0 : i32
    %0 = arith.cmpi eq, %arg1, %c0_i32 : i32
    %1 = arith.extui %0 : i1 to i32
    %c0_i32_0 = arith.constant 0 : i32
    %2 = arith.cmpi ne, %1, %c0_i32_0 : i32
    scf.if %2 {
      %c0_8 = arith.constant 0 : index
      %c0_9 = arith.constant 0 : index
      %10 = vector.load %arg2[%c0_8, %c0_9] : memref<128x4xi32, #tpu.memory_space<vmem>>, vector<128x4xi32>
      %c0_10 = arith.constant 0 : index
      %c0_11 = arith.constant 0 : index
      %11 = vector.load %arg3[%c0_10, %c0_11] : memref<512x128xbf16, #tpu.memory_space<vmem>>, vector<512x128xbf16>
      %12 = tpu.iota {dimensions = array<i32: 1>} : vector<128x512xi32>
      %cst_12 = arith.constant 0.000000e+00 : f32
      %13 = vector.broadcast %cst_12 : f32 to vector<128x128xf32>
      %14 = vector.extract_strided_slice %10 {offsets = [0, 0], sizes = [128, 1], strides = [1, 1]} : vector<128x4xi32> to vector<128x1xi32>
      %15 = vector.broadcast %14 : vector<128x1xi32> to vector<128x512xi32>
      %16 = arith.cmpi eq, %12, %15 : vector<128x512xi32>
      %17 = arith.extui %16 : vector<128x512xi1> to vector<128x512xi32>
      %18 = arith.sitofp %17 : vector<128x512xi32> to vector<128x512xf32>
      %19 = arith.truncf %18 : vector<128x512xf32> to vector<128x512xbf16>
      %cst_13 = arith.constant dense<0.000000e+00> : vector<128x128xf32>
      %20 = tpu.matmul %19, %11, %cst_13 {dimension_numbers = #tpu.dot_dimension_numbers<[1], [0], [0], [1], [0, 0, 1, 1], [], []>} : vector<128x512xbf16>, vector<512x128xbf16>, vector<128x128xf32> -> vector<128x128xf32>
      %c0_14 = arith.constant 0 : index
      %c0_15 = arith.constant 0 : index
      %21 = vector.load %arg4[%c0_14, %c0_15] : memref<512x128xbf16, #tpu.memory_space<vmem>>, vector<128x128xbf16>
      %22 = arith.truncf %20 : vector<128x128xf32> to vector<128x128xbf16>
      %cst_16 = arith.constant dense<0.000000e+00> : vector<128x128xf32>
      %23 = tpu.matmul %22, %21, %cst_16 {dimension_numbers = #tpu.dot_dimension_numbers<[1], [0], [0], [1], [0, 0, 1, 1], [], []>} : vector<128x128xbf16>, vector<128x128xbf16>, vector<128x128xf32> -> vector<128x128xf32>
      %24 = arith.addf %13, %23 : vector<128x128xf32>
      %25 = vector.extract_strided_slice %10 {offsets = [0, 1], sizes = [128, 1], strides = [1, 1]} : vector<128x4xi32> to vector<128x1xi32>
      %26 = vector.broadcast %25 : vector<128x1xi32> to vector<128x512xi32>
      %27 = arith.cmpi eq, %12, %26 : vector<128x512xi32>
      %28 = arith.extui %27 : vector<128x512xi1> to vector<128x512xi32>
      %29 = arith.sitofp %28 : vector<128x512xi32> to vector<128x512xf32>
      %30 = arith.truncf %29 : vector<128x512xf32> to vector<128x512xbf16>
      %cst_17 = arith.constant dense<0.000000e+00> : vector<128x128xf32>
      %31 = tpu.matmul %30, %11, %cst_17 {dimension_numbers = #tpu.dot_dimension_numbers<[1], [0], [0], [1], [0, 0, 1, 1], [], []>} : vector<128x512xbf16>, vector<512x128xbf16>, vector<128x128xf32> -> vector<128x128xf32>
      %c128 = arith.constant 128 : index
      %c0_18 = arith.constant 0 : index
      %32 = vector.load %arg4[%c128, %c0_18] : memref<512x128xbf16, #tpu.memory_space<vmem>>, vector<128x128xbf16>
      %33 = arith.truncf %31 : vector<128x128xf32> to vector<128x128xbf16>
      %cst_19 = arith.constant dense<0.000000e+00> : vector<128x128xf32>
      %34 = tpu.matmul %33, %32, %cst_19 {dimension_numbers = #tpu.dot_dimension_numbers<[1], [0], [0], [1], [0, 0, 1, 1], [], []>} : vector<128x128xbf16>, vector<128x128xbf16>, vector<128x128xf32> -> vector<128x128xf32>
      %35 = arith.addf %24, %34 : vector<128x128xf32>
      %36 = vector.extract_strided_slice %10 {offsets = [0, 2], sizes = [128, 1], strides = [1, 1]} : vector<128x4xi32> to vector<128x1xi32>
      %37 = vector.broadcast %36 : vector<128x1xi32> to vector<128x512xi32>
      %38 = arith.cmpi eq, %12, %37 : vector<128x512xi32>
      %39 = arith.extui %38 : vector<128x512xi1> to vector<128x512xi32>
      %40 = arith.sitofp %39 : vector<128x512xi32> to vector<128x512xf32>
      %41 = arith.truncf %40 : vector<128x512xf32> to vector<128x512xbf16>
      %cst_20 = arith.constant dense<0.000000e+00> : vector<128x128xf32>
      %42 = tpu.matmul %41, %11, %cst_20 {dimension_numbers = #tpu.dot_dimension_numbers<[1], [0], [0], [1], [0, 0, 1, 1], [], []>} : vector<128x512xbf16>, vector<512x128xbf16>, vector<128x128xf32> -> vector<128x128xf32>
      %c256 = arith.constant 256 : index
      %c0_21 = arith.constant 0 : index
      %43 = vector.load %arg4[%c256, %c0_21] : memref<512x128xbf16, #tpu.memory_space<vmem>>, vector<128x128xbf16>
      %44 = arith.truncf %42 : vector<128x128xf32> to vector<128x128xbf16>
      %cst_22 = arith.constant dense<0.000000e+00> : vector<128x128xf32>
      %45 = tpu.matmul %44, %43, %cst_22 {dimension_numbers = #tpu.dot_dimension_numbers<[1], [0], [0], [1], [0, 0, 1, 1], [], []>} : vector<128x128xbf16>, vector<128x128xbf16>, vector<128x128xf32> -> vector<128x128xf32>
      %46 = arith.addf %35, %45 : vector<128x128xf32>
      %47 = vector.extract_strided_slice %10 {offsets = [0, 3], sizes = [128, 1], strides = [1, 1]} : vector<128x4xi32> to vector<128x1xi32>
      %48 = vector.broadcast %47 : vector<128x1xi32> to vector<128x512xi32>
      %49 = arith.cmpi eq, %12, %48 : vector<128x512xi32>
      %50 = arith.extui %49 : vector<128x512xi1> to vector<128x512xi32>
      %51 = arith.sitofp %50 : vector<128x512xi32> to vector<128x512xf32>
      %52 = arith.truncf %51 : vector<128x512xf32> to vector<128x512xbf16>
      %cst_23 = arith.constant dense<0.000000e+00> : vector<128x128xf32>
      %53 = tpu.matmul %52, %11, %cst_23 {dimension_numbers = #tpu.dot_dimension_numbers<[1], [0], [0], [1], [0, 0, 1, 1], [], []>} : vector<128x512xbf16>, vector<512x128xbf16>, vector<128x128xf32> -> vector<128x128xf32>
      %c384 = arith.constant 384 : index
      %c0_24 = arith.constant 0 : index
      %54 = vector.load %arg4[%c384, %c0_24] : memref<512x128xbf16, #tpu.memory_space<vmem>>, vector<128x128xbf16>
      %55 = arith.truncf %53 : vector<128x128xf32> to vector<128x128xbf16>
      %cst_25 = arith.constant dense<0.000000e+00> : vector<128x128xf32>
      %56 = tpu.matmul %55, %54, %cst_25 {dimension_numbers = #tpu.dot_dimension_numbers<[1], [0], [0], [1], [0, 0, 1, 1], [], []>} : vector<128x128xbf16>, vector<128x128xbf16>, vector<128x128xf32> -> vector<128x128xf32>
      %57 = arith.addf %46, %56 : vector<128x128xf32>
      %c0_26 = arith.constant 0 : index
      %c0_27 = arith.constant 0 : index
      %58 = vector.load %arg5[%c0_26, %c0_27] : memref<1x128xf32, #tpu.memory_space<vmem>>, vector<1x128xf32>
      %59 = vector.broadcast %58 : vector<1x128xf32> to vector<128x128xf32>
      %60 = arith.addf %57, %59 : vector<128x128xf32>
      %cst_28 = arith.constant 0.000000e+00 : f32
      %61 = vector.broadcast %cst_28 : f32 to vector<128x128xf32>
      %62 = arith.maximumf %60, %61 : vector<128x128xf32>
      %63 = arith.truncf %62 : vector<128x128xf32> to vector<128x128xbf16>
      %c0_29 = arith.constant 0 : index
      %c0_30 = arith.constant 0 : index
      %64 = vector.load %arg9[%c0_29, %c0_30] : memref<128x128xbf16, #tpu.memory_space<vmem>>, vector<128x128xbf16>
      tpu.vector_store %arg9[%c0_29, %c0_30], %63 {strides = array<i32>} : memref<128x128xbf16, #tpu.memory_space<vmem>>, vector<128x128xbf16>,
    } else {
    }
    %c0 = arith.constant 0 : index
    %c0_1 = arith.constant 0 : index
    %3 = vector.load %arg9[%c0, %c0_1] : memref<128x128xbf16, #tpu.memory_space<vmem>>, vector<128x128xbf16>
    %c0_2 = arith.constant 0 : index
    %c0_3 = arith.constant 0 : index
    %4 = vector.load %arg6[%c0_2, %c0_3] : memref<128x128xbf16, #tpu.memory_space<vmem>>, vector<128x128xbf16>
    %cst = arith.constant dense<0.000000e+00> : vector<128x128xf32>
    %5 = tpu.matmul %3, %4, %cst {dimension_numbers = #tpu.dot_dimension_numbers<[1], [0], [0], [1], [0, 0, 1, 1], [], []>} : vector<128x128xbf16>, vector<128x128xbf16>, vector<128x128xf32> -> vector<128x128xf32>
    %c0_4 = arith.constant 0 : index
    %c0_5 = arith.constant 0 : index
    %6 = vector.load %arg7[%c0_4, %c0_5] : memref<1x128xf32, #tpu.memory_space<vmem>>, vector<1x128xf32>
    %7 = vector.broadcast %6 : vector<1x128xf32> to vector<128x128xf32>
    %8 = arith.addf %5, %7 : vector<128x128xf32>
    %c0_6 = arith.constant 0 : index
    %c0_7 = arith.constant 0 : index
    %9 = vector.load %arg8[%c0_6, %c0_7] : memref<128x128xf32, #tpu.memory_space<vmem>>, vector<128x128xf32>
    tpu.vector_store %arg8[%c0_6, %c0_7], %8 {strides = array<i32>} : memref<128x128xf32, #tpu.memory_space<vmem>>, vector<128x128xf32>,
    return
  }
  func.func @transform_0(%arg0: i32, %arg1: i32) -> (i32, i32) {
    %c0_i32 = arith.constant 0 : i32
    %c0_i32_0 = arith.constant 0 : i32
    return %arg0, %c0_i32 : i32, i32
  }
  func.func @transform_1(%arg0: i32, %arg1: i32) -> (i32, i32) {
    %c0_i32 = arith.constant 0 : i32
    %c0_i32_0 = arith.constant 0 : i32
    %c0_i32_1 = arith.constant 0 : i32
    return %c0_i32, %c0_i32_0 : i32, i32
  }
  func.func @transform_2(%arg0: i32, %arg1: i32) -> (i32, i32) {
    %c0_i32 = arith.constant 0 : i32
    %c0_i32_0 = arith.constant 0 : i32
    %c0_i32_1 = arith.constant 0 : i32
    return %c0_i32, %c0_i32_0 : i32, i32
  }
  func.func @transform_3(%arg0: i32, %arg1: i32) -> (i32, i32) {
    %c0_i32 = arith.constant 0 : i32
    %c0_i32_0 = arith.constant 0 : i32
    %c0_i32_1 = arith.constant 0 : i32
    return %c0_i32, %c0_i32_0 : i32, i32
  }
  func.func @transform_4(%arg0: i32, %arg1: i32) -> (i32, i32) {
    %c0_i32 = arith.constant 0 : i32
    %c0_i32_0 = arith.constant 0 : i32
    return %c0_i32, %arg1 : i32, i32
  }
  func.func @transform_5(%arg0: i32, %arg1: i32) -> (i32, i32) {
    %c0_i32 = arith.constant 0 : i32
    %c0_i32_0 = arith.constant 0 : i32
    return %c0_i32, %arg1 : i32, i32
  }
  func.func @transform_6(%arg0: i32, %arg1: i32) -> (i32, i32) {
    %c0_i32 = arith.constant 0 : i32
    return %arg0, %arg1 : i32, i32
  }
}

</mosaic_0001>

<llo_original>
// kernel: tpu_custom_call.1
$region0: #{tpu_custom_call.1}
  #allocation0 [shape = 'u32[]', space=smem, size = 0x4, offset = 0x4, fixed_abs, tag = 'smem constant byte address 0x4 - core index']
  #allocation1 [shape = 'u32[72,128]{1,0:T(1,128)}', space=vmem, size = 0x9000, scoped, tag = 'internal scratch']
  #allocation2 [shape = 'bf16[128,128]{1,0:T(8,128)(2,1)}', space=vmem, size = 0x8000, scoped, tag = 'scratch operand']
  %s0 = inlined_call_operand.vmem [shape: s32[256,4], index: 0, kind: input, shape index: {}]
  %s1 = inlined_call_operand.vmem [shape: bf16[512,128], index: 1, kind: input, shape index: {}]
  %s2 = inlined_call_operand.hbm [shape: bf16[512,128], index: 2, kind: input, shape index: {}]
  %s3 = inlined_call_operand.vmem [shape: f32[1,128], index: 3, kind: input, shape index: {}]
  %s4 = inlined_call_operand.hbm [shape: bf16[128,512], index: 4, kind: input, shape index: {}]
  %s5 = inlined_call_operand.vmem [shape: f32[1,512], index: 5, kind: input, shape index: {}]
  %s6 = inlined_call_operand.hbm [shape: f32[256,512], index: 6, kind: output, shape index: {}]
  %s7 = sld [smem:[#allocation0]]
  $region69: #{tpu_custom_call.1} parent=0
    _
  %s9 = ssub.s32 1, %s7
  %s10 = scalar_select 0, %s9, %s7
  $region1: #{tpu_custom_call.1} parent=0
    #allocation3 [shape = 'u8[131072]{0}', space=vmem, size = 0x20000, scoped, tag = 'input window, operand 2, single buffered']
    #allocation4 [shape = 's32[2]{0}', space=sflag, size = 0x8, scoped, tag = 'scoped memory for tpu_custom_call.1']
    #allocation5 [shape = 's32[2]{0}', space=sflag, size = 0x8, scoped, tag = 'scoped memory for tpu_custom_call.1']
    #allocation6 [shape = 'u8[65536]{0}', space=vmem, size = 0x10000, scoped, tag = 'input window, operand 4']
    #allocation7 [shape = 's32[2]{0}', space=sflag, size = 0x8, scoped, tag = 'scoped memory for tpu_custom_call.1']
    #allocation8 [shape = 'u8[131072]{0}', space=vmem, size = 0x20000, scoped, tag = 'output window, operand 0']
    %11 = vsyncpa [#allocation4], 0
    %12 = vsyncpa [#allocation7], 0
    %s13 = scalar_lea.sflag [#allocation7], 1
    %14 = vsyncpa %s13, 0
    %15 = vsyncpa [#allocation5], 0
    %s16 = scalar_lea.sflag [#allocation5], 1
    %17 = vsyncpa %s16, 0
    loop: start=0, step=1, limit=10
    $region2: #{tpu_custom_call.1} parent=1 // loop_pre_header
      _
    $region3: #{tpu_custom_call.1} parent=1 // loop_header
      %s19 = sphi 0, %s23
      %p20 = scmp.ge.s32.totalorder %s19, 10
      %s26 = sphi 0, %s38
      %s27 = sphi 0, %s34
      %s28 = sphi 0, %s26
      %s29 = sphi 0, %s27
      %s30 = sphi 0, %s28
      %s31 = sphi 0, %s29
      %s41 = sphi 0, %s43
      %s44 = sphi 0, %s41
      %s45 = sphi 0, %s44
      %s61 = sphi 0, %s45
      %s65 = sphi 0, %s65
      %s67 = sphi 0, %s65
      %s68 = sphi 0, %s67
      %s82 = sphi 0, %s68
      %s86 = sphi 0, %s86
      %s88 = sphi 0, %s86
      %s89 = sphi 0, %s88
      %s103 = sphi 0, %s89
      %s107 = sphi 0, %s107
      %s109 = sphi 0, %s107
      %s110 = sphi 0, %s109
      %s124 = sphi 0, %s110
      %s130 = sphi 0, %s132
      %s133 = sphi 0, %s130
      %s134 = sphi 0, %s133
      %s150 = sphi 0, %s134
      %s156 = sphi 0, %s158
      %s159 = sphi 0, %s156
      %s160 = sphi 0, %s159
      %s176 = sphi 0, %s160
      %s184 = sphi 0, %s186
      %s187 = sphi 0, %s184
      %s188 = sphi 0, %s187
      %s204 = sphi 0, %s188
    $region4: #{tpu_custom_call.1} parent=1 // loop_header_branch
      %22 = sbr.rel (%p20) target = $region8
    $region5: #{tpu_custom_call.1} parent=1 // loop_body
      %s24 = ssub.s32 %s19, 1
      %s25 = ssub.s32 %s19, 2
      %s32 = sadd.s32 1, %s27
      %p33 = scmp.ge.s32.totalorder %s32, 4
      %s34 = scalar_select %p33, 0, %s32
      %s35 = sadd.s32 1, %s26
      %s36 = scalar_select %p33, %s35, %s26
      %p37 = scmp.ge.s32.totalorder %s36, 2
      %s38 = scalar_select %p37, 0, %s36
      %s39 = ssub.s32 %s26, %s38
      %p40 = scmp.eq.s32.totalorder %s39, 0
      %s42 = sadd.s32 %s41, 1
      %s43 = scalar_select %p40, %s41, %s42
      %p46 = pneg %p40
      %p47 = scmp.eq.s32.totalorder %s19, 7
      %p48 = por %p46, %p47
      %p49 = scmp.ne.s32.totalorder %s41, %s44
      %p50 = scmp.eq.s32.totalorder %s19, 0
      %p51 = por %p49, %p50
      %p52 = scmp.ne.s32.totalorder %s41, %s44
      %p53 = scmp.eq.s32.totalorder %s24, 7
      %p54 = por %p52, %p53
      %p55 = scmp.ne.s32.totalorder %s44, %s45
      %p56 = scmp.eq.s32.totalorder %s24, 0
      %p57 = por %p55, %p56
      %p58 = scmp.ne.s32.totalorder %s44, %s45
      %p59 = scmp.eq.s32.totalorder %s25, 7
      %p60 = por %p58, %p59
      %p62 = scmp.ne.s32.totalorder %s45, %s61
      %p63 = scmp.eq.s32.totalorder %s25, 0
      %p64 = por %p62, %p63
      %s66 = sadd.s32 %s65, 1
      %p69 = scmp.eq.s32.totalorder %s19, 7
      %p70 = scmp.ne.s32.totalorder %s65, %s67
      %p71 = scmp.eq.s32.totalorder %s19, 0
      %p72 = por %p70, %p71
      %p73 = scmp.ne.s32.totalorder %s65, %s67
      %p74 = scmp.eq.s32.totalorder %s24, 7
      %p75 = por %p73, %p74
      %p76 = scmp.ne.s32.totalorder %s67, %s68
      %p77 = scmp.eq.s32.totalorder %s24, 0
      %p78 = por %p76, %p77
      %p79 = scmp.ne.s32.totalorder %s67, %s68
      %p80 = scmp.eq.s32.totalorder %s25, 7
      %p81 = por %p79, %p80
      %p83 = scmp.ne.s32.totalorder %s68, %s82
      %p84 = scmp.eq.s32.totalorder %s25, 0
      %p85 = por %p83, %p84
      %s87 = sadd.s32 %s86, 1
      %p90 = scmp.eq.s32.totalorder %s19, 7
      %p91 = scmp.ne.s32.totalorder %s86, %s88
      %p92 = scmp.eq.s32.totalorder %s19, 0
      %p93 = por %p91, %p92
      %p94 = scmp.ne.s32.totalorder %s86, %s88
      %p95 = scmp.eq.s32.totalorder %s24, 7
      %p96 = por %p94, %p95
      %p97 = scmp.ne.s32.totalorder %s88, %s89
      %p98 = scmp.eq.s32.totalorder %s24, 0
      %p99 = por %p97, %p98
      %p100 = scmp.ne.s32.totalorder %s88, %s89
      %p101 = scmp.eq.s32.totalorder %s25, 7
      %p102 = por %p100, %p101
      %p104 = scmp.ne.s32.totalorder %s89, %s103
      %p105 = scmp.eq.s32.totalorder %s25, 0
      %p106 = por %p104, %p105
      %s108 = sadd.s32 %s107, 1
      %p111 = scmp.eq.s32.totalorder %s19, 7
      %p112 = scmp.ne.s32.totalorder %s107, %s109
      %p113 = scmp.eq.s32.totalorder %s19, 0
      %p114 = por %p112, %p113
      %p115 = scmp.ne.s32.totalorder %s107, %s109
      %p116 = scmp.eq.s32.totalorder %s24, 7
      %p117 = por %p115, %p116
      %p118 = scmp.ne.s32.totalorder %s109, %s110
      %p119 = scmp.eq.s32.totalorder %s24, 0
      %p120 = por %p118, %p119
      %p121 = scmp.ne.s32.totalorder %s109, %s110
      %p122 = scmp.eq.s32.totalorder %s25, 7
      %p123 = por %p121, %p122
      %p125 = scmp.ne.s32.totalorder %s110, %s124
      %p126 = scmp.eq.s32.totalorder %s25, 0
      %p127 = por %p125, %p126
      %s128 = ssub.s32 %s27, %s34
      %p129 = scmp.eq.s32.totalorder %s128, 0
      %s131 = sadd.s32 %s130, 1
      %s132 = scalar_select %p129, %s130, %s131
      %p135 = pneg %p129
      %p136 = scmp.eq.s32.totalorder %s19, 7
      %p137 = por %p135, %p136
      %p138 = scmp.ne.s32.totalorder %s130, %s133
      %p139 = scmp.eq.s32.totalorder %s19, 0
      %p140 = por %p138, %p139
      %p141 = scmp.ne.s32.totalorder %s130, %s133
      %p142 = scmp.eq.s32.totalorder %s24, 7
      %p143 = por %p141, %p142
      %p144 = scmp.ne.s32.totalorder %s133, %s134
      %p145 = scmp.eq.s32.totalorder %s24, 0
      %p146 = por %p144, %p145
      %p147 = scmp.ne.s32.totalorder %s133, %s134
      %p148 = scmp.eq.s32.totalorder %s25, 7
      %p149 = por %p147, %p148
      %p151 = scmp.ne.s32.totalorder %s134, %s150
      %p152 = scmp.eq.s32.totalorder %s25, 0
      %p153 = por %p151, %p152
      %s154 = ssub.s32 %s27, %s34
      %p155 = scmp.eq.s32.totalorder %s154, 0
      %s157 = sadd.s32 %s156, 1
      %s158 = scalar_select %p155, %s156, %s157
      %p161 = pneg %p155
      %p162 = scmp.eq.s32.totalorder %s19, 7
      %p163 = por %p161, %p162
      %p164 = scmp.ne.s32.totalorder %s156, %s159
      %p165 = scmp.eq.s32.totalorder %s19, 0
      %p166 = por %p164, %p165
      %p167 = scmp.ne.s32.totalorder %s156, %s159
      %p168 = scmp.eq.s32.totalorder %s24, 7
      %p169 = por %p167, %p168
      %p170 = scmp.ne.s32.totalorder %s159, %s160
      %p171 = scmp.eq.s32.totalorder %s24, 0
      %p172 = por %p170, %p171
      %p173 = scmp.ne.s32.totalorder %s159, %s160
      %p174 = scmp.eq.s32.totalorder %s25, 7
      %p175 = por %p173, %p174
      %p177 = scmp.ne.s32.totalorder %s160, %s176
      %p178 = scmp.eq.s32.totalorder %s25, 0
      %p179 = por %p177, %p178
      %s180 = ssub.s32 %s26, %s38
      %s181 = ssub.s32 %s27, %s34
      %s182 = sor.u32 %s180, %s181
      %p183 = scmp.eq.s32.totalorder %s182, 0
      %s185 = sadd.s32 %s184, 1
      %s186 = scalar_select %p183, %s184, %s185
      %p189 = pneg %p183
      %p190 = scmp.eq.s32.totalorder %s19, 7
      %p191 = por %p189, %p190
      %p192 = scmp.ne.s32.totalorder %s184, %s187
      %p193 = scmp.eq.s32.totalorder %s19, 0
      %p194 = por %p192, %p193
      %p195 = scmp.ne.s32.totalorder %s184, %s187
      %p196 = scmp.eq.s32.totalorder %s24, 7
      %p197 = por %p195, %p196
      %p198 = scmp.ne.s32.totalorder %s187, %s188
      %p199 = scmp.eq.s32.totalorder %s24, 0
      %p200 = por %p198, %p199
      %p201 = scmp.ne.s32.totalorder %s187, %s188
      %p202 = scmp.eq.s32.totalorder %s25, 7
      %p203 = por %p201, %p202
      %p205 = scmp.ne.s32.totalorder %s188, %s204
      %p206 = scmp.eq.s32.totalorder %s25, 0
      %p207 = por %p205, %p206
      %p208 = scmp.le.s32.totalorder 1, %s19
      %p209 = scmp.lt.s32.totalorder %s19, 9
      %p210 = pnand %p208, %p209
      %p211 = pneg %p210
      // Predicated region
      $region9: #{tpu_custom_call.1} parent=5 // pred_check
        _
      $region10: #{tpu_custom_call.1} parent=5 // pred_check_branch
        %213 = sbr.rel (%p210) target = $region12
      $region11: #{tpu_custom_call.1} parent=5 // pred_region
        %s214 = ssub.s32 %s19, 1
        // Predicated region
        $region13: #{tpu_custom_call.1} parent=11 // pred_check
          %p215 = pneg %p78
        $region14: #{tpu_custom_call.1} parent=11 // pred_check_branch
          %217 = sbr.rel (%p215) target = $region16
        $region15: #{tpu_custom_call.1} parent=11 // pred_region
          _
        $region16: #{tpu_custom_call.1} parent=11 // pred_fallthru
          _
        // Predicated region
        $region17: #{tpu_custom_call.1} parent=11 // pred_check
          %p218 = pneg %p99
        $region18: #{tpu_custom_call.1} parent=11 // pred_check_branch
          %220 = sbr.rel (%p218) target = $region20
        $region19: #{tpu_custom_call.1} parent=11 // pred_region
          %222 = vsyncadd [#allocation4], 0
          %s223 = sshll.u32 %s2, 4
          %s224 = int_to_ptr.hbm [resolvable:$true] %s223
          %s225 = sshll.u32 [#allocation3], 4
          %s226 = int_to_ptr.vmem [resolvable:$true] %s225
          %231 = dma.hbm_to_vmem [thread:$0]  %s224, 4096, %s226, [#allocation4], 64, 64, 4
        $region20: #{tpu_custom_call.1} parent=11 // pred_fallthru
          _
        // Predicated region
        $region21: #{tpu_custom_call.1} parent=11 // pred_check
          %p232 = pneg %p120
        $region22: #{tpu_custom_call.1} parent=11 // pred_check_branch
          %234 = sbr.rel (%p232) target = $region24
        $region23: #{tpu_custom_call.1} parent=11 // pred_region
          _
        $region24: #{tpu_custom_call.1} parent=11 // pred_fallthru
          _
      $region12: #{tpu_custom_call.1} parent=5 // pred_fallthru
        _
      %p235 = scmp.lt.s32.totalorder %s19, 8
      // Predicated region
      $region25: #{tpu_custom_call.1} parent=5 // pred_check
        %p236 = pneg %p235
      $region26: #{tpu_custom_call.1} parent=5 // pred_check_branch
        %238 = sbr.rel (%p236) target = $region28
      $region27: #{tpu_custom_call.1} parent=5 // pred_region
        // Predicated region
        $region29: #{tpu_custom_call.1} parent=27 // pred_check
          %p239 = pneg %p51
        $region30: #{tpu_custom_call.1} parent=27 // pred_check_branch
          %241 = sbr.rel (%p239) target = $region32
        $region31: #{tpu_custom_call.1} parent=27 // pred_region
          %s242 = smul.u32 16, %s26
          %p243 = scmp.lt.s32.totalorder %s242, 31
          %s244 = scalar_select %p243, %s242, 31
          %s245 = smul.addr %s244, 8
          %s246 = scalar_lea.vmem %s0, %s245
          %s247 = smul.u32 16, %s26
        $region32: #{tpu_custom_call.1} parent=27 // pred_fallthru
          _
        // Predicated region
        $region33: #{tpu_custom_call.1} parent=27 // pred_check
          %p248 = pneg %p140
        $region34: #{tpu_custom_call.1} parent=27 // pred_check_branch
          %250 = sbr.rel (%p248) target = $region36
        $region35: #{tpu_custom_call.1} parent=27 // pred_region
          %s251 = sand.u32 %s130, 1
          %s252 = scalar_lea.sflag [#allocation7], %s251
          %s253 = sand.u32 %s130, 1
          %s254 = smul.addr %s253, 64
          %s255 = scalar_lea.vmem [#allocation6], %s254
          %257 = vsyncadd %s252, 0
          %s258 = smul.addr %s27, 4
          %s259 = scalar_lea.hbm %s4, %s258
          %s260 = sshll.u32 %s259, 4
          %s261 = int_to_ptr.hbm [resolvable:$true] %s260
          %s262 = sshll.u32 %s255, 4
          %s263 = int_to_ptr.vmem [resolvable:$true] %s262
          %268 = dma.hbm_to_vmem [thread:$0]  %s261, 1024, %s263, %s252, 256, 64, 4
        $region36: #{tpu_custom_call.1} parent=27 // pred_fallthru
          _
        // Predicated region
        $region37: #{tpu_custom_call.1} parent=27 // pred_check
          %p269 = pneg %p166
        $region38: #{tpu_custom_call.1} parent=27 // pred_check_branch
          %271 = sbr.rel (%p269) target = $region40
        $region39: #{tpu_custom_call.1} parent=27 // pred_region
          %p272 = scmp.lt.s32.totalorder %s27, 3
          %s273 = scalar_select %p272, %s27, 3
          %s274 = scalar_lea.vmem %s5, %s273
        $region40: #{tpu_custom_call.1} parent=27 // pred_fallthru
          _
      $region28: #{tpu_custom_call.1} parent=5 // pred_fallthru
        _
      %p275 = scmp.le.s32.totalorder 1, %s19
      %p276 = scmp.lt.s32.totalorder %s19, 9
      %p277 = pnand %p275, %p276
      %p278 = pneg %p277
      // Predicated region
      $region41: #{tpu_custom_call.1} parent=5 // pred_check
        _
      $region42: #{tpu_custom_call.1} parent=5 // pred_check_branch
        %280 = sbr.rel (%p277) target = $region44
      $region43: #{tpu_custom_call.1} parent=5 // pred_region
        %s281 = ssub.s32 %s19, 1
        // Predicated region
        $region45: #{tpu_custom_call.1} parent=43 // pred_check
          %p282 = pneg %p99
        $region46: #{tpu_custom_call.1} parent=43 // pred_check_branch
          %284 = sbr.rel (%p282) target = $region48
        $region47: #{tpu_custom_call.1} parent=43 // pred_region
          %286 = dma.done [#allocation4], 4096
        $region48: #{tpu_custom_call.1} parent=43 // pred_fallthru
          _
        %s287 = sand.u32 %s133, 1
        %s288 = scalar_lea.sflag [#allocation7], %s287
        %s289 = sand.u32 %s133, 1
        %s290 = smul.addr %s289, 64
        %s291 = scalar_lea.vmem [#allocation6], %s290
        // Predicated region
        $region49: #{tpu_custom_call.1} parent=43 // pred_check
          %p292 = pneg %p146
        $region50: #{tpu_custom_call.1} parent=43 // pred_check_branch
          %294 = sbr.rel (%p292) target = $region52
        $region51: #{tpu_custom_call.1} parent=43 // pred_region
          %296 = dma.done %s288, 1024
        $region52: #{tpu_custom_call.1} parent=43 // pred_fallthru
          _
        %s297 = smul.u32 16, %s28
        %p298 = scmp.lt.s32.totalorder %s297, 31
        %s299 = scalar_select %p298, %s297, 31
        %s300 = smul.addr %s299, 8
        %s301 = scalar_lea.vmem %s0, %s300
        %p302 = pneg %p57
        %p303 = pneg %p54
        %p304 = pneg %p78
        %p305 = pneg %p75
        %p306 = pneg %p99
        %p307 = pneg %p96
        %p308 = pneg %p120
        %p309 = pneg %p117
        %s310 = sand.u32 %s133, 1
        %s311 = scalar_lea.sflag [#allocation7], %s310
        %s312 = sand.u32 %s133, 1
        %s313 = smul.addr %s312, 64
        %s314 = scalar_lea.vmem [#allocation6], %s313
        %p315 = pneg %p146
        %p316 = pneg %p143
        %p317 = scmp.lt.s32.totalorder %s29, 3
        %s318 = scalar_select %p317, %s29, 3
        %s319 = scalar_lea.vmem %s5, %s318
        %p320 = pneg %p172
        %p321 = pneg %p169
        %p322 = pneg %p200
        %p323 = pneg %p197
        %s324 = sand.u32 %s187, 1
        %s325 = scalar_lea.sflag [#allocation5], %s324
        %s326 = sand.u32 %s187, 1
        %s327 = smul.addr %s326, 128
        %s328 = scalar_lea.vmem [#allocation8], %s327
        %s329 = smul.u32 16, %s28
        %p330 = scmp.lt.s32.totalorder %s329, 31
        %s331 = scalar_select %p330, %s329, 31
        %s332 = smul.addr %s331, 8
        %s333 = scalar_lea.vmem %s0, %s332
        %s334 = smul.u32 16, %s28
        %p335 = scmp.lt.s32.totalorder %s29, 3
        %s336 = scalar_select %p335, %s29, 3
        %s337 = scalar_lea.vmem %s5, %s336
        %s338 = smul.u32 16, %s28
        %p339 = scmp.eq.s32.totalorder %s29, 0
        // Predicated region
        $region53: #{tpu_custom_call.1} parent=43 // pred_check
          %p340 = pneg %p339
        $region54: #{tpu_custom_call.1} parent=43 // pred_check_branch
          %342 = sbr.rel (%p340) target = $region56
        $region55: #{tpu_custom_call.1} parent=43 // pred_region
          %v343 = vld [vmem:[%s333] sm:$0xff]
          %v344 = vld [vmem:[%s333 + $0x8] sm:$0xff]
          %v345 = vld [vmem:[%s333 + $0x10] sm:$0xff]
          %v346 = vld [vmem:[%s333 + $0x18] sm:$0xff]
          %v347 = vld [vmem:[%s333 + $0x20] sm:$0xff]
          %v348 = vld [vmem:[%s333 + $0x28] sm:$0xff]
          %v349 = vld [vmem:[%s333 + $0x30] sm:$0xff]
          %v350 = vld [vmem:[%s333 + $0x38] sm:$0xff]
          %v351 = vld [vmem:[%s333 + $0x40] sm:$0xff]
          %v352 = vld [vmem:[%s333 + $0x48] sm:$0xff]
          %v353 = vld [vmem:[%s333 + $0x50] sm:$0xff]
          %v354 = vld [vmem:[%s333 + $0x58] sm:$0xff]
          %v355 = vld [vmem:[%s333 + $0x60] sm:$0xff]
          %v356 = vld [vmem:[%s333 + $0x68] sm:$0xff]
          %v357 = vld [vmem:[%s333 + $0x70] sm:$0xff]
          %v358 = vld [vmem:[%s333 + $0x78] sm:$0xff]
          %v359 = vld [vmem:[%s1] sm:$0xf]
          %v360 = vld [vmem:[%s1 + $0x4] sm:$0xf]
          %v361 = vld [vmem:[%s1 + $0x8] sm:$0xf]
          %v362 = vld [vmem:[%s1 + $0xc] sm:$0xf]
          %v363 = vld [vmem:[%s1 + $0x10] sm:$0xf]
          %v364 = vld [vmem:[%s1 + $0x14] sm:$0xf]
          %v365 = vld [vmem:[%s1 + $0x18] sm:$0xf]
          %v366 = vld [vmem:[%s1 + $0x1c] sm:$0xf]
          %v367 = vld [vmem:[%s1 + $0x20] sm:$0xf]
          %v368 = vld [vmem:[%s1 + $0x24] sm:$0xf]
          %v369 = vld [vmem:[%s1 + $0x28] sm:$0xf]
          %v370 = vld [vmem:[%s1 + $0x2c] sm:$0xf]
          %v371 = vld [vmem:[%s1 + $0x30] sm:$0xf]
          %v372 = vld [vmem:[%s1 + $0x34] sm:$0xf]
          %v373 = vld [vmem:[%s1 + $0x38] sm:$0xf]
          %v374 = vld [vmem:[%s1 + $0x3c] sm:$0xf]
          %v375 = vld [vmem:[%s1 + $0x40] sm:$0xf]
          %v376 = vld [vmem:[%s1 + $0x44] sm:$0xf]
          %v377 = vld [vmem:[%s1 + $0x48] sm:$0xf]
          %v378 = vld [vmem:[%s1 + $0x4c] sm:$0xf]
          %v379 = vld [vmem:[%s1 + $0x50] sm:$0xf]
          %v380 = vld [vmem:[%s1 + $0x54] sm:$0xf]
          %v381 = vld [vmem:[%s1 + $0x58] sm:$0xf]
          %v382 = vld [vmem:[%s1 + $0x5c] sm:$0xf]
          %v383 = vld [vmem:[%s1 + $0x60] sm:$0xf]
          %v384 = vld [vmem:[%s1 + $0x64] sm:$0xf]
          %v385 = vld [vmem:[%s1 + $0x68] sm:$0xf]
          %v386 = vld [vmem:[%s1 + $0x6c] sm:$0xf]
          %v387 = vld [vmem:[%s1 + $0x70] sm:$0xf]
          %v388 = vld [vmem:[%s1 + $0x74] sm:$0xf]
          %v389 = vld [vmem:[%s1 + $0x78] sm:$0xf]
          %v390 = vld [vmem:[%s1 + $0x7c] sm:$0xf]
          %v391 = vld [vmem:[%s1 + $0x80] sm:$0xf]
          %v392 = vld [vmem:[%s1 + $0x84] sm:$0xf]
          %v393 = vld [vmem:[%s1 + $0x88] sm:$0xf]
          %v394 = vld [vmem:[%s1 + $0x8c] sm:$0xf]
          %v395 = vld [vmem:[%s1 + $0x90] sm:$0xf]
          %v396 = vld [vmem:[%s1 + $0x94] sm:$0xf]
          %v397 = vld [vmem:[%s1 + $0x98] sm:$0xf]
          %v398 = vld [vmem:[%s1 + $0x9c] sm:$0xf]
          %v399 = vld [vmem:[%s1 + $0xa0] sm:$0xf]
          %v400 = vld [vmem:[%s1 + $0xa4] sm:$0xf]
          %v401 = vld [vmem:[%s1 + $0xa8] sm:$0xf]
          %v402 = vld [vmem:[%s1 + $0xac] sm:$0xf]
          %v403 = vld [vmem:[%s1 + $0xb0] sm:$0xf]
          %v404 = vld [vmem:[%s1 + $0xb4] sm:$0xf]
          %v405 = vld [vmem:[%s1 + $0xb8] sm:$0xf]
          %v406 = vld [vmem:[%s1 + $0xbc] sm:$0xf]
          %v407 = vld [vmem:[%s1 + $0xc0] sm:$0xf]
          %v408 = vld [vmem:[%s1 + $0xc4] sm:$0xf]
          %v409 = vld [vmem:[%s1 + $0xc8] sm:$0xf]
          %v410 = vld [vmem:[%s1 + $0xcc] sm:$0xf]
          %v411 = vld [vmem:[%s1 + $0xd0] sm:$0xf]
          %v412 = vld [vmem:[%s1 + $0xd4] sm:$0xf]
          %v413 = vld [vmem:[%s1 + $0xd8] sm:$0xf]
          %v414 = vld [vmem:[%s1 + $0xdc] sm:$0xf]
          %v415 = vld [vmem:[%s1 + $0xe0] sm:$0xf]
          %v416 = vld [vmem:[%s1 + $0xe4] sm:$0xf]
          %v417 = vld [vmem:[%s1 + $0xe8] sm:$0xf]
          %v418 = vld [vmem:[%s1 + $0xec] sm:$0xf]
          %v419 = vld [vmem:[%s1 + $0xf0] sm:$0xf]
          %v420 = vld [vmem:[%s1 + $0xf4] sm:$0xf]
          %v421 = vld [vmem:[%s1 + $0xf8] sm:$0xf]
          %v422 = vld [vmem:[%s1 + $0xfc] sm:$0xf]
          %v423 = vlaneseq
          %v424 = vand.u32 %v423, 127
          %v425 = vadd.s32 %v424, 128
          %v426 = vadd.s32 %v424, 256
          %v427 = vadd.s32 %v424, 384
          %428 = vset.pattern.permute.xlu0 0
          %429 = vperm.xlu0 %428, %v343
          %v430 = vpop.permute.xlu0 %429
          %431 = vset.pattern.permute.xlu0 0
          %432 = vperm.xlu0 %431, %v344
          %v433 = vpop.permute.xlu0 %432
          %434 = vset.pattern.permute.xlu0 0
          %435 = vperm.xlu0 %434, %v345
          %v436 = vpop.permute.xlu0 %435
          %437 = vset.pattern.permute.xlu0 0
          %438 = vperm.xlu0 %437, %v346
          %v439 = vpop.permute.xlu0 %438
          %440 = vset.pattern.permute.xlu0 0
          %441 = vperm.xlu0 %440, %v347
          %v442 = vpop.permute.xlu0 %441
          %443 = vset.pattern.permute.xlu0 0
          %444 = vperm.xlu0 %443, %v348
          %v445 = vpop.permute.xlu0 %444
          %446 = vset.pattern.permute.xlu0 0
          %447 = vperm.xlu0 %446, %v349
          %v448 = vpop.permute.xlu0 %447
          %449 = vset.pattern.permute.xlu0 0
          %450 = vperm.xlu0 %449, %v350
          %v451 = vpop.permute.xlu0 %450
          %452 = vset.pattern.permute.xlu0 0
          %453 = vperm.xlu0 %452, %v351
          %v454 = vpop.permute.xlu0 %453
          %455 = vset.pattern.permute.xlu0 0
          %456 = vperm.xlu0 %455, %v352
          %v457 = vpop.permute.xlu0 %456
          %458 = vset.pattern.permute.xlu0 0
          %459 = vperm.xlu0 %458, %v353
          %v460 = vpop.permute.xlu0 %459
          %461 = vset.pattern.permute.xlu0 0
          %462 = vperm.xlu0 %461, %v354
          %v463 = vpop.permute.xlu0 %462
          %464 = vset.pattern.permute.xlu0 0
          %465 = vperm.xlu0 %464, %v355
          %v466 = vpop.permute.xlu0 %465
          %467 = vset.pattern.permute.xlu0 0
          %468 = vperm.xlu0 %467, %v356
          %v469 = vpop.permute.xlu0 %468
          %470 = vset.pattern.permute.xlu0 0
          %471 = vperm.xlu0 %470, %v357
          %v472 = vpop.permute.xlu0 %471
          %473 = vset.pattern.permute.xlu0 0
          %474 = vperm.xlu0 %473, %v358
          %v475 = vpop.permute.xlu0 %474
          %vm476 = vcmp.eq.s32.totalorder %v424, %v430
          %vm477 = vcmp.eq.s32.totalorder %v425, %v430
          %vm478 = vcmp.eq.s32.totalorder %v426, %v430
          %vm479 = vcmp.eq.s32.totalorder %v427, %v430
          %vm480 = vcmp.eq.s32.totalorder %v424, %v433
          %vm481 = vcmp.eq.s32.totalorder %v425, %v433
          %vm482 = vcmp.eq.s32.totalorder %v426, %v433
          %vm483 = vcmp.eq.s32.totalorder %v427, %v433
          %vm484 = vcmp.eq.s32.totalorder %v424, %v436
          %vm485 = vcmp.eq.s32.totalorder %v425, %v436
          %vm486 = vcmp.eq.s32.totalorder %v426, %v436
          %vm487 = vcmp.eq.s32.totalorder %v427, %v436
          %vm488 = vcmp.eq.s32.totalorder %v424, %v439
          %vm489 = vcmp.eq.s32.totalorder %v425, %v439
          %vm490 = vcmp.eq.s32.totalorder %v426, %v439
          %vm491 = vcmp.eq.s32.totalorder %v427, %v439
          %vm492 = vcmp.eq.s32.totalorder %v424, %v442
          %vm493 = vcmp.eq.s32.totalorder %v425, %v442
          %vm494 = vcmp.eq.s32.totalorder %v426, %v442
          %vm495 = vcmp.eq.s32.totalorder %v427, %v442
          %vm496 = vcmp.eq.s32.totalorder %v424, %v445
          %vm497 = vcmp.eq.s32.totalorder %v425, %v445
          %vm498 = vcmp.eq.s32.totalorder %v426, %v445
          %vm499 = vcmp.eq.s32.totalorder %v427, %v445
          %vm500 = vcmp.eq.s32.totalorder %v424, %v448
          %vm501 = vcmp.eq.s32.totalorder %v425, %v448
          %vm502 = vcmp.eq.s32.totalorder %v426, %v448
          %vm503 = vcmp.eq.s32.totalorder %v427, %v448
          %vm504 = vcmp.eq.s32.totalorder %v424, %v451
          %vm505 = vcmp.eq.s32.totalorder %v425, %v451
          %vm506 = vcmp.eq.s32.totalorder %v426, %v451
          %vm507 = vcmp.eq.s32.totalorder %v427, %v451
          %vm508 = vcmp.eq.s32.totalorder %v424, %v454
          %vm509 = vcmp.eq.s32.totalorder %v425, %v454
          %vm510 = vcmp.eq.s32.totalorder %v426, %v454
          %vm511 = vcmp.eq.s32.totalorder %v427, %v454
          %vm512 = vcmp.eq.s32.totalorder %v424, %v457
          %vm513 = vcmp.eq.s32.totalorder %v425, %v457
          %vm514 = vcmp.eq.s32.totalorder %v426, %v457
          %vm515 = vcmp.eq.s32.totalorder %v427, %v457
          %vm516 = vcmp.eq.s32.totalorder %v424, %v460
          %vm517 = vcmp.eq.s32.totalorder %v425, %v460
          %vm518 = vcmp.eq.s32.totalorder %v426, %v460
          %vm519 = vcmp.eq.s32.totalorder %v427, %v460
          %vm520 = vcmp.eq.s32.totalorder %v424, %v463
          %vm521 = vcmp.eq.s32.totalorder %v425, %v463
          %vm522 = vcmp.eq.s32.totalorder %v426, %v463
          %vm523 = vcmp.eq.s32.totalorder %v427, %v463
          %vm524 = vcmp.eq.s32.totalorder %v424, %v466
          %vm525 = vcmp.eq.s32.totalorder %v425, %v466
          %vm526 = vcmp.eq.s32.totalorder %v426, %v466
          %vm527 = vcmp.eq.s32.totalorder %v427, %v466
          %vm528 = vcmp.eq.s32.totalorder %v424, %v469
          %vm529 = vcmp.eq.s32.totalorder %v425, %v469
          %vm530 = vcmp.eq.s32.totalorder %v426, %v469
          %vm531 = vcmp.eq.s32.totalorder %v427, %v469
          %vm532 = vcmp.eq.s32.totalorder %v424, %v472
          %vm533 = vcmp.eq.s32.totalorder %v425, %v472
          %vm534 = vcmp.eq.s32.totalorder %v426, %v472
          %vm535 = vcmp.eq.s32.totalorder %v427, %v472
          %vm536 = vcmp.eq.s32.totalorder %v424, %v475
          %vm537 = vcmp.eq.s32.totalorder %v425, %v475
          %vm538 = vcmp.eq.s32.totalorder %v426, %v475
          %vm539 = vcmp.eq.s32.totalorder %v427, %v475
          %v540 = vsel %vm476, 1, 0
          %v541 = vsel %vm477, 1, 0
          %v542 = vsel %vm478, 1, 0
          %v543 = vsel %vm479, 1, 0
          %v544 = vsel %vm480, 1, 0
          %v545 = vsel %vm481, 1, 0
          %v546 = vsel %vm482, 1, 0
          %v547 = vsel %vm483, 1, 0
          %v548 = vsel %vm484, 1, 0
          %v549 = vsel %vm485, 1, 0
          %v550 = vsel %vm486, 1, 0
          %v551 = vsel %vm487, 1, 0
          %v552 = vsel %vm488, 1, 0
          %v553 = vsel %vm489, 1, 0
          %v554 = vsel %vm490, 1, 0
          %v555 = vsel %vm491, 1, 0
          %v556 = vsel %vm492, 1, 0
          %v557 = vsel %vm493, 1, 0
          %v558 = vsel %vm494, 1, 0
          %v559 = vsel %vm495, 1, 0
          %v560 = vsel %vm496, 1, 0
          %v561 = vsel %vm497, 1, 0
          %v562 = vsel %vm498, 1, 0
          %v563 = vsel %vm499, 1, 0
          %v564 = vsel %vm500, 1, 0
          %v565 = vsel %vm501, 1, 0
          %v566 = vsel %vm502, 1, 0
          %v567 = vsel %vm503, 1, 0
          %v568 = vsel %vm504, 1, 0
          %v569 = vsel %vm505, 1, 0
          %v570 = vsel %vm506, 1, 0
          %v571 = vsel %vm507, 1, 0
          %v572 = vsel %vm508, 1, 0
          %v573 = vsel %vm509, 1, 0
          %v574 = vsel %vm510, 1, 0
          %v575 = vsel %vm511, 1, 0
          %v576 = vsel %vm512, 1, 0
          %v577 = vsel %vm513, 1, 0
          %v578 = vsel %vm514, 1, 0
          %v579 = vsel %vm515, 1, 0
          %v580 = vsel %vm516, 1, 0
          %v581 = vsel %vm517, 1, 0
          %v582 = vsel %vm518, 1, 0
          %v583 = vsel %vm519, 1, 0
          %v584 = vsel %vm520, 1, 0
          %v585 = vsel %vm521, 1, 0
          %v586 = vsel %vm522, 1, 0
          %v587 = vsel %vm523, 1, 0
          %v588 = vsel %vm524, 1, 0
          %v589 = vsel %vm525, 1, 0
          %v590 = vsel %vm526, 1, 0
          %v591 = vsel %vm527, 1, 0
          %v592 = vsel %vm528, 1, 0
          %v593 = vsel %vm529, 1, 0
          %v594 = vsel %vm530, 1, 0
          %v595 = vsel %vm531, 1, 0
          %v596 = vsel %vm532, 1, 0
          %v597 = vsel %vm533, 1, 0
          %v598 = vsel %vm534, 1, 0
          %v599 = vsel %vm535, 1, 0
          %v600 = vsel %vm536, 1, 0
          %v601 = vsel %vm537, 1, 0
          %v602 = vsel %vm538, 1, 0
          %v603 = vsel %vm539, 1, 0
          %v604 = vcvt.s32.f32 %v540
          %v605 = vcvt.s32.f32 %v541
          %v606 = vcvt.s32.f32 %v542
          %v607 = vcvt.s32.f32 %v543
          %v608 = vcvt.s32.f32 %v544
          %v609 = vcvt.s32.f32 %v545
          %v610 = vcvt.s32.f32 %v546
          %v611 = vcvt.s32.f32 %v547
          %v612 = vcvt.s32.f32 %v548
          %v613 = vcvt.s32.f32 %v549
          %v614 = vcvt.s32.f32 %v550
          %v615 = vcvt.s32.f32 %v551
          %v616 = vcvt.s32.f32 %v552
          %v617 = vcvt.s32.f32 %v553
          %v618 = vcvt.s32.f32 %v554
          %v619 = vcvt.s32.f32 %v555
          %v620 = vcvt.s32.f32 %v556
          %v621 = vcvt.s32.f32 %v557
          %v622 = vcvt.s32.f32 %v558
          %v623 = vcvt.s32.f32 %v559
          %v624 = vcvt.s32.f32 %v560
          %v625 = vcvt.s32.f32 %v561
          %v626 = vcvt.s32.f32 %v562
          %v627 = vcvt.s32.f32 %v563
          %v628 = vcvt.s32.f32 %v564
          %v629 = vcvt.s32.f32 %v565
          %v630 = vcvt.s32.f32 %v566
          %v631 = vcvt.s32.f32 %v567
          %v632 = vcvt.s32.f32 %v568
          %v633 = vcvt.s32.f32 %v569
          %v634 = vcvt.s32.f32 %v570
          %v635 = vcvt.s32.f32 %v571
          %v636 = vcvt.s32.f32 %v572
          %v637 = vcvt.s32.f32 %v573
          %v638 = vcvt.s32.f32 %v574
          %v639 = vcvt.s32.f32 %v575
          %v640 = vcvt.s32.f32 %v576
          %v641 = vcvt.s32.f32 %v577
          %v642 = vcvt.s32.f32 %v578
          %v643 = vcvt.s32.f32 %v579
          %v644 = vcvt.s32.f32 %v580
          %v645 = vcvt.s32.f32 %v581
          %v646 = vcvt.s32.f32 %v582
          %v647 = vcvt.s32.f32 %v583
          %v648 = vcvt.s32.f32 %v584
          %v649 = vcvt.s32.f32 %v585
          %v650 = vcvt.s32.f32 %v586
          %v651 = vcvt.s32.f32 %v587
          %v652 = vcvt.s32.f32 %v588
          %v653 = vcvt.s32.f32 %v589
          %v654 = vcvt.s32.f32 %v590
          %v655 = vcvt.s32.f32 %v591
          %v656 = vcvt.s32.f32 %v592
          %v657 = vcvt.s32.f32 %v593
          %v658 = vcvt.s32.f32 %v594
          %v659 = vcvt.s32.f32 %v595
          %v660 = vcvt.s32.f32 %v596
          %v661 = vcvt.s32.f32 %v597
          %v662 = vcvt.s32.f32 %v598
          %v663 = vcvt.s32.f32 %v599
          %v664 = vcvt.s32.f32 %v600
          %v665 = vcvt.s32.f32 %v601
          %v666 = vcvt.s32.f32 %v602
          %v667 = vcvt.s32.f32 %v603
          %v668 = vpack.c.bf16 %v608, %v604
          %v669 = vpack.c.bf16 %v609, %v605
          %v670 = vpack.c.bf16 %v610, %v606
          %v671 = vpack.c.bf16 %v611, %v607
          %v672 = vpack.c.bf16 %v616, %v612
          %v673 = vpack.c.bf16 %v617, %v613
          %v674 = vpack.c.bf16 %v618, %v614
          %v675 = vpack.c.bf16 %v619, %v615
          %v676 = vpack.c.bf16 %v624, %v620
          %v677 = vpack.c.bf16 %v625, %v621
          %v678 = vpack.c.bf16 %v626, %v622
          %v679 = vpack.c.bf16 %v627, %v623
          %v680 = vpack.c.bf16 %v632, %v628
          %v681 = vpack.c.bf16 %v633, %v629
          %v682 = vpack.c.bf16 %v634, %v630
          %v683 = vpack.c.bf16 %v635, %v631
          %v684 = vpack.c.bf16 %v640, %v636
          %v685 = vpack.c.bf16 %v641, %v637
          %v686 = vpack.c.bf16 %v642, %v638
          %v687 = vpack.c.bf16 %v643, %v639
          %v688 = vpack.c.bf16 %v648, %v644
          %v689 = vpack.c.bf16 %v649, %v645
          %v690 = vpack.c.bf16 %v650, %v646
          %v691 = vpack.c.bf16 %v651, %v647
          %v692 = vpack.c.bf16 %v656, %v652
          %v693 = vpack.c.bf16 %v657, %v653
          %v694 = vpack.c.bf16 %v658, %v654
          %v695 = vpack.c.bf16 %v659, %v655
          %v696 = vpack.c.bf16 %v664, %v660
          %v697 = vpack.c.bf16 %v665, %v661
          %v698 = vpack.c.bf16 %v666, %v662
          %v699 = vpack.c.bf16 %v667, %v663
          %v764 = vunpack.c.l.b16 %v359
          %v765 = vunpack.c.l.b16 %v360
          %v766 = vunpack.c.l.b16 %v361
          %v767 = vunpack.c.l.b16 %v362
          %v768 = vunpack.c.l.b16 %v363
          %v769 = vunpack.c.l.b16 %v364
          %v770 = vunpack.c.l.b16 %v365
          %v771 = vunpack.c.l.b16 %v366
          %v772 = vunpack.c.l.b16 %v367
          %v773 = vunpack.c.l.b16 %v368
          %v774 = vunpack.c.l.b16 %v369
          %v775 = vunpack.c.l.b16 %v370
          %v776 = vunpack.c.l.b16 %v371
          %v777 = vunpack.c.l.b16 %v372
          %v778 = vunpack.c.l.b16 %v373
          %v779 = vunpack.c.l.b16 %v374
          %v780 = vunpack.c.l.b16 %v375
          %v781 = vunpack.c.l.b16 %v376
          %v782 = vunpack.c.l.b16 %v377
          %v783 = vunpack.c.l.b16 %v378
          %v784 = vunpack.c.l.b16 %v379
          %v785 = vunpack.c.l.b16 %v380
          %v786 = vunpack.c.l.b16 %v381
          %v787 = vunpack.c.l.b16 %v382
          %v788 = vunpack.c.l.b16 %v383
          %v789 = vunpack.c.l.b16 %v384
          %v790 = vunpack.c.l.b16 %v385
          %v791 = vunpack.c.l.b16 %v386
          %v792 = vunpack.c.l.b16 %v387
          %v793 = vunpack.c.l.b16 %v388
          %v794 = vunpack.c.l.b16 %v389
          %v795 = vunpack.c.l.b16 %v390
          %v796 = vunpack.c.l.b16 %v391
          %v797 = vunpack.c.l.b16 %v392
          %v798 = vunpack.c.l.b16 %v393
          %v799 = vunpack.c.l.b16 %v394
          %v800 = vunpack.c.l.b16 %v395
          %v801 = vunpack.c.l.b16 %v396
          %v802 = vunpack.c.l.b16 %v397
          %v803 = vunpack.c.l.b16 %v398
          %v804 = vunpack.c.l.b16 %v399
          %v805 = vunpack.c.l.b16 %v400
          %v806 = vunpack.c.l.b16 %v401
          %v807 = vunpack.c.l.b16 %v402
          %v808 = vunpack.c.l.b16 %v403
          %v809 = vunpack.c.l.b16 %v404
          %v810 = vunpack.c.l.b16 %v405
          %v811 = vunpack.c.l.b16 %v406
          %v812 = vunpack.c.l.b16 %v407
          %v813 = vunpack.c.l.b16 %v408
          %v814 = vunpack.c.l.b16 %v409
          %v815 = vunpack.c.l.b16 %v410
          %v816 = vunpack.c.l.b16 %v411
          %v817 = vunpack.c.l.b16 %v412
          %v818 = vunpack.c.l.b16 %v413
          %v819 = vunpack.c.l.b16 %v414
          %v820 = vunpack.c.l.b16 %v415
          %v821 = vunpack.c.l.b16 %v416
          %v822 = vunpack.c.l.b16 %v417
          %v823 = vunpack.c.l.b16 %v418
          %v824 = vunpack.c.l.b16 %v419
          %v825 = vunpack.c.l.b16 %v420
          %v826 = vunpack.c.l.b16 %v421
          %v827 = vunpack.c.l.b16 %v422
          %v828 = vpack.c.b16 %v765, %v764
          %v829 = vpack.c.b16 %v767, %v766
          %v830 = vpack.c.b16 %v769, %v768
          %v831 = vpack.c.b16 %v771, %v770
          %v832 = vpack.c.b16 %v773, %v772
          %v833 = vpack.c.b16 %v775, %v774
          %v834 = vpack.c.b16 %v777, %v776
          %v835 = vpack.c.b16 %v779, %v778
          %v836 = vpack.c.b16 %v781, %v780
          %v837 = vpack.c.b16 %v783, %v782
          %v838 = vpack.c.b16 %v785, %v784
          %v839 = vpack.c.b16 %v787, %v786
          %v840 = vpack.c.b16 %v789, %v788
          %v841 = vpack.c.b16 %v791, %v790
          %v842 = vpack.c.b16 %v793, %v792
          %v843 = vpack.c.b16 %v795, %v794
          %v844 = vpack.c.b16 %v797, %v796
          %v845 = vpack.c.b16 %v799, %v798
          %v846 = vpack.c.b16 %v801, %v800
          %v847 = vpack.c.b16 %v803, %v802
          %v848 = vpack.c.b16 %v805, %v804
          %v849 = vpack.c.b16 %v807, %v806
          %v850 = vpack.c.b16 %v809, %v808
          %v851 = vpack.c.b16 %v811, %v810
          %v852 = vpack.c.b16 %v813, %v812
          %v853 = vpack.c.b16 %v815, %v814
          %v854 = vpack.c.b16 %v817, %v816
          %v855 = vpack.c.b16 %v819, %v818
          %v856 = vpack.c.b16 %v821, %v820
          %v857 = vpack.c.b16 %v823, %v822
          %v858 = vpack.c.b16 %v825, %v824
          %v859 = vpack.c.b16 %v827, %v826
          %892 = vmatpush.bf16.msra.mxu0 %v835
          %893 = vmatpush.bf16.msra.mxu0 %v834
          %894 = vmatpush.bf16.msra.mxu0 %v833
          %895 = vmatpush.bf16.msra.mxu0 %v832
          %896 = vmatpush.bf16.msra.mxu0 %v831
          %897 = vmatpush.bf16.msra.mxu0 %v830
          %898 = vmatpush.bf16.msra.mxu0 %v829
          %899 = vmatpush.bf16.msra.mxu0 %v828
          %900 = vmatmul.bf16.gmra.mxu0 %v668
          %v901 = vpop.f32.mrf.mxu0
          %v902 = vadd.f32 0.0, %v901
          %v903 = vpop.f32.mrf.mxu0
          %v904 = vadd.f32 0.0, %v903
          %905 = vmatmul.bf16.gmra.mxu0 %v672
          %v906 = vpop.f32.mrf.mxu0
          %v907 = vadd.f32 0.0, %v906
          %v908 = vpop.f32.mrf.mxu0
          %v909 = vadd.f32 0.0, %v908
          %910 = vmatmul.bf16.gmra.mxu0 %v676
          %v911 = vpop.f32.mrf.mxu0
          %v912 = vadd.f32 0.0, %v911
          %v913 = vpop.f32.mrf.mxu0
          %v914 = vadd.f32 0.0, %v913
          %915 = vmatmul.bf16.gmra.mxu0 %v680
          %v916 = vpop.f32.mrf.mxu0
          %v917 = vadd.f32 0.0, %v916
          %v918 = vpop.f32.mrf.mxu0
          %v919 = vadd.f32 0.0, %v918
          %920 = vmatmul.bf16.gmra.mxu0 %v684
          %v921 = vpop.f32.mrf.mxu0
          %v922 = vadd.f32 0.0, %v921
          %v923 = vpop.f32.mrf.mxu0
          %v924 = vadd.f32 0.0, %v923
          %925 = vmatmul.bf16.gmra.mxu0 %v688
          %v926 = vpop.f32.mrf.mxu0
          %v927 = vadd.f32 0.0, %v926
          %v928 = vpop.f32.mrf.mxu0
          %v929 = vadd.f32 0.0, %v928
          %930 = vmatmul.bf16.gmra.mxu0 %v692
          %v931 = vpop.f32.mrf.mxu0
          %v932 = vadd.f32 0.0, %v931
          %v933 = vpop.f32.mrf.mxu0
          %v934 = vadd.f32 0.0, %v933
          %935 = vmatmul.bf16.gmra.mxu0 %v696
          %v936 = vpop.f32.mrf.mxu0
          %v937 = vadd.f32 0.0, %v936
          %v938 = vpop.f32.mrf.mxu0
          %v939 = vadd.f32 0.0, %v938
          %940 = vdwg.mxu0
          %941 = vmatpush.bf16.msra.mxu0 %v843
          %942 = vmatpush.bf16.msra.mxu0 %v842
          %943 = vmatpush.bf16.msra.mxu0 %v841
          %944 = vmatpush.bf16.msra.mxu0 %v840
          %945 = vmatpush.bf16.msra.mxu0 %v839
          %946 = vmatpush.bf16.msra.mxu0 %v838
          %947 = vmatpush.bf16.msra.mxu0 %v837
          %948 = vmatpush.bf16.msra.mxu0 %v836
          %949 = vmatmul.bf16.gmra.mxu0 %v669
          %v950 = vpop.f32.mrf.mxu0
          %v951 = vadd.f32 %v902, %v950
          %v952 = vpop.f32.mrf.mxu0
          %v953 = vadd.f32 %v904, %v952
          %954 = vmatmul.bf16.gmra.mxu0 %v673
          %v955 = vpop.f32.mrf.mxu0
          %v956 = vadd.f32 %v907, %v955
          %v957 = vpop.f32.mrf.mxu0
          %v958 = vadd.f32 %v909, %v957
          %959 = vmatmul.bf16.gmra.mxu0 %v677
          %v960 = vpop.f32.mrf.mxu0
          %v961 = vadd.f32 %v912, %v960
          %v962 = vpop.f32.mrf.mxu0
          %v963 = vadd.f32 %v914, %v962
          %964 = vmatmul.bf16.gmra.mxu0 %v681
          %v965 = vpop.f32.mrf.mxu0
          %v966 = vadd.f32 %v917, %v965
          %v967 = vpop.f32.mrf.mxu0
          %v968 = vadd.f32 %v919, %v967
          %969 = vmatmul.bf16.gmra.mxu0 %v685
          %v970 = vpop.f32.mrf.mxu0
          %v971 = vadd.f32 %v922, %v970
          %v972 = vpop.f32.mrf.mxu0
          %v973 = vadd.f32 %v924, %v972
          %974 = vmatmul.bf16.gmra.mxu0 %v689
          %v975 = vpop.f32.mrf.mxu0
          %v976 = vadd.f32 %v927, %v975
          %v977 = vpop.f32.mrf.mxu0
          %v978 = vadd.f32 %v929, %v977
          %979 = vmatmul.bf16.gmra.mxu0 %v693
          %v980 = vpop.f32.mrf.mxu0
          %v981 = vadd.f32 %v932, %v980
          %v982 = vpop.f32.mrf.mxu0
          %v983 = vadd.f32 %v934, %v982
          %984 = vmatmul.bf16.gmra.mxu0 %v697
          %v985 = vpop.f32.mrf.mxu0
          %v986 = vadd.f32 %v937, %v985
          %v987 = vpop.f32.mrf.mxu0
          %v988 = vadd.f32 %v939, %v987
          %989 = vdwg.mxu0
          %990 = vmatpush.bf16.msra.mxu0 %v851
          %991 = vmatpush.bf16.msra.mxu0 %v850
          %992 = vmatpush.bf16.msra.mxu0 %v849
          %993 = vmatpush.bf16.msra.mxu0 %v848
          %994 = vmatpush.bf16.msra.mxu0 %v847
          %995 = vmatpush.bf16.msra.mxu0 %v846
          %996 = vmatpush.bf16.msra.mxu0 %v845
          %997 = vmatpush.bf16.msra.mxu0 %v844
          %998 = vmatmul.bf16.gmra.mxu0 %v670
          %v999 = vpop.f32.mrf.mxu0
          %v1000 = vadd.f32 %v951, %v999
          %v1001 = vpop.f32.mrf.mxu0
          %v1002 = vadd.f32 %v953, %v1001
          %1003 = vmatmul.bf16.gmra.mxu0 %v674
          %v1004 = vpop.f32.mrf.mxu0
          %v1005 = vadd.f32 %v956, %v1004
          %v1006 = vpop.f32.mrf.mxu0
          %v1007 = vadd.f32 %v958, %v1006
          %1008 = vmatmul.bf16.gmra.mxu0 %v678
          %v1009 = vpop.f32.mrf.mxu0
          %v1010 = vadd.f32 %v961, %v1009
          %v1011 = vpop.f32.mrf.mxu0
          %v1012 = vadd.f32 %v963, %v1011
          %1013 = vmatmul.bf16.gmra.mxu0 %v682
          %v1014 = vpop.f32.mrf.mxu0
          %v1015 = vadd.f32 %v966, %v1014
          %v1016 = vpop.f32.mrf.mxu0
          %v1017 = vadd.f32 %v968, %v1016
          %1018 = vmatmul.bf16.gmra.mxu0 %v686
          %v1019 = vpop.f32.mrf.mxu0
          %v1020 = vadd.f32 %v971, %v1019
          %v1021 = vpop.f32.mrf.mxu0
          %v1022 = vadd.f32 %v973, %v1021
          %1023 = vmatmul.bf16.gmra.mxu0 %v690
          %v1024 = vpop.f32.mrf.mxu0
          %v1025 = vadd.f32 %v976, %v1024
          %v1026 = vpop.f32.mrf.mxu0
          %v1027 = vadd.f32 %v978, %v1026
          %1028 = vmatmul.bf16.gmra.mxu0 %v694
          %v1029 = vpop.f32.mrf.mxu0
          %v1030 = vadd.f32 %v981, %v1029
          %v1031 = vpop.f32.mrf.mxu0
          %v1032 = vadd.f32 %v983, %v1031
          %1033 = vmatmul.bf16.gmra.mxu0 %v698
          %v1034 = vpop.f32.mrf.mxu0
          %v1035 = vadd.f32 %v986, %v1034
          %v1036 = vpop.f32.mrf.mxu0
          %v1037 = vadd.f32 %v988, %v1036
          %1038 = vdwg.mxu0
          %1039 = vmatpush.bf16.msra.mxu0 %v859
          %1040 = vmatpush.bf16.msra.mxu0 %v858
          %1041 = vmatpush.bf16.msra.mxu0 %v857
          %1042 = vmatpush.bf16.msra.mxu0 %v856
          %1043 = vmatpush.bf16.msra.mxu0 %v855
          %1044 = vmatpush.bf16.msra.mxu0 %v854
          %1045 = vmatpush.bf16.msra.mxu0 %v853
          %1046 = vmatpush.bf16.msra.mxu0 %v852
          %1047 = vmatmul.bf16.gmra.mxu0 %v671
          %v1048 = vpop.f32.mrf.mxu0
          %v1049 = vadd.f32 %v1000, %v1048
          %v1050 = vpop.f32.mrf.mxu0
          %v1051 = vadd.f32 %v1002, %v1050
          %1052 = vmatmul.bf16.gmra.mxu0 %v675
          %v1053 = vpop.f32.mrf.mxu0
          %v1054 = vadd.f32 %v1005, %v1053
          %v1055 = vpop.f32.mrf.mxu0
          %v1056 = vadd.f32 %v1007, %v1055
          %1057 = vmatmul.bf16.gmra.mxu0 %v679
          %v1058 = vpop.f32.mrf.mxu0
          %v1059 = vadd.f32 %v1010, %v1058
          %v1060 = vpop.f32.mrf.mxu0
          %v1061 = vadd.f32 %v1012, %v1060
          %1062 = vmatmul.bf16.gmra.mxu0 %v683
          %v1063 = vpop.f32.mrf.mxu0
          %v1064 = vadd.f32 %v1015, %v1063
          %v1065 = vpop.f32.mrf.mxu0
          %v1066 = vadd.f32 %v1017, %v1065
          %1067 = vmatmul.bf16.gmra.mxu0 %v687
          %v1068 = vpop.f32.mrf.mxu0
          %v1069 = vadd.f32 %v1020, %v1068
          %v1070 = vpop.f32.mrf.mxu0
          %v1071 = vadd.f32 %v1022, %v1070
          %1072 = vmatmul.bf16.gmra.mxu0 %v691
          %v1073 = vpop.f32.mrf.mxu0
          %v1074 = vadd.f32 %v1025, %v1073
          %v1075 = vpop.f32.mrf.mxu0
          %v1076 = vadd.f32 %v1027, %v1075
          %1077 = vmatmul.bf16.gmra.mxu0 %v695
          %v1078 = vpop.f32.mrf.mxu0
          %v1079 = vadd.f32 %v1030, %v1078
          %v1080 = vpop.f32.mrf.mxu0
          %v1081 = vadd.f32 %v1032, %v1080
          %1082 = vmatmul.bf16.gmra.mxu0 %v699
          %v1083 = vpop.f32.mrf.mxu0
          %v1084 = vadd.f32 %v1035, %v1083
          %v1085 = vpop.f32.mrf.mxu0
          %v1086 = vadd.f32 %v1037, %v1085
          %1087 = vdwg.mxu0
          %v1088 = vld [vmem:[#allocation3] sm:$0xf]
          %v1089 = vld [vmem:[#allocation3 + $0x4] sm:$0xf]
          %v1090 = vld [vmem:[#allocation3 + $0x8] sm:$0xf]
          %v1091 = vld [vmem:[#allocation3 + $0xc] sm:$0xf]
          %v1092 = vld [vmem:[#allocation3 + $0x10] sm:$0xf]
          %v1093 = vld [vmem:[#allocation3 + $0x14] sm:$0xf]
          %v1094 = vld [vmem:[#allocation3 + $0x18] sm:$0xf]
          %v1095 = vld [vmem:[#allocation3 + $0x1c] sm:$0xf]
          %v1096 = vld [vmem:[#allocation3 + $0x20] sm:$0xf]
          %v1097 = vld [vmem:[#allocation3 + $0x24] sm:$0xf]
          %v1098 = vld [vmem:[#allocation3 + $0x28] sm:$0xf]
          %v1099 = vld [vmem:[#allocation3 + $0x2c] sm:$0xf]
          %v1100 = vld [vmem:[#allocation3 + $0x30] sm:$0xf]
          %v1101 = vld [vmem:[#allocation3 + $0x34] sm:$0xf]
          %v1102 = vld [vmem:[#allocation3 + $0x38] sm:$0xf]
          %v1103 = vld [vmem:[#allocation3 + $0x3c] sm:$0xf]
          %v1104 = vpack.c.bf16 %v1051, %v1049
          %v1105 = vpack.c.bf16 %v1056, %v1054
          %v1106 = vpack.c.bf16 %v1061, %v1059
          %v1107 = vpack.c.bf16 %v1066, %v1064
          %v1108 = vpack.c.bf16 %v1071, %v1069
          %v1109 = vpack.c.bf16 %v1076, %v1074
          %v1110 = vpack.c.bf16 %v1081, %v1079
          %v1111 = vpack.c.bf16 %v1086, %v1084
          %1112 = vset.pattern.permute.xlu0 1
          %1113 = vperm.xlu0 %1112, %v343
          %v1114 = vpop.permute.xlu0 %1113
          %1115 = vset.pattern.permute.xlu0 1
          %1116 = vperm.xlu0 %1115, %v344
          %v1117 = vpop.permute.xlu0 %1116
          %1118 = vset.pattern.permute.xlu0 1
          %1119 = vperm.xlu0 %1118, %v345
          %v1120 = vpop.permute.xlu0 %1119
          %1121 = vset.pattern.permute.xlu0 1
          %1122 = vperm.xlu0 %1121, %v346
          %v1123 = vpop.permute.xlu0 %1122
          %1124 = vset.pattern.permute.xlu0 1
          %1125 = vperm.xlu0 %1124, %v347
          %v1126 = vpop.permute.xlu0 %1125
          %1127 = vset.pattern.permute.xlu0 1
          %1128 = vperm.xlu0 %1127, %v348
          %v1129 = vpop.permute.xlu0 %1128
          %1130 = vset.pattern.permute.xlu0 1
          %1131 = vperm.xlu0 %1130, %v349
          %v1132 = vpop.permute.xlu0 %1131
          %1133 = vset.pattern.permute.xlu0 1
          %1134 = vperm.xlu0 %1133, %v350
          %v1135 = vpop.permute.xlu0 %1134
          %1136 = vset.pattern.permute.xlu0 1
          %1137 = vperm.xlu0 %1136, %v351
          %v1138 = vpop.permute.xlu0 %1137
          %1139 = vset.pattern.permute.xlu0 1
          %1140 = vperm.xlu0 %1139, %v352
          %v1141 = vpop.permute.xlu0 %1140
          %1142 = vset.pattern.permute.xlu0 1
          %1143 = vperm.xlu0 %1142, %v353
          %v1144 = vpop.permute.xlu0 %1143
          %1145 = vset.pattern.permute.xlu0 1
          %1146 = vperm.xlu0 %1145, %v354
          %v1147 = vpop.permute.xlu0 %1146
          %1148 = vset.pattern.permute.xlu0 1
          %1149 = vperm.xlu0 %1148, %v355
          %v1150 = vpop.permute.xlu0 %1149
          %1151 = vset.pattern.permute.xlu0 1
          %1152 = vperm.xlu0 %1151, %v356
          %v1153 = vpop.permute.xlu0 %1152
          %1154 = vset.pattern.permute.xlu0 1
          %1155 = vperm.xlu0 %1154, %v357
          %v1156 = vpop.permute.xlu0 %1155
          %1157 = vset.pattern.permute.xlu0 1
          %1158 = vperm.xlu0 %1157, %v358
          %v1159 = vpop.permute.xlu0 %1158
          %vm1160 = vcmp.eq.s32.totalorder %v424, %v1114
          %vm1161 = vcmp.eq.s32.totalorder %v425, %v1114
          %vm1162 = vcmp.eq.s32.totalorder %v426, %v1114
          %vm1163 = vcmp.eq.s32.totalorder %v427, %v1114
          %vm1164 = vcmp.eq.s32.totalorder %v424, %v1117
          %vm1165 = vcmp.eq.s32.totalorder %v425, %v1117
          %vm1166 = vcmp.eq.s32.totalorder %v426, %v1117
          %vm1167 = vcmp.eq.s32.totalorder %v427, %v1117
          %vm1168 = vcmp.eq.s32.totalorder %v424, %v1120
          %vm1169 = vcmp.eq.s32.totalorder %v425, %v1120
          %vm1170 = vcmp.eq.s32.totalorder %v426, %v1120
          %vm1171 = vcmp.eq.s32.totalorder %v427, %v1120
          %vm1172 = vcmp.eq.s32.totalorder %v424, %v1123
          %vm1173 = vcmp.eq.s32.totalorder %v425, %v1123
          %vm1174 = vcmp.eq.s32.totalorder %v426, %v1123
          %vm1175 = vcmp.eq.s32.totalorder %v427, %v1123
          %vm1176 = vcmp.eq.s32.totalorder %v424, %v1126
          %vm1177 = vcmp.eq.s32.totalorder %v425, %v1126
          %vm1178 = vcmp.eq.s32.totalorder %v426, %v1126
          %vm1179 = vcmp.eq.s32.totalorder %v427, %v1126
          %vm1180 = vcmp.eq.s32.totalorder %v424, %v1129
          %vm1181 = vcmp.eq.s32.totalorder %v425, %v1129
          %vm1182 = vcmp.eq.s32.totalorder %v426, %v1129
          %vm1183 = vcmp.eq.s32.totalorder %v427, %v1129
          %vm1184 = vcmp.eq.s32.totalorder %v424, %v1132
          %vm1185 = vcmp.eq.s32.totalorder %v425, %v1132
          %vm1186 = vcmp.eq.s32.totalorder %v426, %v1132
          %vm1187 = vcmp.eq.s32.totalorder %v427, %v1132
          %vm1188 = vcmp.eq.s32.totalorder %v424, %v1135
          %vm1189 = vcmp.eq.s32.totalorder %v425, %v1135
          %vm1190 = vcmp.eq.s32.totalorder %v426, %v1135
          %vm1191 = vcmp.eq.s32.totalorder %v427, %v1135
          %vm1192 = vcmp.eq.s32.totalorder %v424, %v1138
          %vm1193 = vcmp.eq.s32.totalorder %v425, %v1138
          %vm1194 = vcmp.eq.s32.totalorder %v426, %v1138
          %vm1195 = vcmp.eq.s32.totalorder %v427, %v1138
          %vm1196 = vcmp.eq.s32.totalorder %v424, %v1141
          %vm1197 = vcmp.eq.s32.totalorder %v425, %v1141
          %vm1198 = vcmp.eq.s32.totalorder %v426, %v1141
          %vm1199 = vcmp.eq.s32.totalorder %v427, %v1141
          %vm1200 = vcmp.eq.s32.totalorder %v424, %v1144
          %vm1201 = vcmp.eq.s32.totalorder %v425, %v1144
          %vm1202 = vcmp.eq.s32.totalorder %v426, %v1144
          %vm1203 = vcmp.eq.s32.totalorder %v427, %v1144
          %vm1204 = vcmp.eq.s32.totalorder %v424, %v1147
          %vm1205 = vcmp.eq.s32.totalorder %v425, %v1147
          %vm1206 = vcmp.eq.s32.totalorder %v426, %v1147
          %vm1207 = vcmp.eq.s32.totalorder %v427, %v1147
          %vm1208 = vcmp.eq.s32.totalorder %v424, %v1150
          %vm1209 = vcmp.eq.s32.totalorder %v425, %v1150
          %vm1210 = vcmp.eq.s32.totalorder %v426, %v1150
          %vm1211 = vcmp.eq.s32.totalorder %v427, %v1150
          %vm1212 = vcmp.eq.s32.totalorder %v424, %v1153
          %vm1213 = vcmp.eq.s32.totalorder %v425, %v1153
          %vm1214 = vcmp.eq.s32.totalorder %v426, %v1153
          %vm1215 = vcmp.eq.s32.totalorder %v427, %v1153
          %vm1216 = vcmp.eq.s32.totalorder %v424, %v1156
          %vm1217 = vcmp.eq.s32.totalorder %v425, %v1156
          %vm1218 = vcmp.eq.s32.totalorder %v426, %v1156
          %vm1219 = vcmp.eq.s32.totalorder %v427, %v1156
          %vm1220 = vcmp.eq.s32.totalorder %v424, %v1159
          %vm1221 = vcmp.eq.s32.totalorder %v425, %v1159
          %vm1222 = vcmp.eq.s32.totalorder %v426, %v1159
          %vm1223 = vcmp.eq.s32.totalorder %v427, %v1159
          %v1224 = vsel %vm1160, 1, 0
          %v1225 = vsel %vm1161, 1, 0
          %v1226 = vsel %vm1162, 1, 0
          %v1227 = vsel %vm1163, 1, 0
          %v1228 = vsel %vm1164, 1, 0
          %v1229 = vsel %vm1165, 1, 0
          %v1230 = vsel %vm1166, 1, 0
          %v1231 = vsel %vm1167, 1, 0
          %v1232 = vsel %vm1168, 1, 0
          %v1233 = vsel %vm1169, 1, 0
          %v1234 = vsel %vm1170, 1, 0
          %v1235 = vsel %vm1171, 1, 0
          %v1236 = vsel %vm1172, 1, 0
          %v1237 = vsel %vm1173, 1, 0
          %v1238 = vsel %vm1174, 1, 0
          %v1239 = vsel %vm1175, 1, 0
          %v1240 = vsel %vm1176, 1, 0
          %v1241 = vsel %vm1177, 1, 0
          %v1242 = vsel %vm1178, 1, 0
          %v1243 = vsel %vm1179, 1, 0
          %v1244 = vsel %vm1180, 1, 0
          %v1245 = vsel %vm1181, 1, 0
          %v1246 = vsel %vm1182, 1, 0
          %v1247 = vsel %vm1183, 1, 0
          %v1248 = vsel %vm1184, 1, 0
          %v1249 = vsel %vm1185, 1, 0
          %v1250 = vsel %vm1186, 1, 0
          %v1251 = vsel %vm1187, 1, 0
          %v1252 = vsel %vm1188, 1, 0
          %v1253 = vsel %vm1189, 1, 0
          %v1254 = vsel %vm1190, 1, 0
          %v1255 = vsel %vm1191, 1, 0
          %v1256 = vsel %vm1192, 1, 0
          %v1257 = vsel %vm1193, 1, 0
          %v1258 = vsel %vm1194, 1, 0
          %v1259 = vsel %vm1195, 1, 0
          %v1260 = vsel %vm1196, 1, 0
          %v1261 = vsel %vm1197, 1, 0
          %v1262 = vsel %vm1198, 1, 0
          %v1263 = vsel %vm1199, 1, 0
          %v1264 = vsel %vm1200, 1, 0
          %v1265 = vsel %vm1201, 1, 0
          %v1266 = vsel %vm1202, 1, 0
          %v1267 = vsel %vm1203, 1, 0
          %v1268 = vsel %vm1204, 1, 0
          %v1269 = vsel %vm1205, 1, 0
          %v1270 = vsel %vm1206, 1, 0
          %v1271 = vsel %vm1207, 1, 0
          %v1272 = vsel %vm1208, 1, 0
          %v1273 = vsel %vm1209, 1, 0
          %v1274 = vsel %vm1210, 1, 0
          %v1275 = vsel %vm1211, 1, 0
          %v1276 = vsel %vm1212, 1, 0
          %v1277 = vsel %vm1213, 1, 0
          %v1278 = vsel %vm1214, 1, 0
          %v1279 = vsel %vm1215, 1, 0
          %v1280 = vsel %vm1216, 1, 0
          %v1281 = vsel %vm1217, 1, 0
          %v1282 = vsel %vm1218, 1, 0
          %v1283 = vsel %vm1219, 1, 0
          %v1284 = vsel %vm1220, 1, 0
          %v1285 = vsel %vm1221, 1, 0
          %v1286 = vsel %vm1222, 1, 0
          %v1287 = vsel %vm1223, 1, 0
          %v1288 = vcvt.s32.f32 %v1224
          %v1289 = vcvt.s32.f32 %v1225
          %v1290 = vcvt.s32.f32 %v1226
          %v1291 = vcvt.s32.f32 %v1227
          %v1292 = vcvt.s32.f32 %v1228
          %v1293 = vcvt.s32.f32 %v1229
          %v1294 = vcvt.s32.f32 %v1230
          %v1295 = vcvt.s32.f32 %v1231
          %v1296 = vcvt.s32.f32 %v1232
          %v1297 = vcvt.s32.f32 %v1233
          %v1298 = vcvt.s32.f32 %v1234
          %v1299 = vcvt.s32.f32 %v1235
          %v1300 = vcvt.s32.f32 %v1236
          %v1301 = vcvt.s32.f32 %v1237
          %v1302 = vcvt.s32.f32 %v1238
          %v1303 = vcvt.s32.f32 %v1239
          %v1304 = vcvt.s32.f32 %v1240
          %v1305 = vcvt.s32.f32 %v1241
          %v1306 = vcvt.s32.f32 %v1242
          %v1307 = vcvt.s32.f32 %v1243
          %v1308 = vcvt.s32.f32 %v1244
          %v1309 = vcvt.s32.f32 %v1245
          %v1310 = vcvt.s32.f32 %v1246
          %v1311 = vcvt.s32.f32 %v1247
          %v1312 = vcvt.s32.f32 %v1248
          %v1313 = vcvt.s32.f32 %v1249
          %v1314 = vcvt.s32.f32 %v1250
          %v1315 = vcvt.s32.f32 %v1251
          %v1316 = vcvt.s32.f32 %v1252
          %v1317 = vcvt.s32.f32 %v1253
          %v1318 = vcvt.s32.f32 %v1254
          %v1319 = vcvt.s32.f32 %v1255
          %v1320 = vcvt.s32.f32 %v1256
          %v1321 = vcvt.s32.f32 %v1257
          %v1322 = vcvt.s32.f32 %v1258
          %v1323 = vcvt.s32.f32 %v1259
          %v1324 = vcvt.s32.f32 %v1260
          %v1325 = vcvt.s32.f32 %v1261
          %v1326 = vcvt.s32.f32 %v1262
          %v1327 = vcvt.s32.f32 %v1263
          %v1328 = vcvt.s32.f32 %v1264
          %v1329 = vcvt.s32.f32 %v1265
          %v1330 = vcvt.s32.f32 %v1266
          %v1331 = vcvt.s32.f32 %v1267
          %v1332 = vcvt.s32.f32 %v1268
          %v1333 = vcvt.s32.f32 %v1269
          %v1334 = vcvt.s32.f32 %v1270
          %v1335 = vcvt.s32.f32 %v1271
          %v1336 = vcvt.s32.f32 %v1272
          %v1337 = vcvt.s32.f32 %v1273
          %v1338 = vcvt.s32.f32 %v1274
          %v1339 = vcvt.s32.f32 %v1275
          %v1340 = vcvt.s32.f32 %v1276
          %v1341 = vcvt.s32.f32 %v1277
          %v1342 = vcvt.s32.f32 %v1278
          %v1343 = vcvt.s32.f32 %v1279
          %v1344 = vcvt.s32.f32 %v1280
          %v1345 = vcvt.s32.f32 %v1281
          %v1346 = vcvt.s32.f32 %v1282
          %v1347 = vcvt.s32.f32 %v1283
          %v1348 = vcvt.s32.f32 %v1284
          %v1349 = vcvt.s32.f32 %v1285
          %v1350 = vcvt.s32.f32 %v1286
          %v1351 = vcvt.s32.f32 %v1287
          %v1352 = vpack.c.bf16 %v1292, %v1288
          %v1353 = vpack.c.bf16 %v1293, %v1289
          %v1354 = vpack.c.bf16 %v1294, %v1290
          %v1355 = vpack.c.bf16 %v1295, %v1291
          %v1356 = vpack.c.bf16 %v1300, %v1296
          %v1357 = vpack.c.bf16 %v1301, %v1297
          %v1358 = vpack.c.bf16 %v1302, %v1298
          %v1359 = vpack.c.bf16 %v1303, %v1299
          %v1360 = vpack.c.bf16 %v1308, %v1304
          %v1361 = vpack.c.bf16 %v1309, %v1305
          %v1362 = vpack.c.bf16 %v1310, %v1306
          %v1363 = vpack.c.bf16 %v1311, %v1307
          %v1364 = vpack.c.bf16 %v1316, %v1312
          %v1365 = vpack.c.bf16 %v1317, %v1313
          %v1366 = vpack.c.bf16 %v1318, %v1314
          %v1367 = vpack.c.bf16 %v1319, %v1315
          %v1368 = vpack.c.bf16 %v1324, %v1320
          %v1369 = vpack.c.bf16 %v1325, %v1321
          %v1370 = vpack.c.bf16 %v1326, %v1322
          %v1371 = vpack.c.bf16 %v1327, %v1323
          %v1372 = vpack.c.bf16 %v1332, %v1328
          %v1373 = vpack.c.bf16 %v1333, %v1329
          %v1374 = vpack.c.bf16 %v1334, %v1330
          %v1375 = vpack.c.bf16 %v1335, %v1331
          %v1376 = vpack.c.bf16 %v1340, %v1336
          %v1377 = vpack.c.bf16 %v1341, %v1337
          %v1378 = vpack.c.bf16 %v1342, %v1338
          %v1379 = vpack.c.bf16 %v1343, %v1339
          %v1380 = vpack.c.bf16 %v1348, %v1344
          %v1381 = vpack.c.bf16 %v1349, %v1345
          %v1382 = vpack.c.bf16 %v1350, %v1346
          %v1383 = vpack.c.bf16 %v1351, %v1347
          %1384 = vmatpush.bf16.msra.mxu0 %v835
          %1385 = vmatpush.bf16.msra.mxu0 %v834
          %1386 = vmatpush.bf16.msra.mxu0 %v833
          %1387 = vmatpush.bf16.msra.mxu0 %v832
          %1388 = vmatpush.bf16.msra.mxu0 %v831
          %1389 = vmatpush.bf16.msra.mxu0 %v830
          %1390 = vmatpush.bf16.msra.mxu0 %v829
          %1391 = vmatpush.bf16.msra.mxu0 %v828
          %1392 = vmatmul.bf16.gmra.mxu0 %v1352
          %v1393 = vpop.f32.mrf.mxu0
          %v1394 = vadd.f32 0.0, %v1393
          %v1395 = vpop.f32.mrf.mxu0
          %v1396 = vadd.f32 0.0, %v1395
          %1397 = vmatmul.bf16.gmra.mxu0 %v1356
          %v1398 = vpop.f32.mrf.mxu0
          %v1399 = vadd.f32 0.0, %v1398
          %v1400 = vpop.f32.mrf.mxu0
          %v1401 = vadd.f32 0.0, %v1400
          %1402 = vmatmul.bf16.gmra.mxu0 %v1360
          %v1403 = vpop.f32.mrf.mxu0
          %v1404 = vadd.f32 0.0, %v1403
          %v1405 = vpop.f32.mrf.mxu0
          %v1406 = vadd.f32 0.0, %v1405
          %1407 = vmatmul.bf16.gmra.mxu0 %v1364
          %v1408 = vpop.f32.mrf.mxu0
          %v1409 = vadd.f32 0.0, %v1408
          %v1410 = vpop.f32.mrf.mxu0
          %v1411 = vadd.f32 0.0, %v1410
          %1412 = vmatmul.bf16.gmra.mxu0 %v1368
          %v1413 = vpop.f32.mrf.mxu0
          %v1414 = vadd.f32 0.0, %v1413
          %v1415 = vpop.f32.mrf.mxu0
          %v1416 = vadd.f32 0.0, %v1415
          %1417 = vmatmul.bf16.gmra.mxu0 %v1372
          %v1418 = vpop.f32.mrf.mxu0
          %v1419 = vadd.f32 0.0, %v1418
          %v1420 = vpop.f32.mrf.mxu0
          %v1421 = vadd.f32 0.0, %v1420
          %1422 = vmatmul.bf16.gmra.mxu0 %v1376
          %v1423 = vpop.f32.mrf.mxu0
          %v1424 = vadd.f32 0.0, %v1423
          %v1425 = vpop.f32.mrf.mxu0
          %v1426 = vadd.f32 0.0, %v1425
          %1427 = vmatmul.bf16.gmra.mxu0 %v1380
          %v1428 = vpop.f32.mrf.mxu0
          %v1429 = vadd.f32 0.0, %v1428
          %v1430 = vpop.f32.mrf.mxu0
          %v1431 = vadd.f32 0.0, %v1430
          %1432 = vdwg.mxu0
          %1433 = vmatpush.bf16.msra.mxu0 %v843
          %1434 = vmatpush.bf16.msra.mxu0 %v842
          %1435 = vmatpush.bf16.msra.mxu0 %v841
          %1436 = vmatpush.bf16.msra.mxu0 %v840
          %1437 = vmatpush.bf16.msra.mxu0 %v839
          %1438 = vmatpush.bf16.msra.mxu0 %v838
          %1439 = vmatpush.bf16.msra.mxu0 %v837
          %1440 = vmatpush.bf16.msra.mxu0 %v836
          %1441 = vmatmul.bf16.gmra.mxu0 %v1353
          %v1442 = vpop.f32.mrf.mxu0
          %v1443 = vadd.f32 %v1394, %v1442
          %v1444 = vpop.f32.mrf.mxu0
          %v1445 = vadd.f32 %v1396, %v1444
          %1446 = vmatmul.bf16.gmra.mxu0 %v1357
          %v1447 = vpop.f32.mrf.mxu0
          %v1448 = vadd.f32 %v1399, %v1447
          %v1449 = vpop.f32.mrf.mxu0
          %v1450 = vadd.f32 %v1401, %v1449
          %1451 = vmatmul.bf16.gmra.mxu0 %v1361
          %v1452 = vpop.f32.mrf.mxu0
          %v1453 = vadd.f32 %v1404, %v1452
          %v1454 = vpop.f32.mrf.mxu0
          %v1455 = vadd.f32 %v1406, %v1454
          %1456 = vmatmul.bf16.gmra.mxu0 %v1365
          %v1457 = vpop.f32.mrf.mxu0
          %v1458 = vadd.f32 %v1409, %v1457
          %v1459 = vpop.f32.mrf.mxu0
          %v1460 = vadd.f32 %v1411, %v1459
          %1461 = vmatmul.bf16.gmra.mxu0 %v1369
          %v1462 = vpop.f32.mrf.mxu0
          %v1463 = vadd.f32 %v1414, %v1462
          %v1464 = vpop.f32.mrf.mxu0
          %v1465 = vadd.f32 %v1416, %v1464
          %1466 = vmatmul.bf16.gmra.mxu0 %v1373
          %v1467 = vpop.f32.mrf.mxu0
          %v1468 = vadd.f32 %v1419, %v1467
          %v1469 = vpop.f32.mrf.mxu0
          %v1470 = vadd.f32 %v1421, %v1469
          %1471 = vmatmul.bf16.gmra.mxu0 %v1377
          %v1472 = vpop.f32.mrf.mxu0
          %v1473 = vadd.f32 %v1424, %v1472
          %v1474 = vpop.f32.mrf.mxu0
          %v1475 = vadd.f32 %v1426, %v1474
          %1476 = vmatmul.bf16.gmra.mxu0 %v1381
          %v1477 = vpop.f32.mrf.mxu0
          %v1478 = vadd.f32 %v1429, %v1477
          %v1479 = vpop.f32.mrf.mxu0
          %v1480 = vadd.f32 %v1431, %v1479
          %1481 = vdwg.mxu0
          %1482 = vmatpush.bf16.msra.mxu0 %v851
          %1483 = vmatpush.bf16.msra.mxu0 %v850
          %1484 = vmatpush.bf16.msra.mxu0 %v849
          %1485 = vmatpush.bf16.msra.mxu0 %v848
          %1486 = vmatpush.bf16.msra.mxu0 %v847
          %1487 = vmatpush.bf16.msra.mxu0 %v846
          %1488 = vmatpush.bf16.msra.mxu0 %v845
          %1489 = vmatpush.bf16.msra.mxu0 %v844
          %1490 = vmatmul.bf16.gmra.mxu0 %v1354
          %v1491 = vpop.f32.mrf.mxu0
          %v1492 = vadd.f32 %v1443, %v1491
          %v1493 = vpop.f32.mrf.mxu0
          %v1494 = vadd.f32 %v1445, %v1493
          %1495 = vmatmul.bf16.gmra.mxu0 %v1358
          %v1496 = vpop.f32.mrf.mxu0
          %v1497 = vadd.f32 %v1448, %v1496
          %v1498 = vpop.f32.mrf.mxu0
          %v1499 = vadd.f32 %v1450, %v1498
          %1500 = vmatmul.bf16.gmra.mxu0 %v1362
          %v1501 = vpop.f32.mrf.mxu0
          %v1502 = vadd.f32 %v1453, %v1501
          %v1503 = vpop.f32.mrf.mxu0
          %v1504 = vadd.f32 %v1455, %v1503
          %1505 = vmatmul.bf16.gmra.mxu0 %v1366
          %v1506 = vpop.f32.mrf.mxu0
          %v1507 = vadd.f32 %v1458, %v1506
          %v1508 = vpop.f32.mrf.mxu0
          %v1509 = vadd.f32 %v1460, %v1508
          %1510 = vmatmul.bf16.gmra.mxu0 %v1370
          %v1511 = vpop.f32.mrf.mxu0
          %v1512 = vadd.f32 %v1463, %v1511
          %v1513 = vpop.f32.mrf.mxu0
          %v1514 = vadd.f32 %v1465, %v1513
          %1515 = vmatmul.bf16.gmra.mxu0 %v1374
          %v1516 = vpop.f32.mrf.mxu0
          %v1517 = vadd.f32 %v1468, %v1516
          %v1518 = vpop.f32.mrf.mxu0
          %v1519 = vadd.f32 %v1470, %v1518
          %1520 = vmatmul.bf16.gmra.mxu0 %v1378
          %v1521 = vpop.f32.mrf.mxu0
          %v1522 = vadd.f32 %v1473, %v1521
          %v1523 = vpop.f32.mrf.mxu0
          %v1524 = vadd.f32 %v1475, %v1523
          %1525 = vmatmul.bf16.gmra.mxu0 %v1382
          %v1526 = vpop.f32.mrf.mxu0
          %v1527 = vadd.f32 %v1478, %v1526
          %v1528 = vpop.f32.mrf.mxu0
          %v1529 = vadd.f32 %v1480, %v1528
          %1530 = vdwg.mxu0
          %1531 = vmatpush.bf16.msra.mxu0 %v859
          %1532 = vmatpush.bf16.msra.mxu0 %v858
          %1533 = vmatpush.bf16.msra.mxu0 %v857
          %1534 = vmatpush.bf16.msra.mxu0 %v856
          %1535 = vmatpush.bf16.msra.mxu0 %v855
          %1536 = vmatpush.bf16.msra.mxu0 %v854
          %1537 = vmatpush.bf16.msra.mxu0 %v853
          %1538 = vmatpush.bf16.msra.mxu0 %v852
          %1539 = vmatmul.bf16.gmra.mxu0 %v1355
          %v1540 = vpop.f32.mrf.mxu0
          %v1541 = vadd.f32 %v1492, %v1540
          %v1542 = vpop.f32.mrf.mxu0
          %v1543 = vadd.f32 %v1494, %v1542
          %1544 = vmatmul.bf16.gmra.mxu0 %v1359
          %v1545 = vpop.f32.mrf.mxu0
          %v1546 = vadd.f32 %v1497, %v1545
          %v1547 = vpop.f32.mrf.mxu0
          %v1548 = vadd.f32 %v1499, %v1547
          %1549 = vmatmul.bf16.gmra.mxu0 %v1363
          %v1550 = vpop.f32.mrf.mxu0
          %v1551 = vadd.f32 %v1502, %v1550
          %v1552 = vpop.f32.mrf.mxu0
          %v1553 = vadd.f32 %v1504, %v1552
          %1554 = vmatmul.bf16.gmra.mxu0 %v1367
          %v1555 = vpop.f32.mrf.mxu0
          %v1556 = vadd.f32 %v1507, %v1555
          %v1557 = vpop.f32.mrf.mxu0
          %v1558 = vadd.f32 %v1509, %v1557
          %1559 = vmatmul.bf16.gmra.mxu0 %v1371
          %v1560 = vpop.f32.mrf.mxu0
          %v1561 = vadd.f32 %v1512, %v1560
          %v1562 = vpop.f32.mrf.mxu0
          %v1563 = vadd.f32 %v1514, %v1562
          %1564 = vmatmul.bf16.gmra.mxu0 %v1375
          %v1565 = vpop.f32.mrf.mxu0
          %v1566 = vadd.f32 %v1517, %v1565
          %v1567 = vpop.f32.mrf.mxu0
          %v1568 = vadd.f32 %v1519, %v1567
          %1569 = vmatmul.bf16.gmra.mxu0 %v1379
          %v1570 = vpop.f32.mrf.mxu0
          %v1571 = vadd.f32 %v1522, %v1570
          %v1572 = vpop.f32.mrf.mxu0
          %v1573 = vadd.f32 %v1524, %v1572
          %1574 = vmatmul.bf16.gmra.mxu0 %v1383
          %v1575 = vpop.f32.mrf.mxu0
          %v1576 = vadd.f32 %v1527, %v1575
          %v1577 = vpop.f32.mrf.mxu0
          %v1578 = vadd.f32 %v1529, %v1577
          %1579 = vdwg.mxu0
          %v1580 = vld [vmem:[#allocation3 + $0x40] sm:$0xf]
          %v1581 = vld [vmem:[#allocation3 + $0x44] sm:$0xf]
          %v1582 = vld [vmem:[#allocation3 + $0x48] sm:$0xf]
          %v1583 = vld [vmem:[#allocation3 + $0x4c] sm:$0xf]
          %v1584 = vld [vmem:[#allocation3 + $0x50] sm:$0xf]
          %v1585 = vld [vmem:[#allocation3 + $0x54] sm:$0xf]
          %v1586 = vld [vmem:[#allocation3 + $0x58] sm:$0xf]
          %v1587 = vld [vmem:[#allocation3 + $0x5c] sm:$0xf]
          %v1588 = vld [vmem:[#allocation3 + $0x60] sm:$0xf]
          %v1589 = vld [vmem:[#allocation3 + $0x64] sm:$0xf]
          %v1590 = vld [vmem:[#allocation3 + $0x68] sm:$0xf]
          %v1591 = vld [vmem:[#allocation3 + $0x6c] sm:$0xf]
          %v1592 = vld [vmem:[#allocation3 + $0x70] sm:$0xf]
          %v1593 = vld [vmem:[#allocation3 + $0x74] sm:$0xf]
          %v1594 = vld [vmem:[#allocation3 + $0x78] sm:$0xf]
          %v1595 = vld [vmem:[#allocation3 + $0x7c] sm:$0xf]
          %v1596 = vpack.c.bf16 %v1543, %v1541
          %v1597 = vpack.c.bf16 %v1548, %v1546
          %v1598 = vpack.c.bf16 %v1553, %v1551
          %v1599 = vpack.c.bf16 %v1558, %v1556
          %v1600 = vpack.c.bf16 %v1563, %v1561
          %v1601 = vpack.c.bf16 %v1568, %v1566
          %v1602 = vpack.c.bf16 %v1573, %v1571
          %v1603 = vpack.c.bf16 %v1578, %v1576
          %v1620 = vunpack.c.l.b16 %v1580
          %v1621 = vunpack.c.l.b16 %v1581
          %v1622 = vunpack.c.l.b16 %v1582
          %v1623 = vunpack.c.l.b16 %v1583
          %v1624 = vunpack.c.l.b16 %v1584
          %v1625 = vunpack.c.l.b16 %v1585
          %v1626 = vunpack.c.l.b16 %v1586
          %v1627 = vunpack.c.l.b16 %v1587
          %v1628 = vunpack.c.l.b16 %v1588
          %v1629 = vunpack.c.l.b16 %v1589
          %v1630 = vunpack.c.l.b16 %v1590
          %v1631 = vunpack.c.l.b16 %v1591
          %v1632 = vunpack.c.l.b16 %v1592
          %v1633 = vunpack.c.l.b16 %v1593
          %v1634 = vunpack.c.l.b16 %v1594
          %v1635 = vunpack.c.l.b16 %v1595
          %v1636 = vpack.c.b16 %v1621, %v1620
          %v1637 = vpack.c.b16 %v1623, %v1622
          %v1638 = vpack.c.b16 %v1625, %v1624
          %v1639 = vpack.c.b16 %v1627, %v1626
          %v1640 = vpack.c.b16 %v1629, %v1628
          %v1641 = vpack.c.b16 %v1631, %v1630
          %v1642 = vpack.c.b16 %v1633, %v1632
          %v1643 = vpack.c.b16 %v1635, %v1634
          %1652 = vmatpush.bf16.msra.mxu0 %v1643
          %1653 = vmatpush.bf16.msra.mxu0 %v1642
          %1654 = vmatpush.bf16.msra.mxu0 %v1641
          %1655 = vmatpush.bf16.msra.mxu0 %v1640
          %1656 = vmatpush.bf16.msra.mxu0 %v1639
          %1657 = vmatpush.bf16.msra.mxu0 %v1638
          %1658 = vmatpush.bf16.msra.mxu0 %v1637
          %1659 = vmatpush.bf16.msra.mxu0 %v1636
          %1660 = vmatmul.bf16.gmra.mxu0 %v1596
          %v1661 = vpop.f32.mrf.mxu0
          %v1662 = vadd.f32 0.0, %v1661
          %v1663 = vpop.f32.mrf.mxu0
          %v1664 = vadd.f32 0.0, %v1663
          %1665 = vmatmul.bf16.gmra.mxu0 %v1597
          %v1666 = vpop.f32.mrf.mxu0
          %v1667 = vadd.f32 0.0, %v1666
          %v1668 = vpop.f32.mrf.mxu0
          %v1669 = vadd.f32 0.0, %v1668
          %1670 = vmatmul.bf16.gmra.mxu0 %v1598
          %v1671 = vpop.f32.mrf.mxu0
          %v1672 = vadd.f32 0.0, %v1671
          %v1673 = vpop.f32.mrf.mxu0
          %v1674 = vadd.f32 0.0, %v1673
          %1675 = vmatmul.bf16.gmra.mxu0 %v1599
          %v1676 = vpop.f32.mrf.mxu0
          %v1677 = vadd.f32 0.0, %v1676
          %v1678 = vpop.f32.mrf.mxu0
          %v1679 = vadd.f32 0.0, %v1678
          %1680 = vmatmul.bf16.gmra.mxu0 %v1600
          %v1681 = vpop.f32.mrf.mxu0
          %v1682 = vadd.f32 0.0, %v1681
          %v1683 = vpop.f32.mrf.mxu0
          %v1684 = vadd.f32 0.0, %v1683
          %1685 = vmatmul.bf16.gmra.mxu0 %v1601
          %v1686 = vpop.f32.mrf.mxu0
          %v1687 = vadd.f32 0.0, %v1686
          %v1688 = vpop.f32.mrf.mxu0
          %v1689 = vadd.f32 0.0, %v1688
          %1690 = vmatmul.bf16.gmra.mxu0 %v1602
          %v1691 = vpop.f32.mrf.mxu0
          %v1692 = vadd.f32 0.0, %v1691
          %v1693 = vpop.f32.mrf.mxu0
          %v1694 = vadd.f32 0.0, %v1693
          %1695 = vmatmul.bf16.gmra.mxu0 %v1603
          %v1696 = vpop.f32.mrf.mxu0
          %v1697 = vadd.f32 0.0, %v1696
          %v1698 = vpop.f32.mrf.mxu0
          %v1699 = vadd.f32 0.0, %v1698
          %1700 = vdwg.mxu0
          %v1717 = vunpack.c.l.b16 %v1088
          %v1718 = vunpack.c.l.b16 %v1089
          %v1719 = vunpack.c.l.b16 %v1090
          %v1720 = vunpack.c.l.b16 %v1091
          %v1721 = vunpack.c.l.b16 %v1092
          %v1722 = vunpack.c.l.b16 %v1093
          %v1723 = vunpack.c.l.b16 %v1094
          %v1724 = vunpack.c.l.b16 %v1095
          %v1725 = vunpack.c.l.b16 %v1096
          %v1726 = vunpack.c.l.b16 %v1097
          %v1727 = vunpack.c.l.b16 %v1098
          %v1728 = vunpack.c.l.b16 %v1099
          %v1729 = vunpack.c.l.b16 %v1100
          %v1730 = vunpack.c.l.b16 %v1101
          %v1731 = vunpack.c.l.b16 %v1102
          %v1732 = vunpack.c.l.b16 %v1103
          %v1733 = vpack.c.b16 %v1718, %v1717
          %v1734 = vpack.c.b16 %v1720, %v1719
          %v1735 = vpack.c.b16 %v1722, %v1721
          %v1736 = vpack.c.b16 %v1724, %v1723
          %v1737 = vpack.c.b16 %v1726, %v1725
          %v1738 = vpack.c.b16 %v1728, %v1727
          %v1739 = vpack.c.b16 %v1730, %v1729
          %v1740 = vpack.c.b16 %v1732, %v1731
          %1749 = vmatpush.bf16.msra.mxu0 %v1740
          %1750 = vmatpush.bf16.msra.mxu0 %v1739
          %1751 = vmatpush.bf16.msra.mxu0 %v1738
          %1752 = vmatpush.bf16.msra.mxu0 %v1737
          %1753 = vmatpush.bf16.msra.mxu0 %v1736
          %1754 = vmatpush.bf16.msra.mxu0 %v1735
          %1755 = vmatpush.bf16.msra.mxu0 %v1734
          %1756 = vmatpush.bf16.msra.mxu0 %v1733
          %1757 = vmatmul.bf16.gmra.mxu0 %v1104
          %v1758 = vpop.f32.mrf.mxu0
          %v1759 = vadd.f32 %v1662, %v1758
          %v1760 = vpop.f32.mrf.mxu0
          %v1761 = vadd.f32 %v1664, %v1760
          %1762 = vmatmul.bf16.gmra.mxu0 %v1105
          %v1763 = vpop.f32.mrf.mxu0
          %v1764 = vadd.f32 %v1667, %v1763
          %v1765 = vpop.f32.mrf.mxu0
          %v1766 = vadd.f32 %v1669, %v1765
          %1767 = vmatmul.bf16.gmra.mxu0 %v1106
          %v1768 = vpop.f32.mrf.mxu0
          %v1769 = vadd.f32 %v1672, %v1768
          %v1770 = vpop.f32.mrf.mxu0
          %v1771 = vadd.f32 %v1674, %v1770
          %1772 = vmatmul.bf16.gmra.mxu0 %v1107
          %v1773 = vpop.f32.mrf.mxu0
          %v1774 = vadd.f32 %v1677, %v1773
          %v1775 = vpop.f32.mrf.mxu0
          %v1776 = vadd.f32 %v1679, %v1775
          %1777 = vmatmul.bf16.gmra.mxu0 %v1108
          %v1778 = vpop.f32.mrf.mxu0
          %v1779 = vadd.f32 %v1682, %v1778
          %v1780 = vpop.f32.mrf.mxu0
          %v1781 = vadd.f32 %v1684, %v1780
          %1782 = vmatmul.bf16.gmra.mxu0 %v1109
          %v1783 = vpop.f32.mrf.mxu0
          %v1784 = vadd.f32 %v1687, %v1783
          %v1785 = vpop.f32.mrf.mxu0
          %v1786 = vadd.f32 %v1689, %v1785
          %1787 = vmatmul.bf16.gmra.mxu0 %v1110
          %v1788 = vpop.f32.mrf.mxu0
          %v1789 = vadd.f32 %v1692, %v1788
          %v1790 = vpop.f32.mrf.mxu0
          %v1791 = vadd.f32 %v1694, %v1790
          %1792 = vmatmul.bf16.gmra.mxu0 %v1111
          %v1793 = vpop.f32.mrf.mxu0
          %v1794 = vadd.f32 %v1697, %v1793
          %v1795 = vpop.f32.mrf.mxu0
          %v1796 = vadd.f32 %v1699, %v1795
          %1797 = vdwg.mxu0
          %1798 = vset.pattern.permute.xlu0 2
          %1799 = vperm.xlu0 %1798, %v343
          %v1800 = vpop.permute.xlu0 %1799
          %1801 = vset.pattern.permute.xlu0 2
          %1802 = vperm.xlu0 %1801, %v344
          %v1803 = vpop.permute.xlu0 %1802
          %1804 = vset.pattern.permute.xlu0 2
          %1805 = vperm.xlu0 %1804, %v345
          %v1806 = vpop.permute.xlu0 %1805
          %1807 = vset.pattern.permute.xlu0 2
          %1808 = vperm.xlu0 %1807, %v346
          %v1809 = vpop.permute.xlu0 %1808
          %1810 = vset.pattern.permute.xlu0 2
          %1811 = vperm.xlu0 %1810, %v347
          %v1812 = vpop.permute.xlu0 %1811
          %1813 = vset.pattern.permute.xlu0 2
          %1814 = vperm.xlu0 %1813, %v348
          %v1815 = vpop.permute.xlu0 %1814
          %1816 = vset.pattern.permute.xlu0 2
          %1817 = vperm.xlu0 %1816, %v349
          %v1818 = vpop.permute.xlu0 %1817
          %1819 = vset.pattern.permute.xlu0 2
          %1820 = vperm.xlu0 %1819, %v350
          %v1821 = vpop.permute.xlu0 %1820
          %1822 = vset.pattern.permute.xlu0 2
          %1823 = vperm.xlu0 %1822, %v351
          %v1824 = vpop.permute.xlu0 %1823
          %1825 = vset.pattern.permute.xlu0 2
          %1826 = vperm.xlu0 %1825, %v352
          %v1827 = vpop.permute.xlu0 %1826
          %1828 = vset.pattern.permute.xlu0 2
          %1829 = vperm.xlu0 %1828, %v353
          %v1830 = vpop.permute.xlu0 %1829
          %1831 = vset.pattern.permute.xlu0 2
          %1832 = vperm.xlu0 %1831, %v354
          %v1833 = vpop.permute.xlu0 %1832
          %1834 = vset.pattern.permute.xlu0 2
          %1835 = vperm.xlu0 %1834, %v355
          %v1836 = vpop.permute.xlu0 %1835
          %1837 = vset.pattern.permute.xlu0 2
          %1838 = vperm.xlu0 %1837, %v356
          %v1839 = vpop.permute.xlu0 %1838
          %1840 = vset.pattern.permute.xlu0 2
          %1841 = vperm.xlu0 %1840, %v357
          %v1842 = vpop.permute.xlu0 %1841
          %1843 = vset.pattern.permute.xlu0 2
          %1844 = vperm.xlu0 %1843, %v358
          %v1845 = vpop.permute.xlu0 %1844
          %vm1846 = vcmp.eq.s32.totalorder %v424, %v1800
          %vm1847 = vcmp.eq.s32.totalorder %v425, %v1800
          %vm1848 = vcmp.eq.s32.totalorder %v426, %v1800
          %vm1849 = vcmp.eq.s32.totalorder %v427, %v1800
          %vm1850 = vcmp.eq.s32.totalorder %v424, %v1803
          %vm1851 = vcmp.eq.s32.totalorder %v425, %v1803
          %vm1852 = vcmp.eq.s32.totalorder %v426, %v1803
          %vm1853 = vcmp.eq.s32.totalorder %v427, %v1803
          %vm1854 = vcmp.eq.s32.totalorder %v424, %v1806
          %vm1855 = vcmp.eq.s32.totalorder %v425, %v1806
          %vm1856 = vcmp.eq.s32.totalorder %v426, %v1806
          %vm1857 = vcmp.eq.s32.totalorder %v427, %v1806
          %vm1858 = vcmp.eq.s32.totalorder %v424, %v1809
          %vm1859 = vcmp.eq.s32.totalorder %v425, %v1809
          %vm1860 = vcmp.eq.s32.totalorder %v426, %v1809
          %vm1861 = vcmp.eq.s32.totalorder %v427, %v1809
          %vm1862 = vcmp.eq.s32.totalorder %v424, %v1812
          %vm1863 = vcmp.eq.s32.totalorder %v425, %v1812
          %vm1864 = vcmp.eq.s32.totalorder %v426, %v1812
          %vm1865 = vcmp.eq.s32.totalorder %v427, %v1812
          %vm1866 = vcmp.eq.s32.totalorder %v424, %v1815
          %vm1867 = vcmp.eq.s32.totalorder %v425, %v1815
          %vm1868 = vcmp.eq.s32.totalorder %v426, %v1815
          %vm1869 = vcmp.eq.s32.totalorder %v427, %v1815
          %vm1870 = vcmp.eq.s32.totalorder %v424, %v1818
          %vm1871 = vcmp.eq.s32.totalorder %v425, %v1818
          %vm1872 = vcmp.eq.s32.totalorder %v426, %v1818
          %vm1873 = vcmp.eq.s32.totalorder %v427, %v1818
          %vm1874 = vcmp.eq.s32.totalorder %v424, %v1821
          %vm1875 = vcmp.eq.s32.totalorder %v425, %v1821
          %vm1876 = vcmp.eq.s32.totalorder %v426, %v1821
          %vm1877 = vcmp.eq.s32.totalorder %v427, %v1821
          %vm1878 = vcmp.eq.s32.totalorder %v424, %v1824
          %vm1879 = vcmp.eq.s32.totalorder %v425, %v1824
          %vm1880 = vcmp.eq.s32.totalorder %v426, %v1824
          %vm1881 = vcmp.eq.s32.totalorder %v427, %v1824
          %vm1882 = vcmp.eq.s32.totalorder %v424, %v1827
          %vm1883 = vcmp.eq.s32.totalorder %v425, %v1827
          %vm1884 = vcmp.eq.s32.totalorder %v426, %v1827
          %vm1885 = vcmp.eq.s32.totalorder %v427, %v1827
          %vm1886 = vcmp.eq.s32.totalorder %v424, %v1830
          %vm1887 = vcmp.eq.s32.totalorder %v425, %v1830
          %vm1888 = vcmp.eq.s32.totalorder %v426, %v1830
          %vm1889 = vcmp.eq.s32.totalorder %v427, %v1830
          %vm1890 = vcmp.eq.s32.totalorder %v424, %v1833
          %vm1891 = vcmp.eq.s32.totalorder %v425, %v1833
          %vm1892 = vcmp.eq.s32.totalorder %v426, %v1833
          %vm1893 = vcmp.eq.s32.totalorder %v427, %v1833
          %vm1894 = vcmp.eq.s32.totalorder %v424, %v1836
          %vm1895 = vcmp.eq.s32.totalorder %v425, %v1836
          %vm1896 = vcmp.eq.s32.totalorder %v426, %v1836
          %vm1897 = vcmp.eq.s32.totalorder %v427, %v1836
          %vm1898 = vcmp.eq.s32.totalorder %v424, %v1839
          %vm1899 = vcmp.eq.s32.totalorder %v425, %v1839
          %vm1900 = vcmp.eq.s32.totalorder %v426, %v1839
          %vm1901 = vcmp.eq.s32.totalorder %v427, %v1839
          %vm1902 = vcmp.eq.s32.totalorder %v424, %v1842
          %vm1903 = vcmp.eq.s32.totalorder %v425, %v1842
          %vm1904 = vcmp.eq.s32.totalorder %v426, %v1842
          %vm1905 = vcmp.eq.s32.totalorder %v427, %v1842
          %vm1906 = vcmp.eq.s32.totalorder %v424, %v1845
          %vm1907 = vcmp.eq.s32.totalorder %v425, %v1845
          %vm1908 = vcmp.eq.s32.totalorder %v426, %v1845
          %vm1909 = vcmp.eq.s32.totalorder %v427, %v1845
          %v1910 = vsel %vm1846, 1, 0
          %v1911 = vsel %vm1847, 1, 0
          %v1912 = vsel %vm1848, 1, 0
          %v1913 = vsel %vm1849, 1, 0
          %v1914 = vsel %vm1850, 1, 0
          %v1915 = vsel %vm1851, 1, 0
          %v1916 = vsel %vm1852, 1, 0
          %v1917 = vsel %vm1853, 1, 0
          %v1918 = vsel %vm1854, 1, 0
          %v1919 = vsel %vm1855, 1, 0
          %v1920 = vsel %vm1856, 1, 0
          %v1921 = vsel %vm1857, 1, 0
          %v1922 = vsel %vm1858, 1, 0
          %v1923 = vsel %vm1859, 1, 0
          %v1924 = vsel %vm1860, 1, 0
          %v1925 = vsel %vm1861, 1, 0
          %v1926 = vsel %vm1862, 1, 0
          %v1927 = vsel %vm1863, 1, 0
          %v1928 = vsel %vm1864, 1, 0
          %v1929 = vsel %vm1865, 1, 0
          %v1930 = vsel %vm1866, 1, 0
          %v1931 = vsel %vm1867, 1, 0
          %v1932 = vsel %vm1868, 1, 0
          %v1933 = vsel %vm1869, 1, 0
          %v1934 = vsel %vm1870, 1, 0
          %v1935 = vsel %vm1871, 1, 0
          %v1936 = vsel %vm1872, 1, 0
          %v1937 = vsel %vm1873, 1, 0
          %v1938 = vsel %vm1874, 1, 0
          %v1939 = vsel %vm1875, 1, 0
          %v1940 = vsel %vm1876, 1, 0
          %v1941 = vsel %vm1877, 1, 0
          %v1942 = vsel %vm1878, 1, 0
          %v1943 = vsel %vm1879, 1, 0
          %v1944 = vsel %vm1880, 1, 0
          %v1945 = vsel %vm1881, 1, 0
          %v1946 = vsel %vm1882, 1, 0
          %v1947 = vsel %vm1883, 1, 0
          %v1948 = vsel %vm1884, 1, 0
          %v1949 = vsel %vm1885, 1, 0
          %v1950 = vsel %vm1886, 1, 0
          %v1951 = vsel %vm1887, 1, 0
          %v1952 = vsel %vm1888, 1, 0
          %v1953 = vsel %vm1889, 1, 0
          %v1954 = vsel %vm1890, 1, 0
          %v1955 = vsel %vm1891, 1, 0
          %v1956 = vsel %vm1892, 1, 0
          %v1957 = vsel %vm1893, 1, 0
          %v1958 = vsel %vm1894, 1, 0
          %v1959 = vsel %vm1895, 1, 0
          %v1960 = vsel %vm1896, 1, 0
          %v1961 = vsel %vm1897, 1, 0
          %v1962 = vsel %vm1898, 1, 0
          %v1963 = vsel %vm1899, 1, 0
          %v1964 = vsel %vm1900, 1, 0
          %v1965 = vsel %vm1901, 1, 0
          %v1966 = vsel %vm1902, 1, 0
          %v1967 = vsel %vm1903, 1, 0
          %v1968 = vsel %vm1904, 1, 0
          %v1969 = vsel %vm1905, 1, 0
          %v1970 = vsel %vm1906, 1, 0
          %v1971 = vsel %vm1907, 1, 0
          %v1972 = vsel %vm1908, 1, 0
          %v1973 = vsel %vm1909, 1, 0
          %v1974 = vcvt.s32.f32 %v1910
          %v1975 = vcvt.s32.f32 %v1911
          %v1976 = vcvt.s32.f32 %v1912
          %v1977 = vcvt.s32.f32 %v1913
          %v1978 = vcvt.s32.f32 %v1914
          %v1979 = vcvt.s32.f32 %v1915
          %v1980 = vcvt.s32.f32 %v1916
          %v1981 = vcvt.s32.f32 %v1917
          %v1982 = vcvt.s32.f32 %v1918
          %v1983 = vcvt.s32.f32 %v1919
          %v1984 = vcvt.s32.f32 %v1920
          %v1985 = vcvt.s32.f32 %v1921
          %v1986 = vcvt.s32.f32 %v1922
          %v1987 = vcvt.s32.f32 %v1923
          %v1988 = vcvt.s32.f32 %v1924
          %v1989 = vcvt.s32.f32 %v1925
          %v1990 = vcvt.s32.f32 %v1926
          %v1991 = vcvt.s32.f32 %v1927
          %v1992 = vcvt.s32.f32 %v1928
          %v1993 = vcvt.s32.f32 %v1929
          %v1994 = vcvt.s32.f32 %v1930
          %v1995 = vcvt.s32.f32 %v1931
          %v1996 = vcvt.s32.f32 %v1932
          %v1997 = vcvt.s32.f32 %v1933
          %v1998 = vcvt.s32.f32 %v1934
          %v1999 = vcvt.s32.f32 %v1935
          %v2000 = vcvt.s32.f32 %v1936
          %v2001 = vcvt.s32.f32 %v1937
          %v2002 = vcvt.s32.f32 %v1938
          %v2003 = vcvt.s32.f32 %v1939
          %v2004 = vcvt.s32.f32 %v1940
          %v2005 = vcvt.s32.f32 %v1941
          %v2006 = vcvt.s32.f32 %v1942
          %v2007 = vcvt.s32.f32 %v1943
          %v2008 = vcvt.s32.f32 %v1944
          %v2009 = vcvt.s32.f32 %v1945
          %v2010 = vcvt.s32.f32 %v1946
          %v2011 = vcvt.s32.f32 %v1947
          %v2012 = vcvt.s32.f32 %v1948
          %v2013 = vcvt.s32.f32 %v1949
          %v2014 = vcvt.s32.f32 %v1950
          %v2015 = vcvt.s32.f32 %v1951
          %v2016 = vcvt.s32.f32 %v1952
          %v2017 = vcvt.s32.f32 %v1953
          %v2018 = vcvt.s32.f32 %v1954
          %v2019 = vcvt.s32.f32 %v1955
          %v2020 = vcvt.s32.f32 %v1956
          %v2021 = vcvt.s32.f32 %v1957
          %v2022 = vcvt.s32.f32 %v1958
          %v2023 = vcvt.s32.f32 %v1959
          %v2024 = vcvt.s32.f32 %v1960
          %v2025 = vcvt.s32.f32 %v1961
          %v2026 = vcvt.s32.f32 %v1962
          %v2027 = vcvt.s32.f32 %v1963
          %v2028 = vcvt.s32.f32 %v1964
          %v2029 = vcvt.s32.f32 %v1965
          %v2030 = vcvt.s32.f32 %v1966
          %v2031 = vcvt.s32.f32 %v1967
          %v2032 = vcvt.s32.f32 %v1968
          %v2033 = vcvt.s32.f32 %v1969
          %v2034 = vcvt.s32.f32 %v1970
          %v2035 = vcvt.s32.f32 %v1971
          %v2036 = vcvt.s32.f32 %v1972
          %v2037 = vcvt.s32.f32 %v1973
          %v2038 = vpack.c.bf16 %v1978, %v1974
          %v2039 = vpack.c.bf16 %v1979, %v1975
          %v2040 = vpack.c.bf16 %v1980, %v1976
          %v2041 = vpack.c.bf16 %v1981, %v1977
          %v2042 = vpack.c.bf16 %v1986, %v1982
          %v2043 = vpack.c.bf16 %v1987, %v1983
          %v2044 = vpack.c.bf16 %v1988, %v1984
          %v2045 = vpack.c.bf16 %v1989, %v1985
          %v2046 = vpack.c.bf16 %v1994, %v1990
          %v2047 = vpack.c.bf16 %v1995, %v1991
          %v2048 = vpack.c.bf16 %v1996, %v1992
          %v2049 = vpack.c.bf16 %v1997, %v1993
          %v2050 = vpack.c.bf16 %v2002, %v1998
          %v2051 = vpack.c.bf16 %v2003, %v1999
          %v2052 = vpack.c.bf16 %v2004, %v2000
          %v2053 = vpack.c.bf16 %v2005, %v2001
          %v2054 = vpack.c.bf16 %v2010, %v2006
          %v2055 = vpack.c.bf16 %v2011, %v2007
          %v2056 = vpack.c.bf16 %v2012, %v2008
          %v2057 = vpack.c.bf16 %v2013, %v2009
          %v2058 = vpack.c.bf16 %v2018, %v2014
          %v2059 = vpack.c.bf16 %v2019, %v2015
          %v2060 = vpack.c.bf16 %v2020, %v2016
          %v2061 = vpack.c.bf16 %v2021, %v2017
          %v2062 = vpack.c.bf16 %v2026, %v2022
          %v2063 = vpack.c.bf16 %v2027, %v2023
          %v2064 = vpack.c.bf16 %v2028, %v2024
          %v2065 = vpack.c.bf16 %v2029, %v2025
          %v2066 = vpack.c.bf16 %v2034, %v2030
          %v2067 = vpack.c.bf16 %v2035, %v2031
          %v2068 = vpack.c.bf16 %v2036, %v2032
          %v2069 = vpack.c.bf16 %v2037, %v2033
          %2070 = vmatpush.bf16.msra.mxu0 %v835
          %2071 = vmatpush.bf16.msra.mxu0 %v834
          %2072 = vmatpush.bf16.msra.mxu0 %v833
          %2073 = vmatpush.bf16.msra.mxu0 %v832
          %2074 = vmatpush.bf16.msra.mxu0 %v831
          %2075 = vmatpush.bf16.msra.mxu0 %v830
          %2076 = vmatpush.bf16.msra.mxu0 %v829
          %2077 = vmatpush.bf16.msra.mxu0 %v828
          %2078 = vmatmul.bf16.gmra.mxu0 %v2038
          %v2079 = vpop.f32.mrf.mxu0
          %v2080 = vadd.f32 0.0, %v2079
          %v2081 = vpop.f32.mrf.mxu0
          %v2082 = vadd.f32 0.0, %v2081
          %2083 = vmatmul.bf16.gmra.mxu0 %v2042
          %v2084 = vpop.f32.mrf.mxu0
          %v2085 = vadd.f32 0.0, %v2084
          %v2086 = vpop.f32.mrf.mxu0
          %v2087 = vadd.f32 0.0, %v2086
          %2088 = vmatmul.bf16.gmra.mxu0 %v2046
          %v2089 = vpop.f32.mrf.mxu0
          %v2090 = vadd.f32 0.0, %v2089
          %v2091 = vpop.f32.mrf.mxu0
          %v2092 = vadd.f32 0.0, %v2091
          %2093 = vmatmul.bf16.gmra.mxu0 %v2050
          %v2094 = vpop.f32.mrf.mxu0
          %v2095 = vadd.f32 0.0, %v2094
          %v2096 = vpop.f32.mrf.mxu0
          %v2097 = vadd.f32 0.0, %v2096
          %2098 = vmatmul.bf16.gmra.mxu0 %v2054
          %v2099 = vpop.f32.mrf.mxu0
          %v2100 = vadd.f32 0.0, %v2099
          %v2101 = vpop.f32.mrf.mxu0
          %v2102 = vadd.f32 0.0, %v2101
          %2103 = vmatmul.bf16.gmra.mxu0 %v2058
          %v2104 = vpop.f32.mrf.mxu0
          %v2105 = vadd.f32 0.0, %v2104
          %v2106 = vpop.f32.mrf.mxu0
          %v2107 = vadd.f32 0.0, %v2106
          %2108 = vmatmul.bf16.gmra.mxu0 %v2062
          %v2109 = vpop.f32.mrf.mxu0
          %v2110 = vadd.f32 0.0, %v2109
          %v2111 = vpop.f32.mrf.mxu0
          %v2112 = vadd.f32 0.0, %v2111
          %2113 = vmatmul.bf16.gmra.mxu0 %v2066
          %v2114 = vpop.f32.mrf.mxu0
          %v2115 = vadd.f32 0.0, %v2114
          %v2116 = vpop.f32.mrf.mxu0
          %v2117 = vadd.f32 0.0, %v2116
          %2118 = vdwg.mxu0
          %2119 = vmatpush.bf16.msra.mxu0 %v843
          %2120 = vmatpush.bf16.msra.mxu0 %v842
          %2121 = vmatpush.bf16.msra.mxu0 %v841
          %2122 = vmatpush.bf16.msra.mxu0 %v840
          %2123 = vmatpush.bf16.msra.mxu0 %v839
          %2124 = vmatpush.bf16.msra.mxu0 %v838
          %2125 = vmatpush.bf16.msra.mxu0 %v837
          %2126 = vmatpush.bf16.msra.mxu0 %v836
          %2127 = vmatmul.bf16.gmra.mxu0 %v2039
          %v2128 = vpop.f32.mrf.mxu0
          %v2129 = vadd.f32 %v2080, %v2128
          %v2130 = vpop.f32.mrf.mxu0
          %v2131 = vadd.f32 %v2082, %v2130
          %2132 = vmatmul.bf16.gmra.mxu0 %v2043
          %v2133 = vpop.f32.mrf.mxu0
          %v2134 = vadd.f32 %v2085, %v2133
          %v2135 = vpop.f32.mrf.mxu0
          %v2136 = vadd.f32 %v2087, %v2135
          %2137 = vmatmul.bf16.gmra.mxu0 %v2047
          %v2138 = vpop.f32.mrf.mxu0
          %v2139 = vadd.f32 %v2090, %v2138
          %v2140 = vpop.f32.mrf.mxu0
          %v2141 = vadd.f32 %v2092, %v2140
          %2142 = vmatmul.bf16.gmra.mxu0 %v2051
          %v2143 = vpop.f32.mrf.mxu0
          %v2144 = vadd.f32 %v2095, %v2143
          %v2145 = vpop.f32.mrf.mxu0
          %v2146 = vadd.f32 %v2097, %v2145
          %2147 = vmatmul.bf16.gmra.mxu0 %v2055
          %v2148 = vpop.f32.mrf.mxu0
          %v2149 = vadd.f32 %v2100, %v2148
          %v2150 = vpop.f32.mrf.mxu0
          %v2151 = vadd.f32 %v2102, %v2150
          %2152 = vmatmul.bf16.gmra.mxu0 %v2059
          %v2153 = vpop.f32.mrf.mxu0
          %v2154 = vadd.f32 %v2105, %v2153
          %v2155 = vpop.f32.mrf.mxu0
          %v2156 = vadd.f32 %v2107, %v2155
          %2157 = vmatmul.bf16.gmra.mxu0 %v2063
          %v2158 = vpop.f32.mrf.mxu0
          %v2159 = vadd.f32 %v2110, %v2158
          %v2160 = vpop.f32.mrf.mxu0
          %v2161 = vadd.f32 %v2112, %v2160
          %2162 = vmatmul.bf16.gmra.mxu0 %v2067
          %v2163 = vpop.f32.mrf.mxu0
          %v2164 = vadd.f32 %v2115, %v2163
          %v2165 = vpop.f32.mrf.mxu0
          %v2166 = vadd.f32 %v2117, %v2165
          %2167 = vdwg.mxu0
          %2168 = vmatpush.bf16.msra.mxu0 %v851
          %2169 = vmatpush.bf16.msra.mxu0 %v850
          %2170 = vmatpush.bf16.msra.mxu0 %v849
          %2171 = vmatpush.bf16.msra.mxu0 %v848
          %2172 = vmatpush.bf16.msra.mxu0 %v847
          %2173 = vmatpush.bf16.msra.mxu0 %v846
          %2174 = vmatpush.bf16.msra.mxu0 %v845
          %2175 = vmatpush.bf16.msra.mxu0 %v844
          %2176 = vmatmul.bf16.gmra.mxu0 %v2040
          %v2177 = vpop.f32.mrf.mxu0
          %v2178 = vadd.f32 %v2129, %v2177
          %v2179 = vpop.f32.mrf.mxu0
          %v2180 = vadd.f32 %v2131, %v2179
          %2181 = vmatmul.bf16.gmra.mxu0 %v2044
          %v2182 = vpop.f32.mrf.mxu0
          %v2183 = vadd.f32 %v2134, %v2182
          %v2184 = vpop.f32.mrf.mxu0
          %v2185 = vadd.f32 %v2136, %v2184
          %2186 = vmatmul.bf16.gmra.mxu0 %v2048
          %v2187 = vpop.f32.mrf.mxu0
          %v2188 = vadd.f32 %v2139, %v2187
          %v2189 = vpop.f32.mrf.mxu0
          %v2190 = vadd.f32 %v2141, %v2189
          %2191 = vmatmul.bf16.gmra.mxu0 %v2052
          %v2192 = vpop.f32.mrf.mxu0
          %v2193 = vadd.f32 %v2144, %v2192
          %v2194 = vpop.f32.mrf.mxu0
          %v2195 = vadd.f32 %v2146, %v2194
          %2196 = vmatmul.bf16.gmra.mxu0 %v2056
          %v2197 = vpop.f32.mrf.mxu0
          %v2198 = vadd.f32 %v2149, %v2197
          %v2199 = vpop.f32.mrf.mxu0
          %v2200 = vadd.f32 %v2151, %v2199
          %2201 = vmatmul.bf16.gmra.mxu0 %v2060
          %v2202 = vpop.f32.mrf.mxu0
          %v2203 = vadd.f32 %v2154, %v2202
          %v2204 = vpop.f32.mrf.mxu0
          %v2205 = vadd.f32 %v2156, %v2204
          %2206 = vmatmul.bf16.gmra.mxu0 %v2064
          %v2207 = vpop.f32.mrf.mxu0
          %v2208 = vadd.f32 %v2159, %v2207
          %v2209 = vpop.f32.mrf.mxu0
          %v2210 = vadd.f32 %v2161, %v2209
          %2211 = vmatmul.bf16.gmra.mxu0 %v2068
          %v2212 = vpop.f32.mrf.mxu0
          %v2213 = vadd.f32 %v2164, %v2212
          %v2214 = vpop.f32.mrf.mxu0
          %v2215 = vadd.f32 %v2166, %v2214
          %2216 = vdwg.mxu0
          %2217 = vmatpush.bf16.msra.mxu0 %v859
          %2218 = vmatpush.bf16.msra.mxu0 %v858
          %2219 = vmatpush.bf16.msra.mxu0 %v857
          %2220 = vmatpush.bf16.msra.mxu0 %v856
          %2221 = vmatpush.bf16.msra.mxu0 %v855
          %2222 = vmatpush.bf16.msra.mxu0 %v854
          %2223 = vmatpush.bf16.msra.mxu0 %v853
          %2224 = vmatpush.bf16.msra.mxu0 %v852
          %2225 = vmatmul.bf16.gmra.mxu0 %v2041
          %v2226 = vpop.f32.mrf.mxu0
          %v2227 = vadd.f32 %v2178, %v2226
          %v2228 = vpop.f32.mrf.mxu0
          %v2229 = vadd.f32 %v2180, %v2228
          %2230 = vmatmul.bf16.gmra.mxu0 %v2045
          %v2231 = vpop.f32.mrf.mxu0
          %v2232 = vadd.f32 %v2183, %v2231
          %v2233 = vpop.f32.mrf.mxu0
          %v2234 = vadd.f32 %v2185, %v2233
          %2235 = vmatmul.bf16.gmra.mxu0 %v2049
          %v2236 = vpop.f32.mrf.mxu0
          %v2237 = vadd.f32 %v2188, %v2236
          %v2238 = vpop.f32.mrf.mxu0
          %v2239 = vadd.f32 %v2190, %v2238
          %2240 = vmatmul.bf16.gmra.mxu0 %v2053
          %v2241 = vpop.f32.mrf.mxu0
          %v2242 = vadd.f32 %v2193, %v2241
          %v2243 = vpop.f32.mrf.mxu0
          %v2244 = vadd.f32 %v2195, %v2243
          %2245 = vmatmul.bf16.gmra.mxu0 %v2057
          %v2246 = vpop.f32.mrf.mxu0
          %v2247 = vadd.f32 %v2198, %v2246
          %v2248 = vpop.f32.mrf.mxu0
          %v2249 = vadd.f32 %v2200, %v2248
          %2250 = vmatmul.bf16.gmra.mxu0 %v2061
          %v2251 = vpop.f32.mrf.mxu0
          %v2252 = vadd.f32 %v2203, %v2251
          %v2253 = vpop.f32.mrf.mxu0
          %v2254 = vadd.f32 %v2205, %v2253
          %2255 = vmatmul.bf16.gmra.mxu0 %v2065
          %v2256 = vpop.f32.mrf.mxu0
          %v2257 = vadd.f32 %v2208, %v2256
          %v2258 = vpop.f32.mrf.mxu0
          %v2259 = vadd.f32 %v2210, %v2258
          %2260 = vmatmul.bf16.gmra.mxu0 %v2069
          %v2261 = vpop.f32.mrf.mxu0
          %v2262 = vadd.f32 %v2213, %v2261
          %v2263 = vpop.f32.mrf.mxu0
          %v2264 = vadd.f32 %v2215, %v2263
          %2265 = vdwg.mxu0
          %v2266 = vld [vmem:[#allocation3 + $0x80] sm:$0xf]
          %v2267 = vld [vmem:[#allocation3 + $0x84] sm:$0xf]
          %v2268 = vld [vmem:[#allocation3 + $0x88] sm:$0xf]
          %v2269 = vld [vmem:[#allocation3 + $0x8c] sm:$0xf]
          %v2270 = vld [vmem:[#allocation3 + $0x90] sm:$0xf]
          %v2271 = vld [vmem:[#allocation3 + $0x94] sm:$0xf]
          %v2272 = vld [vmem:[#allocation3 + $0x98] sm:$0xf]
          %v2273 = vld [vmem:[#allocation3 + $0x9c] sm:$0xf]
          %v2274 = vld [vmem:[#allocation3 + $0xa0] sm:$0xf]
          %v2275 = vld [vmem:[#allocation3 + $0xa4] sm:$0xf]
          %v2276 = vld [vmem:[#allocation3 + $0xa8] sm:$0xf]
          %v2277 = vld [vmem:[#allocation3 + $0xac] sm:$0xf]
          %v2278 = vld [vmem:[#allocation3 + $0xb0] sm:$0xf]
          %v2279 = vld [vmem:[#allocation3 + $0xb4] sm:$0xf]
          %v2280 = vld [vmem:[#allocation3 + $0xb8] sm:$0xf]
          %v2281 = vld [vmem:[#allocation3 + $0xbc] sm:$0xf]
          %v2282 = vpack.c.bf16 %v2229, %v2227
          %v2283 = vpack.c.bf16 %v2234, %v2232
          %v2284 = vpack.c.bf16 %v2239, %v2237
          %v2285 = vpack.c.bf16 %v2244, %v2242
          %v2286 = vpack.c.bf16 %v2249, %v2247
          %v2287 = vpack.c.bf16 %v2254, %v2252
          %v2288 = vpack.c.bf16 %v2259, %v2257
          %v2289 = vpack.c.bf16 %v2264, %v2262
          %v2306 = vunpack.c.l.b16 %v2266
          %v2307 = vunpack.c.l.b16 %v2267
          %v2308 = vunpack.c.l.b16 %v2268
          %v2309 = vunpack.c.l.b16 %v2269
          %v2310 = vunpack.c.l.b16 %v2270
          %v2311 = vunpack.c.l.b16 %v2271
          %v2312 = vunpack.c.l.b16 %v2272
          %v2313 = vunpack.c.l.b16 %v2273
          %v2314 = vunpack.c.l.b16 %v2274
          %v2315 = vunpack.c.l.b16 %v2275
          %v2316 = vunpack.c.l.b16 %v2276
          %v2317 = vunpack.c.l.b16 %v2277
          %v2318 = vunpack.c.l.b16 %v2278
          %v2319 = vunpack.c.l.b16 %v2279
          %v2320 = vunpack.c.l.b16 %v2280
          %v2321 = vunpack.c.l.b16 %v2281
          %v2322 = vpack.c.b16 %v2307, %v2306
          %v2323 = vpack.c.b16 %v2309, %v2308
          %v2324 = vpack.c.b16 %v2311, %v2310
          %v2325 = vpack.c.b16 %v2313, %v2312
          %v2326 = vpack.c.b16 %v2315, %v2314
          %v2327 = vpack.c.b16 %v2317, %v2316
          %v2328 = vpack.c.b16 %v2319, %v2318
          %v2329 = vpack.c.b16 %v2321, %v2320
          %2338 = vmatpush.bf16.msra.mxu0 %v2329
          %2339 = vmatpush.bf16.msra.mxu0 %v2328
          %2340 = vmatpush.bf16.msra.mxu0 %v2327
          %2341 = vmatpush.bf16.msra.mxu0 %v2326
          %2342 = vmatpush.bf16.msra.mxu0 %v2325
          %2343 = vmatpush.bf16.msra.mxu0 %v2324
          %2344 = vmatpush.bf16.msra.mxu0 %v2323
          %2345 = vmatpush.bf16.msra.mxu0 %v2322
          %2346 = vmatmul.bf16.gmra.mxu0 %v2282
          %v2347 = vpop.f32.mrf.mxu0
          %v2348 = vadd.f32 0.0, %v2347
          %v2349 = vpop.f32.mrf.mxu0
          %v2350 = vadd.f32 0.0, %v2349
          %2351 = vmatmul.bf16.gmra.mxu0 %v2283
          %v2352 = vpop.f32.mrf.mxu0
          %v2353 = vadd.f32 0.0, %v2352
          %v2354 = vpop.f32.mrf.mxu0
          %v2355 = vadd.f32 0.0, %v2354
          %2356 = vmatmul.bf16.gmra.mxu0 %v2284
          %v2357 = vpop.f32.mrf.mxu0
          %v2358 = vadd.f32 0.0, %v2357
          %v2359 = vpop.f32.mrf.mxu0
          %v2360 = vadd.f32 0.0, %v2359
          %2361 = vmatmul.bf16.gmra.mxu0 %v2285
          %v2362 = vpop.f32.mrf.mxu0
          %v2363 = vadd.f32 0.0, %v2362
          %v2364 = vpop.f32.mrf.mxu0
          %v2365 = vadd.f32 0.0, %v2364
          %2366 = vmatmul.bf16.gmra.mxu0 %v2286
          %v2367 = vpop.f32.mrf.mxu0
          %v2368 = vadd.f32 0.0, %v2367
          %v2369 = vpop.f32.mrf.mxu0
          %v2370 = vadd.f32 0.0, %v2369
          %2371 = vmatmul.bf16.gmra.mxu0 %v2287
          %v2372 = vpop.f32.mrf.mxu0
          %v2373 = vadd.f32 0.0, %v2372
          %v2374 = vpop.f32.mrf.mxu0
          %v2375 = vadd.f32 0.0, %v2374
          %2376 = vmatmul.bf16.gmra.mxu0 %v2288
          %v2377 = vpop.f32.mrf.mxu0
          %v2378 = vadd.f32 0.0, %v2377
          %v2379 = vpop.f32.mrf.mxu0
          %v2380 = vadd.f32 0.0, %v2379
          %2381 = vmatmul.bf16.gmra.mxu0 %v2289
          %v2382 = vpop.f32.mrf.mxu0
          %v2383 = vadd.f32 0.0, %v2382
          %v2384 = vpop.f32.mrf.mxu0
          %v2385 = vadd.f32 0.0, %v2384
          %2386 = vdwg.mxu0
          %v2387 = vadd.f32 %v1759, %v2348
          %v2388 = vadd.f32 %v1761, %v2350
          %v2389 = vadd.f32 %v1764, %v2353
          %v2390 = vadd.f32 %v1766, %v2355
          %v2391 = vadd.f32 %v1769, %v2358
          %v2392 = vadd.f32 %v1771, %v2360
          %v2393 = vadd.f32 %v1774, %v2363
          %v2394 = vadd.f32 %v1776, %v2365
          %v2395 = vadd.f32 %v1779, %v2368
          %v2396 = vadd.f32 %v1781, %v2370
          %v2397 = vadd.f32 %v1784, %v2373
          %v2398 = vadd.f32 %v1786, %v2375
          %v2399 = vadd.f32 %v1789, %v2378
          %v2400 = vadd.f32 %v1791, %v2380
          %v2401 = vadd.f32 %v1794, %v2383
          %v2402 = vadd.f32 %v1796, %v2385
          %2403 = vset.pattern.permute.xlu0 3
          %2404 = vperm.xlu0 %2403, %v343
          %v2405 = vpop.permute.xlu0 %2404
          %2406 = vset.pattern.permute.xlu0 3
          %2407 = vperm.xlu0 %2406, %v344
          %v2408 = vpop.permute.xlu0 %2407
          %2409 = vset.pattern.permute.xlu0 3
          %2410 = vperm.xlu0 %2409, %v345
          %v2411 = vpop.permute.xlu0 %2410
          %2412 = vset.pattern.permute.xlu0 3
          %2413 = vperm.xlu0 %2412, %v346
          %v2414 = vpop.permute.xlu0 %2413
          %2415 = vset.pattern.permute.xlu0 3
          %2416 = vperm.xlu0 %2415, %v347
          %v2417 = vpop.permute.xlu0 %2416
          %2418 = vset.pattern.permute.xlu0 3
          %2419 = vperm.xlu0 %2418, %v348
          %v2420 = vpop.permute.xlu0 %2419
          %2421 = vset.pattern.permute.xlu0 3
          %2422 = vperm.xlu0 %2421, %v349
          %v2423 = vpop.permute.xlu0 %2422
          %2424 = vset.pattern.permute.xlu0 3
          %2425 = vperm.xlu0 %2424, %v350
          %v2426 = vpop.permute.xlu0 %2425
          %2427 = vset.pattern.permute.xlu0 3
          %2428 = vperm.xlu0 %2427, %v351
          %v2429 = vpop.permute.xlu0 %2428
          %2430 = vset.pattern.permute.xlu0 3
          %2431 = vperm.xlu0 %2430, %v352
          %v2432 = vpop.permute.xlu0 %2431
          %2433 = vset.pattern.permute.xlu0 3
          %2434 = vperm.xlu0 %2433, %v353
          %v2435 = vpop.permute.xlu0 %2434
          %2436 = vset.pattern.permute.xlu0 3
          %2437 = vperm.xlu0 %2436, %v354
          %v2438 = vpop.permute.xlu0 %2437
          %2439 = vset.pattern.permute.xlu0 3
          %2440 = vperm.xlu0 %2439, %v355
          %v2441 = vpop.permute.xlu0 %2440
          %2442 = vset.pattern.permute.xlu0 3
          %2443 = vperm.xlu0 %2442, %v356
          %v2444 = vpop.permute.xlu0 %2443
          %2445 = vset.pattern.permute.xlu0 3
          %2446 = vperm.xlu0 %2445, %v357
          %v2447 = vpop.permute.xlu0 %2446
          %2448 = vset.pattern.permute.xlu0 3
          %2449 = vperm.xlu0 %2448, %v358
          %v2450 = vpop.permute.xlu0 %2449
          %vm2451 = vcmp.eq.s32.totalorder %v424, %v2405
          %vm2452 = vcmp.eq.s32.totalorder %v425, %v2405
          %vm2453 = vcmp.eq.s32.totalorder %v426, %v2405
          %vm2454 = vcmp.eq.s32.totalorder %v427, %v2405
          %vm2455 = vcmp.eq.s32.totalorder %v424, %v2408
          %vm2456 = vcmp.eq.s32.totalorder %v425, %v2408
          %vm2457 = vcmp.eq.s32.totalorder %v426, %v2408
          %vm2458 = vcmp.eq.s32.totalorder %v427, %v2408
          %vm2459 = vcmp.eq.s32.totalorder %v424, %v2411
          %vm2460 = vcmp.eq.s32.totalorder %v425, %v2411
          %vm2461 = vcmp.eq.s32.totalorder %v426, %v2411
          %vm2462 = vcmp.eq.s32.totalorder %v427, %v2411
          %vm2463 = vcmp.eq.s32.totalorder %v424, %v2414
          %vm2464 = vcmp.eq.s32.totalorder %v425, %v2414
          %vm2465 = vcmp.eq.s32.totalorder %v426, %v2414
          %vm2466 = vcmp.eq.s32.totalorder %v427, %v2414
          %vm2467 = vcmp.eq.s32.totalorder %v424, %v2417
          %vm2468 = vcmp.eq.s32.totalorder %v425, %v2417
          %vm2469 = vcmp.eq.s32.totalorder %v426, %v2417
          %vm2470 = vcmp.eq.s32.totalorder %v427, %v2417
          %vm2471 = vcmp.eq.s32.totalorder %v424, %v2420
          %vm2472 = vcmp.eq.s32.totalorder %v425, %v2420
          %vm2473 = vcmp.eq.s32.totalorder %v426, %v2420
          %vm2474 = vcmp.eq.s32.totalorder %v427, %v2420
          %vm2475 = vcmp.eq.s32.totalorder %v424, %v2423
          %vm2476 = vcmp.eq.s32.totalorder %v425, %v2423
          %vm2477 = vcmp.eq.s32.totalorder %v426, %v2423
          %vm2478 = vcmp.eq.s32.totalorder %v427, %v2423
          %vm2479 = vcmp.eq.s32.totalorder %v424, %v2426
          %vm2480 = vcmp.eq.s32.totalorder %v425, %v2426
          %vm2481 = vcmp.eq.s32.totalorder %v426, %v2426
          %vm2482 = vcmp.eq.s32.totalorder %v427, %v2426
          %vm2483 = vcmp.eq.s32.totalorder %v424, %v2429
          %vm2484 = vcmp.eq.s32.totalorder %v425, %v2429
          %vm2485 = vcmp.eq.s32.totalorder %v426, %v2429
          %vm2486 = vcmp.eq.s32.totalorder %v427, %v2429
          %vm2487 = vcmp.eq.s32.totalorder %v424, %v2432
          %vm2488 = vcmp.eq.s32.totalorder %v425, %v2432
          %vm2489 = vcmp.eq.s32.totalorder %v426, %v2432
          %vm2490 = vcmp.eq.s32.totalorder %v427, %v2432
          %vm2491 = vcmp.eq.s32.totalorder %v424, %v2435
          %vm2492 = vcmp.eq.s32.totalorder %v425, %v2435
          %vm2493 = vcmp.eq.s32.totalorder %v426, %v2435
          %vm2494 = vcmp.eq.s32.totalorder %v427, %v2435
          %vm2495 = vcmp.eq.s32.totalorder %v424, %v2438
          %vm2496 = vcmp.eq.s32.totalorder %v425, %v2438
          %vm2497 = vcmp.eq.s32.totalorder %v426, %v2438
          %vm2498 = vcmp.eq.s32.totalorder %v427, %v2438
          %vm2499 = vcmp.eq.s32.totalorder %v424, %v2441
          %vm2500 = vcmp.eq.s32.totalorder %v425, %v2441
          %vm2501 = vcmp.eq.s32.totalorder %v426, %v2441
          %vm2502 = vcmp.eq.s32.totalorder %v427, %v2441
          %vm2503 = vcmp.eq.s32.totalorder %v424, %v2444
          %vm2504 = vcmp.eq.s32.totalorder %v425, %v2444
          %vm2505 = vcmp.eq.s32.totalorder %v426, %v2444
          %vm2506 = vcmp.eq.s32.totalorder %v427, %v2444
          %vm2507 = vcmp.eq.s32.totalorder %v424, %v2447
          %vm2508 = vcmp.eq.s32.totalorder %v425, %v2447
          %vm2509 = vcmp.eq.s32.totalorder %v426, %v2447
          %vm2510 = vcmp.eq.s32.totalorder %v427, %v2447
          %vm2511 = vcmp.eq.s32.totalorder %v424, %v2450
          %vm2512 = vcmp.eq.s32.totalorder %v425, %v2450
          %vm2513 = vcmp.eq.s32.totalorder %v426, %v2450
          %vm2514 = vcmp.eq.s32.totalorder %v427, %v2450
          %v2515 = vsel %vm2451, 1, 0
          %v2516 = vsel %vm2452, 1, 0
          %v2517 = vsel %vm2453, 1, 0
          %v2518 = vsel %vm2454, 1, 0
          %v2519 = vsel %vm2455, 1, 0
          %v2520 = vsel %vm2456, 1, 0
          %v2521 = vsel %vm2457, 1, 0
          %v2522 = vsel %vm2458, 1, 0
          %v2523 = vsel %vm2459, 1, 0
          %v2524 = vsel %vm2460, 1, 0
          %v2525 = vsel %vm2461, 1, 0
          %v2526 = vsel %vm2462, 1, 0
          %v2527 = vsel %vm2463, 1, 0
          %v2528 = vsel %vm2464, 1, 0
          %v2529 = vsel %vm2465, 1, 0
          %v2530 = vsel %vm2466, 1, 0
          %v2531 = vsel %vm2467, 1, 0
          %v2532 = vsel %vm2468, 1, 0
          %v2533 = vsel %vm2469, 1, 0
          %v2534 = vsel %vm2470, 1, 0
          %v2535 = vsel %vm2471, 1, 0
          %v2536 = vsel %vm2472, 1, 0
          %v2537 = vsel %vm2473, 1, 0
          %v2538 = vsel %vm2474, 1, 0
          %v2539 = vsel %vm2475, 1, 0
          %v2540 = vsel %vm2476, 1, 0
          %v2541 = vsel %vm2477, 1, 0
          %v2542 = vsel %vm2478, 1, 0
          %v2543 = vsel %vm2479, 1, 0
          %v2544 = vsel %vm2480, 1, 0
          %v2545 = vsel %vm2481, 1, 0
          %v2546 = vsel %vm2482, 1, 0
          %v2547 = vsel %vm2483, 1, 0
          %v2548 = vsel %vm2484, 1, 0
          %v2549 = vsel %vm2485, 1, 0
          %v2550 = vsel %vm2486, 1, 0
          %v2551 = vsel %vm2487, 1, 0
          %v2552 = vsel %vm2488, 1, 0
          %v2553 = vsel %vm2489, 1, 0
          %v2554 = vsel %vm2490, 1, 0
          %v2555 = vsel %vm2491, 1, 0
          %v2556 = vsel %vm2492, 1, 0
          %v2557 = vsel %vm2493, 1, 0
          %v2558 = vsel %vm2494, 1, 0
          %v2559 = vsel %vm2495, 1, 0
          %v2560 = vsel %vm2496, 1, 0
          %v2561 = vsel %vm2497, 1, 0
          %v2562 = vsel %vm2498, 1, 0
          %v2563 = vsel %vm2499, 1, 0
          %v2564 = vsel %vm2500, 1, 0
          %v2565 = vsel %vm2501, 1, 0
          %v2566 = vsel %vm2502, 1, 0
          %v2567 = vsel %vm2503, 1, 0
          %v2568 = vsel %vm2504, 1, 0
          %v2569 = vsel %vm2505, 1, 0
          %v2570 = vsel %vm2506, 1, 0
          %v2571 = vsel %vm2507, 1, 0
          %v2572 = vsel %vm2508, 1, 0
          %v2573 = vsel %vm2509, 1, 0
          %v2574 = vsel %vm2510, 1, 0
          %v2575 = vsel %vm2511, 1, 0
          %v2576 = vsel %vm2512, 1, 0
          %v2577 = vsel %vm2513, 1, 0
          %v2578 = vsel %vm2514, 1, 0
          %v2579 = vcvt.s32.f32 %v2515
          %v2580 = vcvt.s32.f32 %v2516
          %v2581 = vcvt.s32.f32 %v2517
          %v2582 = vcvt.s32.f32 %v2518
          %v2583 = vcvt.s32.f32 %v2519
          %v2584 = vcvt.s32.f32 %v2520
          %v2585 = vcvt.s32.f32 %v2521
          %v2586 = vcvt.s32.f32 %v2522
          %v2587 = vcvt.s32.f32 %v2523
          %v2588 = vcvt.s32.f32 %v2524
          %v2589 = vcvt.s32.f32 %v2525
          %v2590 = vcvt.s32.f32 %v2526
          %v2591 = vcvt.s32.f32 %v2527
          %v2592 = vcvt.s32.f32 %v2528
          %v2593 = vcvt.s32.f32 %v2529
          %v2594 = vcvt.s32.f32 %v2530
          %v2595 = vcvt.s32.f32 %v2531
          %v2596 = vcvt.s32.f32 %v2532
          %v2597 = vcvt.s32.f32 %v2533
          %v2598 = vcvt.s32.f32 %v2534
          %v2599 = vcvt.s32.f32 %v2535
          %v2600 = vcvt.s32.f32 %v2536
          %v2601 = vcvt.s32.f32 %v2537
          %v2602 = vcvt.s32.f32 %v2538
          %v2603 = vcvt.s32.f32 %v2539
          %v2604 = vcvt.s32.f32 %v2540
          %v2605 = vcvt.s32.f32 %v2541
          %v2606 = vcvt.s32.f32 %v2542
          %v2607 = vcvt.s32.f32 %v2543
          %v2608 = vcvt.s32.f32 %v2544
          %v2609 = vcvt.s32.f32 %v2545
          %v2610 = vcvt.s32.f32 %v2546
          %v2611 = vcvt.s32.f32 %v2547
          %v2612 = vcvt.s32.f32 %v2548
          %v2613 = vcvt.s32.f32 %v2549
          %v2614 = vcvt.s32.f32 %v2550
          %v2615 = vcvt.s32.f32 %v2551
          %v2616 = vcvt.s32.f32 %v2552
          %v2617 = vcvt.s32.f32 %v2553
          %v2618 = vcvt.s32.f32 %v2554
          %v2619 = vcvt.s32.f32 %v2555
          %v2620 = vcvt.s32.f32 %v2556
          %v2621 = vcvt.s32.f32 %v2557
          %v2622 = vcvt.s32.f32 %v2558
          %v2623 = vcvt.s32.f32 %v2559
          %v2624 = vcvt.s32.f32 %v2560
          %v2625 = vcvt.s32.f32 %v2561
          %v2626 = vcvt.s32.f32 %v2562
          %v2627 = vcvt.s32.f32 %v2563
          %v2628 = vcvt.s32.f32 %v2564
          %v2629 = vcvt.s32.f32 %v2565
          %v2630 = vcvt.s32.f32 %v2566
          %v2631 = vcvt.s32.f32 %v2567
          %v2632 = vcvt.s32.f32 %v2568
          %v2633 = vcvt.s32.f32 %v2569
          %v2634 = vcvt.s32.f32 %v2570
          %v2635 = vcvt.s32.f32 %v2571
          %v2636 = vcvt.s32.f32 %v2572
          %v2637 = vcvt.s32.f32 %v2573
          %v2638 = vcvt.s32.f32 %v2574
          %v2639 = vcvt.s32.f32 %v2575
          %v2640 = vcvt.s32.f32 %v2576
          %v2641 = vcvt.s32.f32 %v2577
          %v2642 = vcvt.s32.f32 %v2578
          %v2643 = vpack.c.bf16 %v2583, %v2579
          %v2644 = vpack.c.bf16 %v2584, %v2580
          %v2645 = vpack.c.bf16 %v2585, %v2581
          %v2646 = vpack.c.bf16 %v2586, %v2582
          %v2647 = vpack.c.bf16 %v2591, %v2587
          %v2648 = vpack.c.bf16 %v2592, %v2588
          %v2649 = vpack.c.bf16 %v2593, %v2589
          %v2650 = vpack.c.bf16 %v2594, %v2590
          %v2651 = vpack.c.bf16 %v2599, %v2595
          %v2652 = vpack.c.bf16 %v2600, %v2596
          %v2653 = vpack.c.bf16 %v2601, %v2597
          %v2654 = vpack.c.bf16 %v2602, %v2598
          %v2655 = vpack.c.bf16 %v2607, %v2603
          %v2656 = vpack.c.bf16 %v2608, %v2604
          %v2657 = vpack.c.bf16 %v2609, %v2605
          %v2658 = vpack.c.bf16 %v2610, %v2606
          %v2659 = vpack.c.bf16 %v2615, %v2611
          %v2660 = vpack.c.bf16 %v2616, %v2612
          %v2661 = vpack.c.bf16 %v2617, %v2613
          %v2662 = vpack.c.bf16 %v2618, %v2614
          %v2663 = vpack.c.bf16 %v2623, %v2619
          %v2664 = vpack.c.bf16 %v2624, %v2620
          %v2665 = vpack.c.bf16 %v2625, %v2621
          %v2666 = vpack.c.bf16 %v2626, %v2622
          %v2667 = vpack.c.bf16 %v2631, %v2627
          %v2668 = vpack.c.bf16 %v2632, %v2628
          %v2669 = vpack.c.bf16 %v2633, %v2629
          %v2670 = vpack.c.bf16 %v2634, %v2630
          %v2671 = vpack.c.bf16 %v2639, %v2635
          %v2672 = vpack.c.bf16 %v2640, %v2636
          %v2673 = vpack.c.bf16 %v2641, %v2637
          %v2674 = vpack.c.bf16 %v2642, %v2638
          %2675 = vmatpush.bf16.msra.mxu0 %v835
          %2676 = vmatpush.bf16.msra.mxu0 %v834
          %2677 = vmatpush.bf16.msra.mxu0 %v833
          %2678 = vmatpush.bf16.msra.mxu0 %v832
          %2679 = vmatpush.bf16.msra.mxu0 %v831
          %2680 = vmatpush.bf16.msra.mxu0 %v830
          %2681 = vmatpush.bf16.msra.mxu0 %v829
          %2682 = vmatpush.bf16.msra.mxu0 %v828
          %2683 = vmatmul.bf16.gmra.mxu0 %v2643
          %v2684 = vpop.f32.mrf.mxu0
          %v2685 = vadd.f32 0.0, %v2684
          %v2686 = vpop.f32.mrf.mxu0
          %v2687 = vadd.f32 0.0, %v2686
          %2688 = vmatmul.bf16.gmra.mxu0 %v2647
          %v2689 = vpop.f32.mrf.mxu0
          %v2690 = vadd.f32 0.0, %v2689
          %v2691 = vpop.f32.mrf.mxu0
          %v2692 = vadd.f32 0.0, %v2691
          %2693 = vmatmul.bf16.gmra.mxu0 %v2651
          %v2694 = vpop.f32.mrf.mxu0
          %v2695 = vadd.f32 0.0, %v2694
          %v2696 = vpop.f32.mrf.mxu0
          %v2697 = vadd.f32 0.0, %v2696
          %2698 = vmatmul.bf16.gmra.mxu0 %v2655
          %v2699 = vpop.f32.mrf.mxu0
          %v2700 = vadd.f32 0.0, %v2699
          %v2701 = vpop.f32.mrf.mxu0
          %v2702 = vadd.f32 0.0, %v2701
          %2703 = vmatmul.bf16.gmra.mxu0 %v2659
          %v2704 = vpop.f32.mrf.mxu0
          %v2705 = vadd.f32 0.0, %v2704
          %v2706 = vpop.f32.mrf.mxu0
          %v2707 = vadd.f32 0.0, %v2706
          %2708 = vmatmul.bf16.gmra.mxu0 %v2663
          %v2709 = vpop.f32.mrf.mxu0
          %v2710 = vadd.f32 0.0, %v2709
          %v2711 = vpop.f32.mrf.mxu0
          %v2712 = vadd.f32 0.0, %v2711
          %2713 = vmatmul.bf16.gmra.mxu0 %v2667
          %v2714 = vpop.f32.mrf.mxu0
          %v2715 = vadd.f32 0.0, %v2714
          %v2716 = vpop.f32.mrf.mxu0
          %v2717 = vadd.f32 0.0, %v2716
          %2718 = vmatmul.bf16.gmra.mxu0 %v2671
          %v2719 = vpop.f32.mrf.mxu0
          %v2720 = vadd.f32 0.0, %v2719
          %v2721 = vpop.f32.mrf.mxu0
          %v2722 = vadd.f32 0.0, %v2721
          %2723 = vdwg.mxu0
          %2724 = vmatpush.bf16.msra.mxu0 %v843
          %2725 = vmatpush.bf16.msra.mxu0 %v842
          %2726 = vmatpush.bf16.msra.mxu0 %v841
          %2727 = vmatpush.bf16.msra.mxu0 %v840
          %2728 = vmatpush.bf16.msra.mxu0 %v839
          %2729 = vmatpush.bf16.msra.mxu0 %v838
          %2730 = vmatpush.bf16.msra.mxu0 %v837
          %2731 = vmatpush.bf16.msra.mxu0 %v836
          %2732 = vmatmul.bf16.gmra.mxu0 %v2644
          %v2733 = vpop.f32.mrf.mxu0
          %v2734 = vadd.f32 %v2685, %v2733
          %v2735 = vpop.f32.mrf.mxu0
          %v2736 = vadd.f32 %v2687, %v2735
          %2737 = vmatmul.bf16.gmra.mxu0 %v2648
          %v2738 = vpop.f32.mrf.mxu0
          %v2739 = vadd.f32 %v2690, %v2738
          %v2740 = vpop.f32.mrf.mxu0
          %v2741 = vadd.f32 %v2692, %v2740
          %2742 = vmatmul.bf16.gmra.mxu0 %v2652
          %v2743 = vpop.f32.mrf.mxu0
          %v2744 = vadd.f32 %v2695, %v2743
          %v2745 = vpop.f32.mrf.mxu0
          %v2746 = vadd.f32 %v2697, %v2745
          %2747 = vmatmul.bf16.gmra.mxu0 %v2656
          %v2748 = vpop.f32.mrf.mxu0
          %v2749 = vadd.f32 %v2700, %v2748
          %v2750 = vpop.f32.mrf.mxu0
          %v2751 = vadd.f32 %v2702, %v2750
          %2752 = vmatmul.bf16.gmra.mxu0 %v2660
          %v2753 = vpop.f32.mrf.mxu0
          %v2754 = vadd.f32 %v2705, %v2753
          %v2755 = vpop.f32.mrf.mxu0
          %v2756 = vadd.f32 %v2707, %v2755
          %2757 = vmatmul.bf16.gmra.mxu0 %v2664
          %v2758 = vpop.f32.mrf.mxu0
          %v2759 = vadd.f32 %v2710, %v2758
          %v2760 = vpop.f32.mrf.mxu0
          %v2761 = vadd.f32 %v2712, %v2760
          %2762 = vmatmul.bf16.gmra.mxu0 %v2668
          %v2763 = vpop.f32.mrf.mxu0
          %v2764 = vadd.f32 %v2715, %v2763
          %v2765 = vpop.f32.mrf.mxu0
          %v2766 = vadd.f32 %v2717, %v2765
          %2767 = vmatmul.bf16.gmra.mxu0 %v2672
          %v2768 = vpop.f32.mrf.mxu0
          %v2769 = vadd.f32 %v2720, %v2768
          %v2770 = vpop.f32.mrf.mxu0
          %v2771 = vadd.f32 %v2722, %v2770
          %2772 = vdwg.mxu0
          %2773 = vmatpush.bf16.msra.mxu0 %v851
          %2774 = vmatpush.bf16.msra.mxu0 %v850
          %2775 = vmatpush.bf16.msra.mxu0 %v849
          %2776 = vmatpush.bf16.msra.mxu0 %v848
          %2777 = vmatpush.bf16.msra.mxu0 %v847
          %2778 = vmatpush.bf16.msra.mxu0 %v846
          %2779 = vmatpush.bf16.msra.mxu0 %v845
          %2780 = vmatpush.bf16.msra.mxu0 %v844
          %2781 = vmatmul.bf16.gmra.mxu0 %v2645
          %v2782 = vpop.f32.mrf.mxu0
          %v2783 = vadd.f32 %v2734, %v2782
          %v2784 = vpop.f32.mrf.mxu0
          %v2785 = vadd.f32 %v2736, %v2784
          %2786 = vmatmul.bf16.gmra.mxu0 %v2649
          %v2787 = vpop.f32.mrf.mxu0
          %v2788 = vadd.f32 %v2739, %v2787
          %v2789 = vpop.f32.mrf.mxu0
          %v2790 = vadd.f32 %v2741, %v2789
          %2791 = vmatmul.bf16.gmra.mxu0 %v2653
          %v2792 = vpop.f32.mrf.mxu0
          %v2793 = vadd.f32 %v2744, %v2792
          %v2794 = vpop.f32.mrf.mxu0
          %v2795 = vadd.f32 %v2746, %v2794
          %2796 = vmatmul.bf16.gmra.mxu0 %v2657
          %v2797 = vpop.f32.mrf.mxu0
          %v2798 = vadd.f32 %v2749, %v2797
          %v2799 = vpop.f32.mrf.mxu0
          %v2800 = vadd.f32 %v2751, %v2799
          %2801 = vmatmul.bf16.gmra.mxu0 %v2661
          %v2802 = vpop.f32.mrf.mxu0
          %v2803 = vadd.f32 %v2754, %v2802
          %v2804 = vpop.f32.mrf.mxu0
          %v2805 = vadd.f32 %v2756, %v2804
          %2806 = vmatmul.bf16.gmra.mxu0 %v2665
          %v2807 = vpop.f32.mrf.mxu0
          %v2808 = vadd.f32 %v2759, %v2807
          %v2809 = vpop.f32.mrf.mxu0
          %v2810 = vadd.f32 %v2761, %v2809
          %2811 = vmatmul.bf16.gmra.mxu0 %v2669
          %v2812 = vpop.f32.mrf.mxu0
          %v2813 = vadd.f32 %v2764, %v2812
          %v2814 = vpop.f32.mrf.mxu0
          %v2815 = vadd.f32 %v2766, %v2814
          %2816 = vmatmul.bf16.gmra.mxu0 %v2673
          %v2817 = vpop.f32.mrf.mxu0
          %v2818 = vadd.f32 %v2769, %v2817
          %v2819 = vpop.f32.mrf.mxu0
          %v2820 = vadd.f32 %v2771, %v2819
          %2821 = vdwg.mxu0
          %2822 = vmatpush.bf16.msra.mxu0 %v859
          %2823 = vmatpush.bf16.msra.mxu0 %v858
          %2824 = vmatpush.bf16.msra.mxu0 %v857
          %2825 = vmatpush.bf16.msra.mxu0 %v856
          %2826 = vmatpush.bf16.msra.mxu0 %v855
          %2827 = vmatpush.bf16.msra.mxu0 %v854
          %2828 = vmatpush.bf16.msra.mxu0 %v853
          %2829 = vmatpush.bf16.msra.mxu0 %v852
          %2830 = vmatmul.bf16.gmra.mxu0 %v2646
          %v2831 = vpop.f32.mrf.mxu0
          %v2832 = vadd.f32 %v2783, %v2831
          %v2833 = vpop.f32.mrf.mxu0
          %v2834 = vadd.f32 %v2785, %v2833
          %2835 = vmatmul.bf16.gmra.mxu0 %v2650
          %v2836 = vpop.f32.mrf.mxu0
          %v2837 = vadd.f32 %v2788, %v2836
          %v2838 = vpop.f32.mrf.mxu0
          %v2839 = vadd.f32 %v2790, %v2838
          %2840 = vmatmul.bf16.gmra.mxu0 %v2654
          %v2841 = vpop.f32.mrf.mxu0
          %v2842 = vadd.f32 %v2793, %v2841
          %v2843 = vpop.f32.mrf.mxu0
          %v2844 = vadd.f32 %v2795, %v2843
          %2845 = vmatmul.bf16.gmra.mxu0 %v2658
          %v2846 = vpop.f32.mrf.mxu0
          %v2847 = vadd.f32 %v2798, %v2846
          %v2848 = vpop.f32.mrf.mxu0
          %v2849 = vadd.f32 %v2800, %v2848
          %2850 = vmatmul.bf16.gmra.mxu0 %v2662
          %v2851 = vpop.f32.mrf.mxu0
          %v2852 = vadd.f32 %v2803, %v2851
          %v2853 = vpop.f32.mrf.mxu0
          %v2854 = vadd.f32 %v2805, %v2853
          %2855 = vmatmul.bf16.gmra.mxu0 %v2666
          %v2856 = vpop.f32.mrf.mxu0
          %v2857 = vadd.f32 %v2808, %v2856
          %v2858 = vpop.f32.mrf.mxu0
          %v2859 = vadd.f32 %v2810, %v2858
          %2860 = vmatmul.bf16.gmra.mxu0 %v2670
          %v2861 = vpop.f32.mrf.mxu0
          %v2862 = vadd.f32 %v2813, %v2861
          %v2863 = vpop.f32.mrf.mxu0
          %v2864 = vadd.f32 %v2815, %v2863
          %2865 = vmatmul.bf16.gmra.mxu0 %v2674
          %v2866 = vpop.f32.mrf.mxu0
          %v2867 = vadd.f32 %v2818, %v2866
          %v2868 = vpop.f32.mrf.mxu0
          %v2869 = vadd.f32 %v2820, %v2868
          %2870 = vdwg.mxu0
          %v2871 = vld [vmem:[#allocation3 + $0xc0] sm:$0xf]
          %v2872 = vld [vmem:[#allocation3 + $0xc4] sm:$0xf]
          %v2873 = vld [vmem:[#allocation3 + $0xc8] sm:$0xf]
          %v2874 = vld [vmem:[#allocation3 + $0xcc] sm:$0xf]
          %v2875 = vld [vmem:[#allocation3 + $0xd0] sm:$0xf]
          %v2876 = vld [vmem:[#allocation3 + $0xd4] sm:$0xf]
          %v2877 = vld [vmem:[#allocation3 + $0xd8] sm:$0xf]
          %v2878 = vld [vmem:[#allocation3 + $0xdc] sm:$0xf]
          %v2879 = vld [vmem:[#allocation3 + $0xe0] sm:$0xf]
          %v2880 = vld [vmem:[#allocation3 + $0xe4] sm:$0xf]
          %v2881 = vld [vmem:[#allocation3 + $0xe8] sm:$0xf]
          %v2882 = vld [vmem:[#allocation3 + $0xec] sm:$0xf]
          %v2883 = vld [vmem:[#allocation3 + $0xf0] sm:$0xf]
          %v2884 = vld [vmem:[#allocation3 + $0xf4] sm:$0xf]
          %v2885 = vld [vmem:[#allocation3 + $0xf8] sm:$0xf]
          %v2886 = vld [vmem:[#allocation3 + $0xfc] sm:$0xf]
          %v2887 = vpack.c.bf16 %v2834, %v2832
          %v2888 = vpack.c.bf16 %v2839, %v2837
          %v2889 = vpack.c.bf16 %v2844, %v2842
          %v2890 = vpack.c.bf16 %v2849, %v2847
          %v2891 = vpack.c.bf16 %v2854, %v2852
          %v2892 = vpack.c.bf16 %v2859, %v2857
          %v2893 = vpack.c.bf16 %v2864, %v2862
          %v2894 = vpack.c.bf16 %v2869, %v2867
          %v2911 = vunpack.c.l.b16 %v2871
          %v2912 = vunpack.c.l.b16 %v2872
          %v2913 = vunpack.c.l.b16 %v2873
          %v2914 = vunpack.c.l.b16 %v2874
          %v2915 = vunpack.c.l.b16 %v2875
          %v2916 = vunpack.c.l.b16 %v2876
          %v2917 = vunpack.c.l.b16 %v2877
          %v2918 = vunpack.c.l.b16 %v2878
          %v2919 = vunpack.c.l.b16 %v2879
          %v2920 = vunpack.c.l.b16 %v2880
          %v2921 = vunpack.c.l.b16 %v2881
          %v2922 = vunpack.c.l.b16 %v2882
          %v2923 = vunpack.c.l.b16 %v2883
          %v2924 = vunpack.c.l.b16 %v2884
          %v2925 = vunpack.c.l.b16 %v2885
          %v2926 = vunpack.c.l.b16 %v2886
          %v2927 = vpack.c.b16 %v2912, %v2911
          %v2928 = vpack.c.b16 %v2914, %v2913
          %v2929 = vpack.c.b16 %v2916, %v2915
          %v2930 = vpack.c.b16 %v2918, %v2917
          %v2931 = vpack.c.b16 %v2920, %v2919
          %v2932 = vpack.c.b16 %v2922, %v2921
          %v2933 = vpack.c.b16 %v2924, %v2923
          %v2934 = vpack.c.b16 %v2926, %v2925
          %2943 = vmatpush.bf16.msra.mxu0 %v2934
          %2944 = vmatpush.bf16.msra.mxu0 %v2933
          %2945 = vmatpush.bf16.msra.mxu0 %v2932
          %2946 = vmatpush.bf16.msra.mxu0 %v2931
          %2947 = vmatpush.bf16.msra.mxu0 %v2930
          %2948 = vmatpush.bf16.msra.mxu0 %v2929
          %2949 = vmatpush.bf16.msra.mxu0 %v2928
          %2950 = vmatpush.bf16.msra.mxu0 %v2927
          %2951 = vmatmul.bf16.gmra.mxu0 %v2887
          %v2952 = vpop.f32.mrf.mxu0
          %v2953 = vadd.f32 0.0, %v2952
          %v2954 = vpop.f32.mrf.mxu0
          %v2955 = vadd.f32 0.0, %v2954
          %2956 = vmatmul.bf16.gmra.mxu0 %v2888
          %v2957 = vpop.f32.mrf.mxu0
          %v2958 = vadd.f32 0.0, %v2957
          %v2959 = vpop.f32.mrf.mxu0
          %v2960 = vadd.f32 0.0, %v2959
          %2961 = vmatmul.bf16.gmra.mxu0 %v2889
          %v2962 = vpop.f32.mrf.mxu0
          %v2963 = vadd.f32 0.0, %v2962
          %v2964 = vpop.f32.mrf.mxu0
          %v2965 = vadd.f32 0.0, %v2964
          %2966 = vmatmul.bf16.gmra.mxu0 %v2890
          %v2967 = vpop.f32.mrf.mxu0
          %v2968 = vadd.f32 0.0, %v2967
          %v2969 = vpop.f32.mrf.mxu0
          %v2970 = vadd.f32 0.0, %v2969
          %2971 = vmatmul.bf16.gmra.mxu0 %v2891
          %v2972 = vpop.f32.mrf.mxu0
          %v2973 = vadd.f32 0.0, %v2972
          %v2974 = vpop.f32.mrf.mxu0
          %v2975 = vadd.f32 0.0, %v2974
          %2976 = vmatmul.bf16.gmra.mxu0 %v2892
          %v2977 = vpop.f32.mrf.mxu0
          %v2978 = vadd.f32 0.0, %v2977
          %v2979 = vpop.f32.mrf.mxu0
          %v2980 = vadd.f32 0.0, %v2979
          %2981 = vmatmul.bf16.gmra.mxu0 %v2893
          %v2982 = vpop.f32.mrf.mxu0
          %v2983 = vadd.f32 0.0, %v2982
          %v2984 = vpop.f32.mrf.mxu0
          %v2985 = vadd.f32 0.0, %v2984
          %2986 = vmatmul.bf16.gmra.mxu0 %v2894
          %v2987 = vpop.f32.mrf.mxu0
          %v2988 = vadd.f32 0.0, %v2987
          %v2989 = vpop.f32.mrf.mxu0
          %v2990 = vadd.f32 0.0, %v2989
          %2991 = vdwg.mxu0
          %v2992 = vadd.f32 %v2387, %v2953
          %v2993 = vadd.f32 %v2388, %v2955
          %v2994 = vadd.f32 %v2389, %v2958
          %v2995 = vadd.f32 %v2390, %v2960
          %v2996 = vadd.f32 %v2391, %v2963
          %v2997 = vadd.f32 %v2392, %v2965
          %v2998 = vadd.f32 %v2393, %v2968
          %v2999 = vadd.f32 %v2394, %v2970
          %v3000 = vadd.f32 %v2395, %v2973
          %v3001 = vadd.f32 %v2396, %v2975
          %v3002 = vadd.f32 %v2397, %v2978
          %v3003 = vadd.f32 %v2398, %v2980
          %v3004 = vadd.f32 %v2399, %v2983
          %v3005 = vadd.f32 %v2400, %v2985
          %v3006 = vadd.f32 %v2401, %v2988
          %v3007 = vadd.f32 %v2402, %v2990
          %v3008 = vld [vmem:[%s3] sm:$0x1]
          %v3010 = vperm.slane %v3008, 0
          %v3012 = vadd.f32 %v2992, %v3010
          %v3013 = vadd.f32 %v2993, %v3010
          %v3014 = vadd.f32 %v2994, %v3010
          %v3015 = vadd.f32 %v2995, %v3010
          %v3016 = vadd.f32 %v2996, %v3010
          %v3017 = vadd.f32 %v2997, %v3010
          %v3018 = vadd.f32 %v2998, %v3010
          %v3019 = vadd.f32 %v2999, %v3010
          %v3020 = vadd.f32 %v3000, %v3010
          %v3021 = vadd.f32 %v3001, %v3010
          %v3022 = vadd.f32 %v3002, %v3010
          %v3023 = vadd.f32 %v3003, %v3010
          %v3024 = vadd.f32 %v3004, %v3010
          %v3025 = vadd.f32 %v3005, %v3010
          %v3026 = vadd.f32 %v3006, %v3010
          %v3027 = vadd.f32 %v3007, %v3010
          %v3028 = vmax.f32 %v3012, 0.0
          %v3029 = vmax.f32 %v3013, 0.0
          %v3030 = vmax.f32 %v3014, 0.0
          %v3031 = vmax.f32 %v3015, 0.0
          %v3032 = vmax.f32 %v3016, 0.0
          %v3033 = vmax.f32 %v3017, 0.0
          %v3034 = vmax.f32 %v3018, 0.0
          %v3035 = vmax.f32 %v3019, 0.0
          %v3036 = vmax.f32 %v3020, 0.0
          %v3037 = vmax.f32 %v3021, 0.0
          %v3038 = vmax.f32 %v3022, 0.0
          %v3039 = vmax.f32 %v3023, 0.0
          %v3040 = vmax.f32 %v3024, 0.0
          %v3041 = vmax.f32 %v3025, 0.0
          %v3042 = vmax.f32 %v3026, 0.0
          %v3043 = vmax.f32 %v3027, 0.0
          %v3044 = vpack.c.bf16 %v3028, %v3028
          %v3045 = vpack.c.bf16 %v3029, %v3029
          %v3046 = vpack.c.bf16 %v3030, %v3030
          %v3047 = vpack.c.bf16 %v3031, %v3031
          %v3048 = vpack.c.bf16 %v3032, %v3032
          %v3049 = vpack.c.bf16 %v3033, %v3033
          %v3050 = vpack.c.bf16 %v3034, %v3034
          %v3051 = vpack.c.bf16 %v3035, %v3035
          %v3052 = vpack.c.bf16 %v3036, %v3036
          %v3053 = vpack.c.bf16 %v3037, %v3037
          %v3054 = vpack.c.bf16 %v3038, %v3038
          %v3055 = vpack.c.bf16 %v3039, %v3039
          %v3056 = vpack.c.bf16 %v3040, %v3040
          %v3057 = vpack.c.bf16 %v3041, %v3041
          %v3058 = vpack.c.bf16 %v3042, %v3042
          %v3059 = vpack.c.bf16 %v3043, %v3043
          %3060 = vst [vmem:[#allocation2] sm:$0xf] %v3044
          %3061 = vst [vmem:[#allocation2 + $0x4] sm:$0xf] %v3045
          %3062 = vst [vmem:[#allocation2 + $0x8] sm:$0xf] %v3046
          %3063 = vst [vmem:[#allocation2 + $0xc] sm:$0xf] %v3047
          %3064 = vst [vmem:[#allocation2 + $0x10] sm:$0xf] %v3048
          %3065 = vst [vmem:[#allocation2 + $0x14] sm:$0xf] %v3049
          %3066 = vst [vmem:[#allocation2 + $0x18] sm:$0xf] %v3050
          %3067 = vst [vmem:[#allocation2 + $0x1c] sm:$0xf] %v3051
          %3068 = vst [vmem:[#allocation2 + $0x20] sm:$0xf] %v3052
          %3069 = vst [vmem:[#allocation2 + $0x24] sm:$0xf] %v3053
          %3070 = vst [vmem:[#allocation2 + $0x28] sm:$0xf] %v3054
          %3071 = vst [vmem:[#allocation2 + $0x2c] sm:$0xf] %v3055
          %3072 = vst [vmem:[#allocation2 + $0x30] sm:$0xf] %v3056
          %3073 = vst [vmem:[#allocation2 + $0x34] sm:$0xf] %v3057
          %3074 = vst [vmem:[#allocation2 + $0x38] sm:$0xf] %v3058
          %3075 = vst [vmem:[#allocation2 + $0x3c] sm:$0xf] %v3059
        $region56: #{tpu_custom_call.1} parent=43 // pred_fallthru
          _
        %v3076 = vld [vmem:[#allocation2] sm:$0xf]
        %v3077 = vld [vmem:[#allocation2 + $0x4] sm:$0xf]
        %v3078 = vld [vmem:[#allocation2 + $0x8] sm:$0xf]
        %v3079 = vld [vmem:[#allocation2 + $0xc] sm:$0xf]
        %v3080 = vld [vmem:[#allocation2 + $0x10] sm:$0xf]
        %v3081 = vld [vmem:[#allocation2 + $0x14] sm:$0xf]
        %v3082 = vld [vmem:[#allocation2 + $0x18] sm:$0xf]
        %v3083 = vld [vmem:[#allocation2 + $0x1c] sm:$0xf]
        %v3084 = vld [vmem:[#allocation2 + $0x20] sm:$0xf]
        %v3085 = vld [vmem:[#allocation2 + $0x24] sm:$0xf]
        %v3086 = vld [vmem:[#allocation2 + $0x28] sm:$0xf]
        %v3087 = vld [vmem:[#allocation2 + $0x2c] sm:$0xf]
        %v3088 = vld [vmem:[#allocation2 + $0x30] sm:$0xf]
        %v3089 = vld [vmem:[#allocation2 + $0x34] sm:$0xf]
        %v3090 = vld [vmem:[#allocation2 + $0x38] sm:$0xf]
        %v3091 = vld [vmem:[#allocation2 + $0x3c] sm:$0xf]
        %v3092 = vld [vmem:[%s291] sm:$0xf]
        %v3093 = vld [vmem:[%s291 + $0x4] sm:$0xf]
        %v3094 = vld [vmem:[%s291 + $0x8] sm:$0xf]
        %v3095 = vld [vmem:[%s291 + $0xc] sm:$0xf]
        %v3096 = vld [vmem:[%s291 + $0x10] sm:$0xf]
        %v3097 = vld [vmem:[%s291 + $0x14] sm:$0xf]
        %v3098 = vld [vmem:[%s291 + $0x18] sm:$0xf]
        %v3099 = vld [vmem:[%s291 + $0x1c] sm:$0xf]
        %v3100 = vld [vmem:[%s291 + $0x20] sm:$0xf]
        %v3101 = vld [vmem:[%s291 + $0x24] sm:$0xf]
        %v3102 = vld [vmem:[%s291 + $0x28] sm:$0xf]
        %v3103 = vld [vmem:[%s291 + $0x2c] sm:$0xf]
        %v3104 = vld [vmem:[%s291 + $0x30] sm:$0xf]
        %v3105 = vld [vmem:[%s291 + $0x34] sm:$0xf]
        %v3106 = vld [vmem:[%s291 + $0x38] sm:$0xf]
        %v3107 = vld [vmem:[%s291 + $0x3c] sm:$0xf]
        %v3108 = vld [vmem:[%s337] sm:$0x1]
        %v3110 = vperm.slane %v3108, 0
        %v3128 = vunpack.c.l.b16 %v3076
        %v3129 = vunpack.c.l.b16 %v3077
        %v3130 = vunpack.c.l.b16 %v3078
        %v3131 = vunpack.c.l.b16 %v3079
        %v3132 = vunpack.c.l.b16 %v3080
        %v3133 = vunpack.c.l.b16 %v3081
        %v3134 = vunpack.c.l.b16 %v3082
        %v3135 = vunpack.c.l.b16 %v3083
        %v3136 = vunpack.c.l.b16 %v3084
        %v3137 = vunpack.c.l.b16 %v3085
        %v3138 = vunpack.c.l.b16 %v3086
        %v3139 = vunpack.c.l.b16 %v3087
        %v3140 = vunpack.c.l.b16 %v3088
        %v3141 = vunpack.c.l.b16 %v3089
        %v3142 = vunpack.c.l.b16 %v3090
        %v3143 = vunpack.c.l.b16 %v3091
        %v3144 = vpack.c.b16 %v3129, %v3128
        %v3145 = vpack.c.b16 %v3131, %v3130
        %v3146 = vpack.c.b16 %v3133, %v3132
        %v3147 = vpack.c.b16 %v3135, %v3134
        %v3148 = vpack.c.b16 %v3137, %v3136
        %v3149 = vpack.c.b16 %v3139, %v3138
        %v3150 = vpack.c.b16 %v3141, %v3140
        %v3151 = vpack.c.b16 %v3143, %v3142
        %v3176 = vunpack.c.l.b16 %v3092
        %v3177 = vunpack.c.l.b16 %v3093
        %v3178 = vunpack.c.l.b16 %v3094
        %v3179 = vunpack.c.l.b16 %v3095
        %v3180 = vunpack.c.l.b16 %v3096
        %v3181 = vunpack.c.l.b16 %v3097
        %v3182 = vunpack.c.l.b16 %v3098
        %v3183 = vunpack.c.l.b16 %v3099
        %v3184 = vunpack.c.l.b16 %v3100
        %v3185 = vunpack.c.l.b16 %v3101
        %v3186 = vunpack.c.l.b16 %v3102
        %v3187 = vunpack.c.l.b16 %v3103
        %v3188 = vunpack.c.l.b16 %v3104
        %v3189 = vunpack.c.l.b16 %v3105
        %v3190 = vunpack.c.l.b16 %v3106
        %v3191 = vunpack.c.l.b16 %v3107
        %v3192 = vpack.c.b16 %v3177, %v3176
        %v3193 = vpack.c.b16 %v3179, %v3178
        %v3194 = vpack.c.b16 %v3181, %v3180
        %v3195 = vpack.c.b16 %v3183, %v3182
        %v3196 = vpack.c.b16 %v3185, %v3184
        %v3197 = vpack.c.b16 %v3187, %v3186
        %v3198 = vpack.c.b16 %v3189, %v3188
        %v3199 = vpack.c.b16 %v3191, %v3190
        %3208 = vmatpush.bf16.msra.mxu0 %v3199
        %3209 = vmatpush.bf16.msra.mxu0 %v3198
        %3210 = vmatpush.bf16.msra.mxu0 %v3197
        %3211 = vmatpush.bf16.msra.mxu0 %v3196
        %3212 = vmatpush.bf16.msra.mxu0 %v3195
        %3213 = vmatpush.bf16.msra.mxu0 %v3194
        %3214 = vmatpush.bf16.msra.mxu0 %v3193
        %3215 = vmatpush.bf16.msra.mxu0 %v3192
        %3216 = vmatmul.bf16.gmra.mxu0 %v3144
        %v3217 = vpop.f32.mrf.mxu0
        %v3218 = vadd.f32 %v3110, %v3217
        %v3219 = vpop.f32.mrf.mxu0
        %v3220 = vadd.f32 %v3110, %v3219
        %3221 = vmatmul.bf16.gmra.mxu0 %v3145
        %v3222 = vpop.f32.mrf.mxu0
        %v3223 = vadd.f32 %v3110, %v3222
        %v3224 = vpop.f32.mrf.mxu0
        %v3225 = vadd.f32 %v3110, %v3224
        %3226 = vmatmul.bf16.gmra.mxu0 %v3146
        %v3227 = vpop.f32.mrf.mxu0
        %v3228 = vadd.f32 %v3110, %v3227
        %v3229 = vpop.f32.mrf.mxu0
        %v3230 = vadd.f32 %v3110, %v3229
        %3231 = vmatmul.bf16.gmra.mxu0 %v3147
        %v3232 = vpop.f32.mrf.mxu0
        %v3233 = vadd.f32 %v3110, %v3232
        %v3234 = vpop.f32.mrf.mxu0
        %v3235 = vadd.f32 %v3110, %v3234
        %3236 = vmatmul.bf16.gmra.mxu0 %v3148
        %v3237 = vpop.f32.mrf.mxu0
        %v3238 = vadd.f32 %v3110, %v3237
        %v3239 = vpop.f32.mrf.mxu0
        %v3240 = vadd.f32 %v3110, %v3239
        %3241 = vmatmul.bf16.gmra.mxu0 %v3149
        %v3242 = vpop.f32.mrf.mxu0
        %v3243 = vadd.f32 %v3110, %v3242
        %v3244 = vpop.f32.mrf.mxu0
        %v3245 = vadd.f32 %v3110, %v3244
        %3246 = vmatmul.bf16.gmra.mxu0 %v3150
        %v3247 = vpop.f32.mrf.mxu0
        %v3248 = vadd.f32 %v3110, %v3247
        %v3249 = vpop.f32.mrf.mxu0
        %v3250 = vadd.f32 %v3110, %v3249
        %3251 = vmatmul.bf16.gmra.mxu0 %v3151
        %v3252 = vpop.f32.mrf.mxu0
        %v3253 = vadd.f32 %v3110, %v3252
        %v3254 = vpop.f32.mrf.mxu0
        %v3255 = vadd.f32 %v3110, %v3254
        %3256 = vdwg.mxu0
        %3257 = vst [vmem:[%s328] sm:$0xff] %v3218
        %3258 = vst [vmem:[%s328 + $0x8] sm:$0xff] %v3220
        %3259 = vst [vmem:[%s328 + $0x10] sm:$0xff] %v3223
        %3260 = vst [vmem:[%s328 + $0x18] sm:$0xff] %v3225
        %3261 = vst [vmem:[%s328 + $0x20] sm:$0xff] %v3228
        %3262 = vst [vmem:[%s328 + $0x28] sm:$0xff] %v3230
        %3263 = vst [vmem:[%s328 + $0x30] sm:$0xff] %v3233
        %3264 = vst [vmem:[%s328 + $0x38] sm:$0xff] %v3235
        %3265 = vst [vmem:[%s328 + $0x40] sm:$0xff] %v3238
        %3266 = vst [vmem:[%s328 + $0x48] sm:$0xff] %v3240
        %3267 = vst [vmem:[%s328 + $0x50] sm:$0xff] %v3243
        %3268 = vst [vmem:[%s328 + $0x58] sm:$0xff] %v3245
        %3269 = vst [vmem:[%s328 + $0x60] sm:$0xff] %v3248
        %3270 = vst [vmem:[%s328 + $0x68] sm:$0xff] %v3250
        %3271 = vst [vmem:[%s328 + $0x70] sm:$0xff] %v3253
        %3272 = vst [vmem:[%s328 + $0x78] sm:$0xff] %v3255
        %s3273 = sand.u32 %s187, 1
        %s3274 = scalar_lea.sflag [#allocation5], %s3273
        %s3275 = sand.u32 %s187, 1
        %s3276 = smul.addr %s3275, 128
        %s3277 = scalar_lea.vmem [#allocation8], %s3276
        // Predicated region
        $region57: #{tpu_custom_call.1} parent=43 // pred_check
          %p3278 = pneg %p197
        $region58: #{tpu_custom_call.1} parent=43 // pred_check_branch
          %3280 = sbr.rel (%p3278) target = $region60
        $region59: #{tpu_custom_call.1} parent=43 // pred_region
          %s3281 = smul.u32 16, %s28
          %3283 = vsyncadd %s3274, 0
          %s3284 = smul.addr %s3281, 4
          %s3285 = sadd.s32 %s29, %s3284
          %s3286 = smul.addr %s3285, 8
          %s3287 = scalar_lea.hbm %s6, %s3286
          %s3288 = sshll.u32 %s3277, 4
          %s3289 = int_to_ptr.vmem [resolvable:$true] %s3288
          %s3290 = sshll.u32 %s3287, 4
          %s3291 = int_to_ptr.hbm [resolvable:$true] %s3290
          %3296 = dma.vmem_to_hbm [thread:$0]  %s3289, 2048, %s3291, %s3274, 128, 512, 8
        $region60: #{tpu_custom_call.1} parent=43 // pred_fallthru
          _
      $region44: #{tpu_custom_call.1} parent=5 // pred_fallthru
        _
      %p3297 = scmp.le.s32.totalorder 2, %s19
      // Predicated region
      $region61: #{tpu_custom_call.1} parent=5 // pred_check
        %p3298 = pneg %p3297
      $region62: #{tpu_custom_call.1} parent=5 // pred_check_branch
        %3300 = sbr.rel (%p3298) target = $region64
      $region63: #{tpu_custom_call.1} parent=5 // pred_region
        %s3301 = ssub.s32 %s19, 2
        // Predicated region
        $region65: #{tpu_custom_call.1} parent=63 // pred_check
          %p3302 = pneg %p203
        $region66: #{tpu_custom_call.1} parent=63 // pred_check_branch
          %3304 = sbr.rel (%p3302) target = $region68
        $region67: #{tpu_custom_call.1} parent=63 // pred_region
          %s3305 = sand.u32 %s188, 1
          %s3306 = scalar_lea.sflag [#allocation5], %s3305
          %s3307 = sand.u32 %s188, 1
          %s3308 = smul.addr %s3307, 128
          %s3309 = scalar_lea.vmem [#allocation8], %s3308
          %3311 = dma.done %s3306, 2048
        $region68: #{tpu_custom_call.1} parent=63 // pred_fallthru
          _
      $region64: #{tpu_custom_call.1} parent=5 // pred_fallthru
        _
    $region6: #{tpu_custom_call.1} parent=1 // loop_footer
      %s23 = sadd.s32 1, %s19
    $region7: #{tpu_custom_call.1} parent=1 // loop_footer_branch
      %18 = sbr.rel target = $region3
    $region8: #{tpu_custom_call.1} parent=1 // loop_exit
      _
    %3312 = vsyncpa [#allocation4], 1
    %s3313 = scalar_lea.sflag [#allocation4], 1
    %3314 = vsyncpa %s3313, 1
    %3315 = vsyncpa [#allocation7], 1
    %s3316 = scalar_lea.sflag [#allocation7], 1
    %3317 = vsyncpa %s3316, 1
    %3318 = vsyncpa [#allocation5], 1
    %s3319 = scalar_lea.sflag [#allocation5], 1
    %3320 = vsyncpa %s3319, 1

</llo_original>
